<compile_context>
chip_gen: v7x
topology: tpu7x:2x2x1
jax: 0.10.0
libtpu: 0.0.40
codegen_flags: <defaults>
</compile_context>

<pallas_src>
import functools

import jax
import jax.numpy as jnp
import numpy as np
from jax.experimental import pallas as pl
from jax.experimental.pallas import tpu as pltpu


def _round_up(x, m):
    return (x + m - 1) // m * m


# ------------------------------ Pallas kernel ------------------------------

def _basic_block_kernel(*refs, stride, Ho, Wo, W_row, has_proj):
    """Fused BasicBlock for one image.

    All activations use a flattened-spatial layout with one shared row width
    W_row (multiple of 8, >= Wo+2), so every 3x3 tap is a contiguous (M, C)
    slice and each conv is 9 shifted bf16 MXU matmuls with f32 accumulation.
    The junk columns (wo >= Wo) of every flat row are zero-masked after conv1
    and double as conv2's horizontal zero padding, so the conv1 output goes
    into the padded conv2 input buffer with a single aligned store.
    """
    if has_proj:
        (xs_ref, w1_ref, b1_ref, w2_ref, b2_ref, ws_ref, bs_ref,
         o_ref, buf_ref) = refs
    else:
        (xs_ref, w1_ref, b1_ref, w2_ref, b2_ref, o_ref, buf_ref) = refs
        ws_ref = bs_ref = None

    s = stride
    M = Ho * W_row             # flat rows per conv output (junk cols included)
    P = o_ref.shape[-1]        # lane-padded output channels (multiple of 128)
    OFF = 2 * W_row            # aligned flat offset of conv1-output row 0 in buf

    # ---- conv1 * folded-BN1 scale: 9 shifted bf16 matmuls, f32 accumulate.
    # ---- bias1 is folded into the accumulator init.
    acc1 = jnp.broadcast_to(b1_ref[...], (M, P))
    for dh in range(3):
        for dw in range(3):
            plane = (dh % s) * s + (dw % s)
            shift = (dh // s) * W_row + (dw // s)
            acc1 = acc1 + jnp.dot(xs_ref[0, plane, shift:shift + M, :],
                                  w1_ref[dh * 3 + dw],
                                  preferred_element_type=jnp.float32)

    # ---- ReLU, zero the junk columns (they become conv2's left/right zero
    # ---- padding), one ALIGNED bf16 store of the whole conv1 output; the
    # ---- top/bottom padding rows are two small aligned zero stores.
    keep = jax.lax.broadcasted_iota(jnp.int32, (W_row, P), 0) < Wo
    y = jnp.maximum(acc1, 0.0).reshape(Ho, W_row, P)
    y = jnp.where(keep[None, :, :], y, 0.0)
    zpad = jnp.zeros((OFF, P), buf_ref.dtype)
    buf_ref[0:OFF, :] = zpad                                  # top pad rows
    buf_ref[OFF:OFF + M, :] = y.reshape(M, P).astype(buf_ref.dtype)
    buf_ref[OFF + M:OFF + M + W_row, :] = zpad[:W_row]        # bottom pad row

    # ---- conv2 * folded-BN2 scale (stride 1): 9 shifted bf16 matmuls.
    acc2 = jnp.broadcast_to(b2_ref[...], (M, P))
    for dh in range(3):
        for dw in range(3):
            shift = (dh + 1) * W_row + (dw - 1)
            acc2 = acc2 + jnp.dot(buf_ref[shift:shift + M, :],
                                  w2_ref[dh * 3 + dw],
                                  preferred_element_type=jnp.float32)

    # ---- shortcut: tap (1, 1) of the conv1 input planes (== x[::s, ::s]).
    plane = (1 % s) * s + (1 % s)
    shift = (1 // s) * W_row + (1 // s)
    sc_in = xs_ref[0, plane, shift:shift + M, :]
    if has_proj:
        sc = jnp.dot(sc_in, ws_ref[...],
                     preferred_element_type=jnp.float32) + bs_ref[...]
    else:
        sc = sc_in.astype(jnp.float32)

    # ---- residual add + ReLU, drop junk columns, one lane-dense store.
    r = jnp.maximum(acc2 + sc, 0.0).reshape(Ho, W_row, P)
    o_ref[0] = r[:, :Wo, :].astype(o_ref.dtype)


# ------------------------------- JAX glue ----------------------------------

def _fold_bn(bn, eps=1e-5):
    gamma, beta, mean, var = bn
    scale = gamma / jnp.sqrt(var + eps)
    return scale, beta - mean * scale


def _prep_w3x3(w_oihw, scale, c_pad, p_pad):
    """(P, Cin, 3, 3) -> BN-scale-folded (9, c_pad, p_pad) bf16 tap matrices."""
    p, cin = w_oihw.shape[:2]
    w = w_oihw * scale[:, None, None, None]
    w = jnp.transpose(w, (2, 3, 1, 0)).reshape(9, cin, p)
    w = jnp.pad(w, ((0, 0), (0, c_pad - cin), (0, p_pad - p)))
    return w.astype(jnp.bfloat16)


def _prep_w1x1(w_oihw, scale, c_pad, p_pad):
    p, cin = w_oihw.shape[:2]
    w = (w_oihw * scale[:, None, None, None]).reshape(p, cin)
    w = jnp.pad(jnp.transpose(w, (1, 0)), ((0, c_pad - cin), (0, p_pad - p)))
    return w.astype(jnp.bfloat16)


def _prep_bias(bias, p_pad):
    p = bias.shape[0]
    return jnp.pad(bias, (0, p_pad - p)).reshape(1, p_pad).astype(jnp.float32)


def _parity_planes(x_nhwc, s, hpp, wpp, c_pad):
    """Zero-pad (1 top/left) and split into s*s flattened bf16 parity planes.

    Output (N, s*s, hpp*wpp, c_pad); total size ~= bf16 input (plus channel /
    width lane padding) -- no 9x im2col expansion.
    """
    N, H, W, C = x_nhwc.shape
    xp = jnp.pad(x_nhwc, ((0, 0), (1, s * hpp - H - 1),
                          (1, s * wpp - W - 1), (0, c_pad - C)))
    xp = xp.reshape(N, hpp, s, wpp, s, c_pad)
    xp = jnp.transpose(xp, (0, 2, 4, 1, 3, 5))       # (N, s, s, hpp, wpp, C)
    return xp.reshape(N, s * s, hpp * wpp, c_pad).astype(jnp.bfloat16)


def basic_block_forward(x_nchw, params, stride):
    s = int(stride)
    x = jnp.transpose(x_nchw, (0, 2, 3, 1)).astype(jnp.float32)   # NHWC
    N, H, W, cin = x.shape
    planes = params["w1"].shape[0]
    Ho = (H - 1) // s + 1
    Wo = (W - 1) // s + 1

    # Lane-pad channel dims to 128 for dense MXU lanes / unmasked stores.
    c_pad = _round_up(cin, 128)
    p_pad = _round_up(planes, 128)

    # Shared flat row width: >= Wo+2 so the junk columns double as conv2's
    # horizontal zero padding; multiple of 8 so flat <-> (Ho, W_row) reshapes
    # inside the kernel are layout no-ops.
    W_row = _round_up(Wo + 2, 8)
    hpp1 = Ho + (2 // s) + 1           # conv1 plane rows (incl. 1 slack row)
    L1 = hpp1 * W_row
    M = Ho * W_row
    Lbuf = (Ho + 4) * W_row            # conv2 padded-input buffer rows

    xs = _parity_planes(x, s, hpp1, W_row, c_pad)     # (N, s*s, L1, c_pad) bf16

    s1, b1 = _fold_bn(params["bn1"])
    s2, b2 = _fold_bn(params["bn2"])
    w1 = _prep_w3x3(params["w1"], s1, c_pad, p_pad)
    w2 = _prep_w3x3(params["w2"], s2, p_pad, p_pad)
    b1 = _prep_bias(b1, p_pad)
    b2 = _prep_bias(b2, p_pad)

    has_proj = "ws" in params
    args = [xs, w1, b1, w2, b2]
    in_specs = [
        pl.BlockSpec((1, s * s, L1, c_pad), lambda n: (n, 0, 0, 0)),
        pl.BlockSpec((9, c_pad, p_pad), lambda n: (0, 0, 0)),
        pl.BlockSpec((1, p_pad), lambda n: (0, 0)),
        pl.BlockSpec((9, p_pad, p_pad), lambda n: (0, 0, 0)),
        pl.BlockSpec((1, p_pad), lambda n: (0, 0)),
    ]
    if has_proj:
        ss_, bs_ = _fold_bn(params["bns"])
        args += [_prep_w1x1(params["ws"], ss_, c_pad, p_pad),
                 _prep_bias(bs_, p_pad)]
        in_specs += [pl.BlockSpec((c_pad, p_pad), lambda n: (0, 0)),
                     pl.BlockSpec((1, p_pad), lambda n: (0, 0))]
    else:
        # PyTorch BasicBlock identity-shortcut semantics.
        assert s == 1 and cin == planes, \
            "identity shortcut needs stride=1 and Cin == planes"

    kernel = functools.partial(_basic_block_kernel, stride=s, Ho=Ho, Wo=Wo,
                               W_row=W_row, has_proj=has_proj)

    # VMEM budget derived from the actual block sizes (double-buffered inputs
    # and output + scratch + live f32 accumulators), floored at the 32 MiB
    # scoped default and capped well under physical VMEM.
    def _nbytes(shape, dt):
        n = 1
        for d in shape:
            n *= int(d)
        return n * jnp.dtype(dt).itemsize

    in_bytes = sum(_nbytes(spec.block_shape, a.dtype)
                   for spec, a in zip(in_specs, args))
    out_bytes = _nbytes((1, Ho, Wo, p_pad), jnp.float32)
    scratch_bytes = _nbytes((Lbuf, p_pad), jnp.bfloat16)
    live_bytes = 4 * _nbytes((M, p_pad), jnp.float32)
    vmem_limit = 2 * (in_bytes + out_bytes) + scratch_bytes + live_bytes
    vmem_limit = int(min(max(vmem_limit, 32 << 20), 96 << 20))

    out = pl.pallas_call(
        kernel,
        out_shape=jax.ShapeDtypeStruct((N, Ho, Wo, p_pad), jnp.float32),
        grid=(N,),
        in_specs=in_specs,
        out_specs=pl.BlockSpec((1, Ho, Wo, p_pad), lambda n: (n, 0, 0, 0)),
        scratch_shapes=[pltpu.VMEM((Lbuf, p_pad), jnp.bfloat16)],
        compiler_params=pltpu.CompilerParams(
            dimension_semantics=("parallel",),
            vmem_limit_bytes=vmem_limit),
    )(*args)

    out = out[..., :planes]                            # drop lane padding
    return jnp.transpose(out, (0, 3, 1, 2))            # NHWC -> NCHW


# ------------------------- pure-JAX reference check ------------------------

def _ref_forward(x, params, stride):
    def conv(x, w, s, pad):
        return jax.lax.conv_general_dilated(
            x, w, (s, s), [(pad, pad), (pad, pad)],
            dimension_numbers=("NCHW", "OIHW", "NCHW"))

    def bn(x, p, eps=1e-5):
        g, b, m, v = (t[None, :, None, None] for t in p)
        return (x - m) / jnp.sqrt(v + eps) * g + b

    out = jax.nn.relu(bn(conv(x, params["w1"], stride, 1), params["bn1"]))
    out = bn(conv(out, params["w2"], 1, 1), params["bn2"])
    sc = bn(conv(x, params["ws"], stride, 0), params["bns"]) if "ws" in params else x
    return jax.nn.relu(out + sc)


# --------------------------------- main ------------------------------------

def _make_params(key, in_planes, planes, stride):
    ks = jax.random.split(key, 12)

    def bn_params(k0, k1, k2, k3, c):
        return (1.0 + 0.1 * jax.random.normal(k0, (c,), jnp.float32),   # gamma
                0.1 * jax.random.normal(k1, (c,), jnp.float32),          # beta
                0.1 * jax.random.normal(k2, (c,), jnp.float32),          # running_mean
                1.0 + 0.1 * jax.random.uniform(k3, (c,), jnp.float32))   # running_var

    params = {
        "w1": 0.1 * jax.random.normal(ks[0], (planes, in_planes, 3, 3), jnp.float32),
        "bn1": bn_params(ks[1], ks[2], ks[3], ks[4], planes),
        "w2": 0.1 * jax.random.normal(ks[5], (planes, planes, 3, 3), jnp.float32),
        "bn2": bn_params(ks[6], ks[7], ks[8], ks[9], planes),
    }
    if stride != 1 or in_planes != planes:
        params["ws"] = 0.1 * jax.random.normal(ks[10], (planes, in_planes, 1, 1),
                                               jnp.float32)
        params["bns"] = bn_params(*jax.random.split(ks[11], 4), planes)
    return params


if __name__ == "__main__":
    key = jax.random.PRNGKey(0)
    kx1, kp1, kx2, kp2 = jax.random.split(key, 4)

    fwd = jax.jit(basic_block_forward, static_argnums=2)

    # Case 1: projection shortcut (stride 2, channel change) -- the main demo.
    in_planes, planes, stride = 4, 8, 2
    x1 = jax.random.normal(kx1, (2, in_planes, 16, 16), jnp.float32)  # NCHW
    p1 = _make_params(kp1, in_planes, planes, stride)
    out1 = jax.block_until_ready(fwd(x1, p1, stride))
    ref1 = jax.block_until_ready(_ref_forward(x1, p1, stride))
    # bf16 MXU inputs with f32 accumulation -> slightly looser tolerance.
    np.testing.assert_allclose(np.asarray(out1), np.asarray(ref1),
                               rtol=5e-2, atol=5e-2)
    assert out1.shape == (2, planes, 8, 8)

    # Case 2: identity shortcut (stride 1, same channels).
    x2 = jax.random.normal(kx2, (2, 8, 16, 16), jnp.float32)
    p2 = _make_params(kp2, 8, 8, 1)
    out2 = jax.block_until_ready(fwd(x2, p2, 1))
    ref2 = jax.block_until_ready(_ref_forward(x2, p2, 1))
    np.testing.assert_allclose(np.asarray(out2), np.asarray(ref2),
                               rtol=5e-2, atol=5e-2)
    assert out2.shape == (2, 8, 16, 16)

    print("KERNEL_OK")
</pallas_src>

<mosaic_0001>
module attributes {stable_mosaic.version = 11 : i64} {
  func.func @_basic_block_kernel(%arg0: i32, %arg1: memref<1x4x160x128xbf16, #tpu.memory_space<vmem>>, %arg2: memref<9x128x128xbf16, #tpu.memory_space<vmem>>, %arg3: memref<1x128xf32, #tpu.memory_space<vmem>>, %arg4: memref<9x128x128xbf16, #tpu.memory_space<vmem>>, %arg5: memref<1x128xf32, #tpu.memory_space<vmem>>, %arg6: memref<128x128xbf16, #tpu.memory_space<vmem>>, %arg7: memref<1x128xf32, #tpu.memory_space<vmem>>, %arg8: memref<1x8x8x128xf32, #tpu.memory_space<vmem>>, %arg9: memref<192x128xbf16, #tpu.memory_space<vmem>>) attributes {dimension_semantics = [#tpu.dimension_semantics<parallel>], iteration_bounds = array<i64: 2>, scalar_prefetch = 0 : i64, scratch_operands = 1 : i64, tpu.core_type = #tpu.core_type<tc>, window_params = [{transform_indices = @transform_0, window_bounds = array<i64: 1, 4, 160, 128>}, {pipeline_mode = #tpu.pipeline_mode<synchronous>, transform_indices = @transform_1, window_bounds = array<i64: 9, 128, 128>}, {pipeline_mode = #tpu.pipeline_mode<synchronous>, transform_indices = @transform_2, window_bounds = array<i64: 1, 128>}, {pipeline_mode = #tpu.pipeline_mode<synchronous>, transform_indices = @transform_3, window_bounds = array<i64: 9, 128, 128>}, {pipeline_mode = #tpu.pipeline_mode<synchronous>, transform_indices = @transform_4, window_bounds = array<i64: 1, 128>}, {pipeline_mode = #tpu.pipeline_mode<synchronous>, transform_indices = @transform_5, window_bounds = array<i64: 128, 128>}, {pipeline_mode = #tpu.pipeline_mode<synchronous>, transform_indices = @transform_6, window_bounds = array<i64: 1, 128>}, {transform_indices = @transform_7, window_bounds = array<i64: 1, 8, 8, 128>}]} {
    %c0 = arith.constant 0 : index
    %c0_0 = arith.constant 0 : index
    %0 = vector.load %arg3[%c0, %c0_0] : memref<1x128xf32, #tpu.memory_space<vmem>>, vector<1x128xf32>
    %1 = vector.shape_cast %0 : vector<1x128xf32> to vector<1x128xf32>
    %2 = vector.broadcast %1 : vector<1x128xf32> to vector<128x128xf32>
    %c0_1 = arith.constant 0 : index
    %c0_2 = arith.constant 0 : index
    %c0_3 = arith.constant 0 : index
    %c0_4 = arith.constant 0 : index
    %3 = vector.load %arg1[%c0_1, %c0_2, %c0_3, %c0_4] : memref<1x4x160x128xbf16, #tpu.memory_space<vmem>>, vector<1x1x128x128xbf16>
    %4 = vector.shape_cast %3 : vector<1x1x128x128xbf16> to vector<128x128xbf16>
    %c0_5 = arith.constant 0 : index
    %c0_6 = arith.constant 0 : index
    %c0_7 = arith.constant 0 : index
    %5 = vector.load %arg2[%c0_5, %c0_6, %c0_7] : memref<9x128x128xbf16, #tpu.memory_space<vmem>>, vector<1x128x128xbf16>
    %6 = vector.shape_cast %5 : vector<1x128x128xbf16> to vector<128x128xbf16>
    %cst = arith.constant dense<0.000000e+00> : vector<128x128xf32>
    %7 = tpu.matmul %4, %6, %cst {dimension_numbers = #tpu.dot_dimension_numbers<[1], [0], [0], [1], [0, 0, 1, 1], [], []>} : vector<128x128xbf16>, vector<128x128xbf16>, vector<128x128xf32> -> vector<128x128xf32>
    %8 = arith.addf %2, %7 : vector<128x128xf32>
    %c0_8 = arith.constant 0 : index
    %c1 = arith.constant 1 : index
    %c0_9 = arith.constant 0 : index
    %c0_10 = arith.constant 0 : index
    %9 = vector.load %arg1[%c0_8, %c1, %c0_9, %c0_10] : memref<1x4x160x128xbf16, #tpu.memory_space<vmem>>, vector<1x1x128x128xbf16>
    %10 = vector.shape_cast %9 : vector<1x1x128x128xbf16> to vector<128x128xbf16>
    %c1_11 = arith.constant 1 : index
    %c0_12 = arith.constant 0 : index
    %c0_13 = arith.constant 0 : index
    %11 = vector.load %arg2[%c1_11, %c0_12, %c0_13] : memref<9x128x128xbf16, #tpu.memory_space<vmem>>, vector<1x128x128xbf16>
    %12 = vector.shape_cast %11 : vector<1x128x128xbf16> to vector<128x128xbf16>
    %cst_14 = arith.constant dense<0.000000e+00> : vector<128x128xf32>
    %13 = tpu.matmul %10, %12, %cst_14 {dimension_numbers = #tpu.dot_dimension_numbers<[1], [0], [0], [1], [0, 0, 1, 1], [], []>} : vector<128x128xbf16>, vector<128x128xbf16>, vector<128x128xf32> -> vector<128x128xf32>
    %14 = arith.addf %8, %13 : vector<128x128xf32>
    %c0_15 = arith.constant 0 : index
    %c0_16 = arith.constant 0 : index
    %c1_17 = arith.constant 1 : index
    %c0_18 = arith.constant 0 : index
    %15 = vector.load %arg1[%c0_15, %c0_16, %c1_17, %c0_18] : memref<1x4x160x128xbf16, #tpu.memory_space<vmem>>, vector<1x1x128x128xbf16>
    %16 = vector.shape_cast %15 : vector<1x1x128x128xbf16> to vector<128x128xbf16>
    %c2 = arith.constant 2 : index
    %c0_19 = arith.constant 0 : index
    %c0_20 = arith.constant 0 : index
    %17 = vector.load %arg2[%c2, %c0_19, %c0_20] : memref<9x128x128xbf16, #tpu.memory_space<vmem>>, vector<1x128x128xbf16>
    %18 = vector.shape_cast %17 : vector<1x128x128xbf16> to vector<128x128xbf16>
    %cst_21 = arith.constant dense<0.000000e+00> : vector<128x128xf32>
    %19 = tpu.matmul %16, %18, %cst_21 {dimension_numbers = #tpu.dot_dimension_numbers<[1], [0], [0], [1], [0, 0, 1, 1], [], []>} : vector<128x128xbf16>, vector<128x128xbf16>, vector<128x128xf32> -> vector<128x128xf32>
    %20 = arith.addf %14, %19 : vector<128x128xf32>
    %c0_22 = arith.constant 0 : index
    %c2_23 = arith.constant 2 : index
    %c0_24 = arith.constant 0 : index
    %c0_25 = arith.constant 0 : index
    %21 = vector.load %arg1[%c0_22, %c2_23, %c0_24, %c0_25] : memref<1x4x160x128xbf16, #tpu.memory_space<vmem>>, vector<1x1x128x128xbf16>
    %22 = vector.shape_cast %21 : vector<1x1x128x128xbf16> to vector<128x128xbf16>
    %c3 = arith.constant 3 : index
    %c0_26 = arith.constant 0 : index
    %c0_27 = arith.constant 0 : index
    %23 = vector.load %arg2[%c3, %c0_26, %c0_27] : memref<9x128x128xbf16, #tpu.memory_space<vmem>>, vector<1x128x128xbf16>
    %24 = vector.shape_cast %23 : vector<1x128x128xbf16> to vector<128x128xbf16>
    %cst_28 = arith.constant dense<0.000000e+00> : vector<128x128xf32>
    %25 = tpu.matmul %22, %24, %cst_28 {dimension_numbers = #tpu.dot_dimension_numbers<[1], [0], [0], [1], [0, 0, 1, 1], [], []>} : vector<128x128xbf16>, vector<128x128xbf16>, vector<128x128xf32> -> vector<128x128xf32>
    %26 = arith.addf %20, %25 : vector<128x128xf32>
    %c0_29 = arith.constant 0 : index
    %c3_30 = arith.constant 3 : index
    %c0_31 = arith.constant 0 : index
    %c0_32 = arith.constant 0 : index
    %27 = vector.load %arg1[%c0_29, %c3_30, %c0_31, %c0_32] : memref<1x4x160x128xbf16, #tpu.memory_space<vmem>>, vector<1x1x128x128xbf16>
    %28 = vector.shape_cast %27 : vector<1x1x128x128xbf16> to vector<128x128xbf16>
    %c4 = arith.constant 4 : index
    %c0_33 = arith.constant 0 : index
    %c0_34 = arith.constant 0 : index
    %29 = vector.load %arg2[%c4, %c0_33, %c0_34] : memref<9x128x128xbf16, #tpu.memory_space<vmem>>, vector<1x128x128xbf16>
    %30 = vector.shape_cast %29 : vector<1x128x128xbf16> to vector<128x128xbf16>
    %cst_35 = arith.constant dense<0.000000e+00> : vector<128x128xf32>
    %31 = tpu.matmul %28, %30, %cst_35 {dimension_numbers = #tpu.dot_dimension_numbers<[1], [0], [0], [1], [0, 0, 1, 1], [], []>} : vector<128x128xbf16>, vector<128x128xbf16>, vector<128x128xf32> -> vector<128x128xf32>
    %32 = arith.addf %26, %31 : vector<128x128xf32>
    %c0_36 = arith.constant 0 : index
    %c2_37 = arith.constant 2 : index
    %c1_38 = arith.constant 1 : index
    %c0_39 = arith.constant 0 : index
    %33 = vector.load %arg1[%c0_36, %c2_37, %c1_38, %c0_39] : memref<1x4x160x128xbf16, #tpu.memory_space<vmem>>, vector<1x1x128x128xbf16>
    %34 = vector.shape_cast %33 : vector<1x1x128x128xbf16> to vector<128x128xbf16>
    %c5 = arith.constant 5 : index
    %c0_40 = arith.constant 0 : index
    %c0_41 = arith.constant 0 : index
    %35 = vector.load %arg2[%c5, %c0_40, %c0_41] : memref<9x128x128xbf16, #tpu.memory_space<vmem>>, vector<1x128x128xbf16>
    %36 = vector.shape_cast %35 : vector<1x128x128xbf16> to vector<128x128xbf16>
    %cst_42 = arith.constant dense<0.000000e+00> : vector<128x128xf32>
    %37 = tpu.matmul %34, %36, %cst_42 {dimension_numbers = #tpu.dot_dimension_numbers<[1], [0], [0], [1], [0, 0, 1, 1], [], []>} : vector<128x128xbf16>, vector<128x128xbf16>, vector<128x128xf32> -> vector<128x128xf32>
    %38 = arith.addf %32, %37 : vector<128x128xf32>
    %c0_43 = arith.constant 0 : index
    %c0_44 = arith.constant 0 : index
    %c16 = arith.constant 16 : index
    %c0_45 = arith.constant 0 : index
    %39 = vector.load %arg1[%c0_43, %c0_44, %c16, %c0_45] : memref<1x4x160x128xbf16, #tpu.memory_space<vmem>>, vector<1x1x128x128xbf16>
    %40 = vector.shape_cast %39 : vector<1x1x128x128xbf16> to vector<128x128xbf16>
    %c6 = arith.constant 6 : index
    %c0_46 = arith.constant 0 : index
    %c0_47 = arith.constant 0 : index
    %41 = vector.load %arg2[%c6, %c0_46, %c0_47] : memref<9x128x128xbf16, #tpu.memory_space<vmem>>, vector<1x128x128xbf16>
    %42 = vector.shape_cast %41 : vector<1x128x128xbf16> to vector<128x128xbf16>
    %cst_48 = arith.constant dense<0.000000e+00> : vector<128x128xf32>
    %43 = tpu.matmul %40, %42, %cst_48 {dimension_numbers = #tpu.dot_dimension_numbers<[1], [0], [0], [1], [0, 0, 1, 1], [], []>} : vector<128x128xbf16>, vector<128x128xbf16>, vector<128x128xf32> -> vector<128x128xf32>
    %44 = arith.addf %38, %43 : vector<128x128xf32>
    %c0_49 = arith.constant 0 : index
    %c1_50 = arith.constant 1 : index
    %c16_51 = arith.constant 16 : index
    %c0_52 = arith.constant 0 : index
    %45 = vector.load %arg1[%c0_49, %c1_50, %c16_51, %c0_52] : memref<1x4x160x128xbf16, #tpu.memory_space<vmem>>, vector<1x1x128x128xbf16>
    %46 = vector.shape_cast %45 : vector<1x1x128x128xbf16> to vector<128x128xbf16>
    %c7 = arith.constant 7 : index
    %c0_53 = arith.constant 0 : index
    %c0_54 = arith.constant 0 : index
    %47 = vector.load %arg2[%c7, %c0_53, %c0_54] : memref<9x128x128xbf16, #tpu.memory_space<vmem>>, vector<1x128x128xbf16>
    %48 = vector.shape_cast %47 : vector<1x128x128xbf16> to vector<128x128xbf16>
    %cst_55 = arith.constant dense<0.000000e+00> : vector<128x128xf32>
    %49 = tpu.matmul %46, %48, %cst_55 {dimension_numbers = #tpu.dot_dimension_numbers<[1], [0], [0], [1], [0, 0, 1, 1], [], []>} : vector<128x128xbf16>, vector<128x128xbf16>, vector<128x128xf32> -> vector<128x128xf32>
    %50 = arith.addf %44, %49 : vector<128x128xf32>
    %c0_56 = arith.constant 0 : index
    %c0_57 = arith.constant 0 : index
    %c17 = arith.constant 17 : index
    %c0_58 = arith.constant 0 : index
    %51 = vector.load %arg1[%c0_56, %c0_57, %c17, %c0_58] : memref<1x4x160x128xbf16, #tpu.memory_space<vmem>>, vector<1x1x128x128xbf16>
    %52 = vector.shape_cast %51 : vector<1x1x128x128xbf16> to vector<128x128xbf16>
    %c8 = arith.constant 8 : index
    %c0_59 = arith.constant 0 : index
    %c0_60 = arith.constant 0 : index
    %53 = vector.load %arg2[%c8, %c0_59, %c0_60] : memref<9x128x128xbf16, #tpu.memory_space<vmem>>, vector<1x128x128xbf16>
    %54 = vector.shape_cast %53 : vector<1x128x128xbf16> to vector<128x128xbf16>
    %cst_61 = arith.constant dense<0.000000e+00> : vector<128x128xf32>
    %55 = tpu.matmul %52, %54, %cst_61 {dimension_numbers = #tpu.dot_dimension_numbers<[1], [0], [0], [1], [0, 0, 1, 1], [], []>} : vector<128x128xbf16>, vector<128x128xbf16>, vector<128x128xf32> -> vector<128x128xf32>
    %56 = arith.addf %50, %55 : vector<128x128xf32>
    %57 = tpu.iota {dimensions = array<i32: 0>} : vector<16x128xi32>
    %c8_i32 = arith.constant 8 : i32
    %58 = vector.broadcast %c8_i32 : i32 to vector<16x128xi32>
    %59 = arith.cmpi slt, %57, %58 : vector<16x128xi32>
    %cst_62 = arith.constant 0.000000e+00 : f32
    %60 = vector.broadcast %cst_62 : f32 to vector<128x128xf32>
    %61 = arith.maximumf %56, %60 : vector<128x128xf32>
    %62 = vector.shape_cast %61 : vector<128x128xf32> to vector<8x16x128xf32>
    %63 = vector.shape_cast %59 : vector<16x128xi1> to vector<1x16x128xi1>
    %cst_63 = arith.constant 0.000000e+00 : f32
    %64 = vector.shape_cast %63 : vector<1x16x128xi1> to vector<1x16x128xi1>
    %65 = vector.broadcast %64 : vector<1x16x128xi1> to vector<8x16x128xi1>
    %66 = vector.broadcast %cst_63 : f32 to vector<8x16x128xf32>
    %67 = arith.select %65, %62, %66 : vector<8x16x128xi1>, vector<8x16x128xf32>
    %cst_64 = arith.constant 0.000000e+00 : bf16
    %68 = vector.broadcast %cst_64 : bf16 to vector<32x128xbf16>
    %c0_65 = arith.constant 0 : index
    %c0_66 = arith.constant 0 : index
    %69 = vector.load %arg9[%c0_65, %c0_66] : memref<192x128xbf16, #tpu.memory_space<vmem>>, vector<32x128xbf16>
    tpu.vector_store %arg9[%c0_65, %c0_66], %68 {strides = array<i32>} : memref<192x128xbf16, #tpu.memory_space<vmem>>, vector<32x128xbf16>,
    %70 = vector.shape_cast %67 : vector<8x16x128xf32> to vector<128x128xf32>
    %71 = arith.truncf %70 : vector<128x128xf32> to vector<128x128xbf16>
    %c32 = arith.constant 32 : index
    %c0_67 = arith.constant 0 : index
    %72 = vector.load %arg9[%c32, %c0_67] : memref<192x128xbf16, #tpu.memory_space<vmem>>, vector<128x128xbf16>
    tpu.vector_store %arg9[%c32, %c0_67], %71 {strides = array<i32>} : memref<192x128xbf16, #tpu.memory_space<vmem>>, vector<128x128xbf16>,
    %73 = vector.extract_strided_slice %68 {offsets = [0, 0], sizes = [16, 128], strides = [1, 1]} : vector<32x128xbf16> to vector<16x128xbf16>
    %c160 = arith.constant 160 : index
    %c0_68 = arith.constant 0 : index
    %74 = vector.load %arg9[%c160, %c0_68] : memref<192x128xbf16, #tpu.memory_space<vmem>>, vector<16x128xbf16>
    tpu.vector_store %arg9[%c160, %c0_68], %73 {strides = array<i32>} : memref<192x128xbf16, #tpu.memory_space<vmem>>, vector<16x128xbf16>,
    %c0_69 = arith.constant 0 : index
    %c0_70 = arith.constant 0 : index
    %75 = vector.load %arg5[%c0_69, %c0_70] : memref<1x128xf32, #tpu.memory_space<vmem>>, vector<1x128xf32>
    %76 = vector.shape_cast %75 : vector<1x128xf32> to vector<1x128xf32>
    %77 = vector.broadcast %76 : vector<1x128xf32> to vector<128x128xf32>
    %c15 = arith.constant 15 : index
    %c0_71 = arith.constant 0 : index
    %78 = vector.load %arg9[%c15, %c0_71] : memref<192x128xbf16, #tpu.memory_space<vmem>>, vector<128x128xbf16>
    %c0_72 = arith.constant 0 : index
    %c0_73 = arith.constant 0 : index
    %c0_74 = arith.constant 0 : index
    %79 = vector.load %arg4[%c0_72, %c0_73, %c0_74] : memref<9x128x128xbf16, #tpu.memory_space<vmem>>, vector<1x128x128xbf16>
    %80 = vector.shape_cast %79 : vector<1x128x128xbf16> to vector<128x128xbf16>
    %cst_75 = arith.constant dense<0.000000e+00> : vector<128x128xf32>
    %81 = tpu.matmul %78, %80, %cst_75 {dimension_numbers = #tpu.dot_dimension_numbers<[1], [0], [0], [1], [0, 0, 1, 1], [], []>} : vector<128x128xbf16>, vector<128x128xbf16>, vector<128x128xf32> -> vector<128x128xf32>
    %82 = arith.addf %77, %81 : vector<128x128xf32>
    %c16_76 = arith.constant 16 : index
    %c0_77 = arith.constant 0 : index
    %83 = vector.load %arg9[%c16_76, %c0_77] : memref<192x128xbf16, #tpu.memory_space<vmem>>, vector<128x128xbf16>
    %c1_78 = arith.constant 1 : index
    %c0_79 = arith.constant 0 : index
    %c0_80 = arith.constant 0 : index
    %84 = vector.load %arg4[%c1_78, %c0_79, %c0_80] : memref<9x128x128xbf16, #tpu.memory_space<vmem>>, vector<1x128x128xbf16>
    %85 = vector.shape_cast %84 : vector<1x128x128xbf16> to vector<128x128xbf16>
    %cst_81 = arith.constant dense<0.000000e+00> : vector<128x128xf32>
    %86 = tpu.matmul %83, %85, %cst_81 {dimension_numbers = #tpu.dot_dimension_numbers<[1], [0], [0], [1], [0, 0, 1, 1], [], []>} : vector<128x128xbf16>, vector<128x128xbf16>, vector<128x128xf32> -> vector<128x128xf32>
    %87 = arith.addf %82, %86 : vector<128x128xf32>
    %c17_82 = arith.constant 17 : index
    %c0_83 = arith.constant 0 : index
    %88 = vector.load %arg9[%c17_82, %c0_83] : memref<192x128xbf16, #tpu.memory_space<vmem>>, vector<128x128xbf16>
    %c2_84 = arith.constant 2 : index
    %c0_85 = arith.constant 0 : index
    %c0_86 = arith.constant 0 : index
    %89 = vector.load %arg4[%c2_84, %c0_85, %c0_86] : memref<9x128x128xbf16, #tpu.memory_space<vmem>>, vector<1x128x128xbf16>
    %90 = vector.shape_cast %89 : vector<1x128x128xbf16> to vector<128x128xbf16>
    %cst_87 = arith.constant dense<0.000000e+00> : vector<128x128xf32>
    %91 = tpu.matmul %88, %90, %cst_87 {dimension_numbers = #tpu.dot_dimension_numbers<[1], [0], [0], [1], [0, 0, 1, 1], [], []>} : vector<128x128xbf16>, vector<128x128xbf16>, vector<128x128xf32> -> vector<128x128xf32>
    %92 = arith.addf %87, %91 : vector<128x128xf32>
    %c31 = arith.constant 31 : index
    %c0_88 = arith.constant 0 : index
    %93 = vector.load %arg9[%c31, %c0_88] : memref<192x128xbf16, #tpu.memory_space<vmem>>, vector<128x128xbf16>
    %c3_89 = arith.constant 3 : index
    %c0_90 = arith.constant 0 : index
    %c0_91 = arith.constant 0 : index
    %94 = vector.load %arg4[%c3_89, %c0_90, %c0_91] : memref<9x128x128xbf16, #tpu.memory_space<vmem>>, vector<1x128x128xbf16>
    %95 = vector.shape_cast %94 : vector<1x128x128xbf16> to vector<128x128xbf16>
    %cst_92 = arith.constant dense<0.000000e+00> : vector<128x128xf32>
    %96 = tpu.matmul %93, %95, %cst_92 {dimension_numbers = #tpu.dot_dimension_numbers<[1], [0], [0], [1], [0, 0, 1, 1], [], []>} : vector<128x128xbf16>, vector<128x128xbf16>, vector<128x128xf32> -> vector<128x128xf32>
    %97 = arith.addf %92, %96 : vector<128x128xf32>
    %c32_93 = arith.constant 32 : index
    %c0_94 = arith.constant 0 : index
    %98 = vector.load %arg9[%c32_93, %c0_94] : memref<192x128xbf16, #tpu.memory_space<vmem>>, vector<128x128xbf16>
    %c4_95 = arith.constant 4 : index
    %c0_96 = arith.constant 0 : index
    %c0_97 = arith.constant 0 : index
    %99 = vector.load %arg4[%c4_95, %c0_96, %c0_97] : memref<9x128x128xbf16, #tpu.memory_space<vmem>>, vector<1x128x128xbf16>
    %100 = vector.shape_cast %99 : vector<1x128x128xbf16> to vector<128x128xbf16>
    %cst_98 = arith.constant dense<0.000000e+00> : vector<128x128xf32>
    %101 = tpu.matmul %98, %100, %cst_98 {dimension_numbers = #tpu.dot_dimension_numbers<[1], [0], [0], [1], [0, 0, 1, 1], [], []>} : vector<128x128xbf16>, vector<128x128xbf16>, vector<128x128xf32> -> vector<128x128xf32>
    %102 = arith.addf %97, %101 : vector<128x128xf32>
    %c33 = arith.constant 33 : index
    %c0_99 = arith.constant 0 : index
    %103 = vector.load %arg9[%c33, %c0_99] : memref<192x128xbf16, #tpu.memory_space<vmem>>, vector<128x128xbf16>
    %c5_100 = arith.constant 5 : index
    %c0_101 = arith.constant 0 : index
    %c0_102 = arith.constant 0 : index
    %104 = vector.load %arg4[%c5_100, %c0_101, %c0_102] : memref<9x128x128xbf16, #tpu.memory_space<vmem>>, vector<1x128x128xbf16>
    %105 = vector.shape_cast %104 : vector<1x128x128xbf16> to vector<128x128xbf16>
    %cst_103 = arith.constant dense<0.000000e+00> : vector<128x128xf32>
    %106 = tpu.matmul %103, %105, %cst_103 {dimension_numbers = #tpu.dot_dimension_numbers<[1], [0], [0], [1], [0, 0, 1, 1], [], []>} : vector<128x128xbf16>, vector<128x128xbf16>, vector<128x128xf32> -> vector<128x128xf32>
    %107 = arith.addf %102, %106 : vector<128x128xf32>
    %c47 = arith.constant 47 : index
    %c0_104 = arith.constant 0 : index
    %108 = vector.load %arg9[%c47, %c0_104] : memref<192x128xbf16, #tpu.memory_space<vmem>>, vector<128x128xbf16>
    %c6_105 = arith.constant 6 : index
    %c0_106 = arith.constant 0 : index
    %c0_107 = arith.constant 0 : index
    %109 = vector.load %arg4[%c6_105, %c0_106, %c0_107] : memref<9x128x128xbf16, #tpu.memory_space<vmem>>, vector<1x128x128xbf16>
    %110 = vector.shape_cast %109 : vector<1x128x128xbf16> to vector<128x128xbf16>
    %cst_108 = arith.constant dense<0.000000e+00> : vector<128x128xf32>
    %111 = tpu.matmul %108, %110, %cst_108 {dimension_numbers = #tpu.dot_dimension_numbers<[1], [0], [0], [1], [0, 0, 1, 1], [], []>} : vector<128x128xbf16>, vector<128x128xbf16>, vector<128x128xf32> -> vector<128x128xf32>
    %112 = arith.addf %107, %111 : vector<128x128xf32>
    %c48 = arith.constant 48 : index
    %c0_109 = arith.constant 0 : index
    %113 = vector.load %arg9[%c48, %c0_109] : memref<192x128xbf16, #tpu.memory_space<vmem>>, vector<128x128xbf16>
    %c7_110 = arith.constant 7 : index
    %c0_111 = arith.constant 0 : index
    %c0_112 = arith.constant 0 : index
    %114 = vector.load %arg4[%c7_110, %c0_111, %c0_112] : memref<9x128x128xbf16, #tpu.memory_space<vmem>>, vector<1x128x128xbf16>
    %115 = vector.shape_cast %114 : vector<1x128x128xbf16> to vector<128x128xbf16>
    %cst_113 = arith.constant dense<0.000000e+00> : vector<128x128xf32>
    %116 = tpu.matmul %113, %115, %cst_113 {dimension_numbers = #tpu.dot_dimension_numbers<[1], [0], [0], [1], [0, 0, 1, 1], [], []>} : vector<128x128xbf16>, vector<128x128xbf16>, vector<128x128xf32> -> vector<128x128xf32>
    %117 = arith.addf %112, %116 : vector<128x128xf32>
    %c49 = arith.constant 49 : index
    %c0_114 = arith.constant 0 : index
    %118 = vector.load %arg9[%c49, %c0_114] : memref<192x128xbf16, #tpu.memory_space<vmem>>, vector<128x128xbf16>
    %c8_115 = arith.constant 8 : index
    %c0_116 = arith.constant 0 : index
    %c0_117 = arith.constant 0 : index
    %119 = vector.load %arg4[%c8_115, %c0_116, %c0_117] : memref<9x128x128xbf16, #tpu.memory_space<vmem>>, vector<1x128x128xbf16>
    %120 = vector.shape_cast %119 : vector<1x128x128xbf16> to vector<128x128xbf16>
    %cst_118 = arith.constant dense<0.000000e+00> : vector<128x128xf32>
    %121 = tpu.matmul %118, %120, %cst_118 {dimension_numbers = #tpu.dot_dimension_numbers<[1], [0], [0], [1], [0, 0, 1, 1], [], []>} : vector<128x128xbf16>, vector<128x128xbf16>, vector<128x128xf32> -> vector<128x128xf32>
    %122 = arith.addf %117, %121 : vector<128x128xf32>
    %c0_119 = arith.constant 0 : index
    %c3_120 = arith.constant 3 : index
    %c0_121 = arith.constant 0 : index
    %c0_122 = arith.constant 0 : index
    %123 = vector.load %arg1[%c0_119, %c3_120, %c0_121, %c0_122] : memref<1x4x160x128xbf16, #tpu.memory_space<vmem>>, vector<1x1x128x128xbf16>
    %124 = vector.shape_cast %123 : vector<1x1x128x128xbf16> to vector<128x128xbf16>
    %c0_123 = arith.constant 0 : index
    %c0_124 = arith.constant 0 : index
    %125 = vector.load %arg6[%c0_123, %c0_124] : memref<128x128xbf16, #tpu.memory_space<vmem>>, vector<128x128xbf16>
    %cst_125 = arith.constant dense<0.000000e+00> : vector<128x128xf32>
    %126 = tpu.matmul %124, %125, %cst_125 {dimension_numbers = #tpu.dot_dimension_numbers<[1], [0], [0], [1], [0, 0, 1, 1], [], []>} : vector<128x128xbf16>, vector<128x128xbf16>, vector<128x128xf32> -> vector<128x128xf32>
    %c0_126 = arith.constant 0 : index
    %c0_127 = arith.constant 0 : index
    %127 = vector.load %arg7[%c0_126, %c0_127] : memref<1x128xf32, #tpu.memory_space<vmem>>, vector<1x128xf32>
    %128 = vector.broadcast %127 : vector<1x128xf32> to vector<128x128xf32>
    %129 = arith.addf %126, %128 : vector<128x128xf32>
    %130 = arith.addf %122, %129 : vector<128x128xf32>
    %cst_128 = arith.constant 0.000000e+00 : f32
    %131 = vector.broadcast %cst_128 : f32 to vector<128x128xf32>
    %132 = arith.maximumf %130, %131 : vector<128x128xf32>
    %133 = vector.shape_cast %132 : vector<128x128xf32> to vector<8x16x128xf32>
    %134 = vector.extract_strided_slice %133 {offsets = [0, 0, 0], sizes = [8, 8, 128], strides = [1, 1, 1]} : vector<8x16x128xf32> to vector<8x8x128xf32>
    %c0_129 = arith.constant 0 : index
    %c0_130 = arith.constant 0 : index
    %c0_131 = arith.constant 0 : index
    %c0_132 = arith.constant 0 : index
    %135 = vector.load %arg8[%c0_129, %c0_130, %c0_131, %c0_132] : memref<1x8x8x128xf32, #tpu.memory_space<vmem>>, vector<1x8x8x128xf32>
    %136 = vector.shape_cast %135 : vector<1x8x8x128xf32> to vector<8x8x128xf32>
    %137 = vector.shape_cast %134 : vector<8x8x128xf32> to vector<1x8x8x128xf32>
    tpu.vector_store %arg8[%c0_129, %c0_130, %c0_131, %c0_132], %137 {strides = array<i32>} : memref<1x8x8x128xf32, #tpu.memory_space<vmem>>, vector<1x8x8x128xf32>,
    return
  }
  func.func @transform_0(%arg0: i32) -> (i32, i32, i32, i32) {
    %c0_i32 = arith.constant 0 : i32
    %c0_i32_0 = arith.constant 0 : i32
    %c0_i32_1 = arith.constant 0 : i32
    %c0_i32_2 = arith.constant 0 : i32
    return %arg0, %c0_i32, %c0_i32_0, %c0_i32_1 : i32, i32, i32, i32
  }
  func.func @transform_1(%arg0: i32) -> (i32, i32, i32) {
    %c0_i32 = arith.constant 0 : i32
    %c0_i32_0 = arith.constant 0 : i32
    %c0_i32_1 = arith.constant 0 : i32
    %c0_i32_2 = arith.constant 0 : i32
    return %c0_i32, %c0_i32_0, %c0_i32_1 : i32, i32, i32
  }
  func.func @transform_2(%arg0: i32) -> (i32, i32) {
    %c0_i32 = arith.constant 0 : i32
    %c0_i32_0 = arith.constant 0 : i32
    %c0_i32_1 = arith.constant 0 : i32
    return %c0_i32, %c0_i32_0 : i32, i32
  }
  func.func @transform_3(%arg0: i32) -> (i32, i32, i32) {
    %c0_i32 = arith.constant 0 : i32
    %c0_i32_0 = arith.constant 0 : i32
    %c0_i32_1 = arith.constant 0 : i32
    %c0_i32_2 = arith.constant 0 : i32
    return %c0_i32, %c0_i32_0, %c0_i32_1 : i32, i32, i32
  }
  func.func @transform_4(%arg0: i32) -> (i32, i32) {
    %c0_i32 = arith.constant 0 : i32
    %c0_i32_0 = arith.constant 0 : i32
    %c0_i32_1 = arith.constant 0 : i32
    return %c0_i32, %c0_i32_0 : i32, i32
  }
  func.func @transform_5(%arg0: i32) -> (i32, i32) {
    %c0_i32 = arith.constant 0 : i32
    %c0_i32_0 = arith.constant 0 : i32
    %c0_i32_1 = arith.constant 0 : i32
    return %c0_i32, %c0_i32_0 : i32, i32
  }
  func.func @transform_6(%arg0: i32) -> (i32, i32) {
    %c0_i32 = arith.constant 0 : i32
    %c0_i32_0 = arith.constant 0 : i32
    %c0_i32_1 = arith.constant 0 : i32
    return %c0_i32, %c0_i32_0 : i32, i32
  }
  func.func @transform_7(%arg0: i32) -> (i32, i32, i32, i32) {
    %c0_i32 = arith.constant 0 : i32
    %c0_i32_0 = arith.constant 0 : i32
    %c0_i32_1 = arith.constant 0 : i32
    %c0_i32_2 = arith.constant 0 : i32
    return %arg0, %c0_i32, %c0_i32_0, %c0_i32_1 : i32, i32, i32, i32
  }
}

</mosaic_0001>

<llo_original>
// kernel: basic_block_forward.1
$region0: #{basic_block_forward.1}
  #allocation0 [shape = 'u32[]', space=smem, size = 0x4, offset = 0x4, fixed_abs, tag = 'smem constant byte address 0x4 - core index']
  #allocation1 [shape = 'u32[144,128]{1,0:T(1,128)}', space=vmem, size = 0x12000, scoped, tag = 'internal scratch']
  #allocation2 [shape = 'bf16[192,128]{1,0:T(16,128)(2,1)}', space=vmem, size = 0xc000, scoped, tag = 'scratch operand']
  %s0 = inlined_call_operand.vmem [shape: bf16[2,4,160,128], index: 0, kind: input, shape index: {}]
  %s1 = inlined_call_operand.vmem [shape: bf16[9,128,128], index: 1, kind: input, shape index: {}]
  %s2 = inlined_call_operand.vmem [shape: f32[1,128], index: 2, kind: input, shape index: {}]
  %s3 = inlined_call_operand.vmem [shape: bf16[9,128,128], index: 3, kind: input, shape index: {}]
  %s4 = inlined_call_operand.vmem [shape: f32[1,128], index: 4, kind: input, shape index: {}]
  %s5 = inlined_call_operand.vmem [shape: bf16[128,128], index: 5, kind: input, shape index: {}]
  %s6 = inlined_call_operand.vmem [shape: f32[1,128], index: 6, kind: input, shape index: {}]
  %s7 = inlined_call_operand.vmem [shape: f32[2,8,8,128], index: 7, kind: output, shape index: {}]
  %s8 = sld [smem:[#allocation0]]
  $region61: #{basic_block_forward.1} parent=0
    _
  %s10 = ssub.s32 1, %s8
  %s11 = scalar_select 0, %s10, %s8
  loop: start=0, step=1, limit=4
  $region2: #{basic_block_forward.1} parent=0 // loop_pre_header
    _
  $region3: #{basic_block_forward.1} parent=0 // loop_header
    %s13 = sphi 0, %s17
    %p14 = scmp.ge.s32.totalorder %s13, 4
    %s23 = sphi 0, %s25
    %s26 = sphi 0, %s23
    %s27 = sphi 0, %s26
    %s43 = sphi 0, %s27
    %s47 = sphi 0, %s47
    %s49 = sphi 0, %s47
    %s50 = sphi 0, %s49
    %s64 = sphi 0, %s50
    %s68 = sphi 0, %s68
    %s70 = sphi 0, %s68
    %s71 = sphi 0, %s70
    %s85 = sphi 0, %s71
    %s89 = sphi 0, %s89
    %s91 = sphi 0, %s89
    %s92 = sphi 0, %s91
    %s106 = sphi 0, %s92
    %s110 = sphi 0, %s110
    %s112 = sphi 0, %s110
    %s113 = sphi 0, %s112
    %s127 = sphi 0, %s113
    %s131 = sphi 0, %s131
    %s133 = sphi 0, %s131
    %s134 = sphi 0, %s133
    %s148 = sphi 0, %s134
    %s152 = sphi 0, %s152
    %s154 = sphi 0, %s152
    %s155 = sphi 0, %s154
    %s169 = sphi 0, %s155
    %s175 = sphi 0, %s177
    %s178 = sphi 0, %s175
    %s179 = sphi 0, %s178
    %s195 = sphi 0, %s179
  $region4: #{basic_block_forward.1} parent=0 // loop_header_branch
    %16 = sbr.rel (%p14) target = $region8
  $region5: #{basic_block_forward.1} parent=0 // loop_body
    %s18 = ssub.s32 %s13, 1
    %s19 = ssub.s32 %s13, 2
    %s20 = sadd.s32 %s13, 1
    %s21 = ssub.s32 %s13, %s20
    %p22 = scmp.eq.s32.totalorder %s21, 0
    %s24 = sadd.s32 %s23, 1
    %s25 = scalar_select %p22, %s23, %s24
    %p28 = pneg %p22
    %p29 = scmp.eq.s32.totalorder %s13, 1
    %p30 = por %p28, %p29
    %p31 = scmp.ne.s32.totalorder %s23, %s26
    %p32 = scmp.eq.s32.totalorder %s13, 0
    %p33 = por %p31, %p32
    %p34 = scmp.ne.s32.totalorder %s23, %s26
    %p35 = scmp.eq.s32.totalorder %s18, 1
    %p36 = por %p34, %p35
    %p37 = scmp.ne.s32.totalorder %s26, %s27
    %p38 = scmp.eq.s32.totalorder %s18, 0
    %p39 = por %p37, %p38
    %p40 = scmp.ne.s32.totalorder %s26, %s27
    %p41 = scmp.eq.s32.totalorder %s19, 1
    %p42 = por %p40, %p41
    %p44 = scmp.ne.s32.totalorder %s27, %s43
    %p45 = scmp.eq.s32.totalorder %s19, 0
    %p46 = por %p44, %p45
    %s48 = sadd.s32 %s47, 1
    %p51 = scmp.eq.s32.totalorder %s13, 1
    %p52 = scmp.ne.s32.totalorder %s47, %s49
    %p53 = scmp.eq.s32.totalorder %s13, 0
    %p54 = por %p52, %p53
    %p55 = scmp.ne.s32.totalorder %s47, %s49
    %p56 = scmp.eq.s32.totalorder %s18, 1
    %p57 = por %p55, %p56
    %p58 = scmp.ne.s32.totalorder %s49, %s50
    %p59 = scmp.eq.s32.totalorder %s18, 0
    %p60 = por %p58, %p59
    %p61 = scmp.ne.s32.totalorder %s49, %s50
    %p62 = scmp.eq.s32.totalorder %s19, 1
    %p63 = por %p61, %p62
    %p65 = scmp.ne.s32.totalorder %s50, %s64
    %p66 = scmp.eq.s32.totalorder %s19, 0
    %p67 = por %p65, %p66
    %s69 = sadd.s32 %s68, 1
    %p72 = scmp.eq.s32.totalorder %s13, 1
    %p73 = scmp.ne.s32.totalorder %s68, %s70
    %p74 = scmp.eq.s32.totalorder %s13, 0
    %p75 = por %p73, %p74
    %p76 = scmp.ne.s32.totalorder %s68, %s70
    %p77 = scmp.eq.s32.totalorder %s18, 1
    %p78 = por %p76, %p77
    %p79 = scmp.ne.s32.totalorder %s70, %s71
    %p80 = scmp.eq.s32.totalorder %s18, 0
    %p81 = por %p79, %p80
    %p82 = scmp.ne.s32.totalorder %s70, %s71
    %p83 = scmp.eq.s32.totalorder %s19, 1
    %p84 = por %p82, %p83
    %p86 = scmp.ne.s32.totalorder %s71, %s85
    %p87 = scmp.eq.s32.totalorder %s19, 0
    %p88 = por %p86, %p87
    %s90 = sadd.s32 %s89, 1
    %p93 = scmp.eq.s32.totalorder %s13, 1
    %p94 = scmp.ne.s32.totalorder %s89, %s91
    %p95 = scmp.eq.s32.totalorder %s13, 0
    %p96 = por %p94, %p95
    %p97 = scmp.ne.s32.totalorder %s89, %s91
    %p98 = scmp.eq.s32.totalorder %s18, 1
    %p99 = por %p97, %p98
    %p100 = scmp.ne.s32.totalorder %s91, %s92
    %p101 = scmp.eq.s32.totalorder %s18, 0
    %p102 = por %p100, %p101
    %p103 = scmp.ne.s32.totalorder %s91, %s92
    %p104 = scmp.eq.s32.totalorder %s19, 1
    %p105 = por %p103, %p104
    %p107 = scmp.ne.s32.totalorder %s92, %s106
    %p108 = scmp.eq.s32.totalorder %s19, 0
    %p109 = por %p107, %p108
    %s111 = sadd.s32 %s110, 1
    %p114 = scmp.eq.s32.totalorder %s13, 1
    %p115 = scmp.ne.s32.totalorder %s110, %s112
    %p116 = scmp.eq.s32.totalorder %s13, 0
    %p117 = por %p115, %p116
    %p118 = scmp.ne.s32.totalorder %s110, %s112
    %p119 = scmp.eq.s32.totalorder %s18, 1
    %p120 = por %p118, %p119
    %p121 = scmp.ne.s32.totalorder %s112, %s113
    %p122 = scmp.eq.s32.totalorder %s18, 0
    %p123 = por %p121, %p122
    %p124 = scmp.ne.s32.totalorder %s112, %s113
    %p125 = scmp.eq.s32.totalorder %s19, 1
    %p126 = por %p124, %p125
    %p128 = scmp.ne.s32.totalorder %s113, %s127
    %p129 = scmp.eq.s32.totalorder %s19, 0
    %p130 = por %p128, %p129
    %s132 = sadd.s32 %s131, 1
    %p135 = scmp.eq.s32.totalorder %s13, 1
    %p136 = scmp.ne.s32.totalorder %s131, %s133
    %p137 = scmp.eq.s32.totalorder %s13, 0
    %p138 = por %p136, %p137
    %p139 = scmp.ne.s32.totalorder %s131, %s133
    %p140 = scmp.eq.s32.totalorder %s18, 1
    %p141 = por %p139, %p140
    %p142 = scmp.ne.s32.totalorder %s133, %s134
    %p143 = scmp.eq.s32.totalorder %s18, 0
    %p144 = por %p142, %p143
    %p145 = scmp.ne.s32.totalorder %s133, %s134
    %p146 = scmp.eq.s32.totalorder %s19, 1
    %p147 = por %p145, %p146
    %p149 = scmp.ne.s32.totalorder %s134, %s148
    %p150 = scmp.eq.s32.totalorder %s19, 0
    %p151 = por %p149, %p150
    %s153 = sadd.s32 %s152, 1
    %p156 = scmp.eq.s32.totalorder %s13, 1
    %p157 = scmp.ne.s32.totalorder %s152, %s154
    %p158 = scmp.eq.s32.totalorder %s13, 0
    %p159 = por %p157, %p158
    %p160 = scmp.ne.s32.totalorder %s152, %s154
    %p161 = scmp.eq.s32.totalorder %s18, 1
    %p162 = por %p160, %p161
    %p163 = scmp.ne.s32.totalorder %s154, %s155
    %p164 = scmp.eq.s32.totalorder %s18, 0
    %p165 = por %p163, %p164
    %p166 = scmp.ne.s32.totalorder %s154, %s155
    %p167 = scmp.eq.s32.totalorder %s19, 1
    %p168 = por %p166, %p167
    %p170 = scmp.ne.s32.totalorder %s155, %s169
    %p171 = scmp.eq.s32.totalorder %s19, 0
    %p172 = por %p170, %p171
    %s173 = ssub.s32 %s13, %s20
    %p174 = scmp.eq.s32.totalorder %s173, 0
    %s176 = sadd.s32 %s175, 1
    %s177 = scalar_select %p174, %s175, %s176
    %p180 = pneg %p174
    %p181 = scmp.eq.s32.totalorder %s13, 1
    %p182 = por %p180, %p181
    %p183 = scmp.ne.s32.totalorder %s175, %s178
    %p184 = scmp.eq.s32.totalorder %s13, 0
    %p185 = por %p183, %p184
    %p186 = scmp.ne.s32.totalorder %s175, %s178
    %p187 = scmp.eq.s32.totalorder %s18, 1
    %p188 = por %p186, %p187
    %p189 = scmp.ne.s32.totalorder %s178, %s179
    %p190 = scmp.eq.s32.totalorder %s18, 0
    %p191 = por %p189, %p190
    %p192 = scmp.ne.s32.totalorder %s178, %s179
    %p193 = scmp.eq.s32.totalorder %s19, 1
    %p194 = por %p192, %p193
    %p196 = scmp.ne.s32.totalorder %s179, %s195
    %p197 = scmp.eq.s32.totalorder %s19, 0
    %p198 = por %p196, %p197
    %p199 = scmp.le.s32.totalorder 1, %s13
    %p200 = scmp.lt.s32.totalorder %s13, 3
    %p201 = pnand %p199, %p200
    %p202 = pneg %p201
    // Predicated region
    $region9: #{basic_block_forward.1} parent=5 // pred_check
      _
    $region10: #{basic_block_forward.1} parent=5 // pred_check_branch
      %204 = sbr.rel (%p201) target = $region12
    $region11: #{basic_block_forward.1} parent=5 // pred_region
      %s205 = ssub.s32 %s13, 1
      // Predicated region
      $region13: #{basic_block_forward.1} parent=11 // pred_check
        %p206 = pneg %p60
      $region14: #{basic_block_forward.1} parent=11 // pred_check_branch
        %208 = sbr.rel (%p206) target = $region16
      $region15: #{basic_block_forward.1} parent=11 // pred_region
        _
      $region16: #{basic_block_forward.1} parent=11 // pred_fallthru
        _
      // Predicated region
      $region17: #{basic_block_forward.1} parent=11 // pred_check
        %p209 = pneg %p81
      $region18: #{basic_block_forward.1} parent=11 // pred_check_branch
        %211 = sbr.rel (%p209) target = $region20
      $region19: #{basic_block_forward.1} parent=11 // pred_region
        _
      $region20: #{basic_block_forward.1} parent=11 // pred_fallthru
        _
      // Predicated region
      $region21: #{basic_block_forward.1} parent=11 // pred_check
        %p212 = pneg %p102
      $region22: #{basic_block_forward.1} parent=11 // pred_check_branch
        %214 = sbr.rel (%p212) target = $region24
      $region23: #{basic_block_forward.1} parent=11 // pred_region
        _
      $region24: #{basic_block_forward.1} parent=11 // pred_fallthru
        _
      // Predicated region
      $region25: #{basic_block_forward.1} parent=11 // pred_check
        %p215 = pneg %p123
      $region26: #{basic_block_forward.1} parent=11 // pred_check_branch
        %217 = sbr.rel (%p215) target = $region28
      $region27: #{basic_block_forward.1} parent=11 // pred_region
        _
      $region28: #{basic_block_forward.1} parent=11 // pred_fallthru
        _
      // Predicated region
      $region29: #{basic_block_forward.1} parent=11 // pred_check
        %p218 = pneg %p144
      $region30: #{basic_block_forward.1} parent=11 // pred_check_branch
        %220 = sbr.rel (%p218) target = $region32
      $region31: #{basic_block_forward.1} parent=11 // pred_region
        _
      $region32: #{basic_block_forward.1} parent=11 // pred_fallthru
        _
      // Predicated region
      $region33: #{basic_block_forward.1} parent=11 // pred_check
        %p221 = pneg %p165
      $region34: #{basic_block_forward.1} parent=11 // pred_check_branch
        %223 = sbr.rel (%p221) target = $region36
      $region35: #{basic_block_forward.1} parent=11 // pred_region
        _
      $region36: #{basic_block_forward.1} parent=11 // pred_fallthru
        _
    $region12: #{basic_block_forward.1} parent=5 // pred_fallthru
      _
    %p224 = scmp.lt.s32.totalorder %s13, 2
    // Predicated region
    $region37: #{basic_block_forward.1} parent=5 // pred_check
      %p225 = pneg %p224
    $region38: #{basic_block_forward.1} parent=5 // pred_check_branch
      %227 = sbr.rel (%p225) target = $region40
    $region39: #{basic_block_forward.1} parent=5 // pred_region
      // Predicated region
      $region41: #{basic_block_forward.1} parent=39 // pred_check
        %p228 = pneg %p33
      $region42: #{basic_block_forward.1} parent=39 // pred_check_branch
        %230 = sbr.rel (%p228) target = $region44
      $region43: #{basic_block_forward.1} parent=39 // pred_region
        %p231 = scmp.lt.s32.totalorder %s13, 1
        %s232 = scalar_select %p231, %s13, 1
        %s233 = smul.addr %s232, 80
        %s234 = smul.addr %s233, 4
        %s235 = scalar_lea.vmem %s0, %s234
      $region44: #{basic_block_forward.1} parent=39 // pred_fallthru
        _
    $region40: #{basic_block_forward.1} parent=5 // pred_fallthru
      _
    %p236 = scmp.le.s32.totalorder 1, %s13
    %p237 = scmp.lt.s32.totalorder %s13, 3
    %p238 = pnand %p236, %p237
    %p239 = pneg %p238
    // Predicated region
    $region45: #{basic_block_forward.1} parent=5 // pred_check
      _
    $region46: #{basic_block_forward.1} parent=5 // pred_check_branch
      %241 = sbr.rel (%p238) target = $region48
    $region47: #{basic_block_forward.1} parent=5 // pred_region
      %s242 = ssub.s32 %s13, 1
      %p243 = scmp.lt.s32.totalorder %s18, 1
      %s244 = scalar_select %p243, %s18, 1
      %s245 = smul.addr %s244, 80
      %s246 = smul.addr %s245, 4
      %s247 = scalar_lea.vmem %s0, %s246
      %p248 = pneg %p39
      %p249 = pneg %p36
      %p250 = pneg %p60
      %p251 = pneg %p57
      %p252 = pneg %p81
      %p253 = pneg %p78
      %p254 = pneg %p102
      %p255 = pneg %p99
      %p256 = pneg %p123
      %p257 = pneg %p120
      %p258 = pneg %p144
      %p259 = pneg %p141
      %p260 = pneg %p165
      %p261 = pneg %p162
      %p262 = pneg %p191
      %p263 = pneg %p188
      %p264 = scmp.lt.s32.totalorder %s18, 1
      %s265 = scalar_select %p264, %s18, 1
      %s266 = smul.addr %s265, 8
      %s267 = smul.addr %s266, 8
      %s268 = scalar_lea.vmem %s7, %s267
      %p269 = scmp.lt.s32.totalorder %s18, 1
      %s270 = scalar_select %p269, %s18, 1
      %s271 = smul.addr %s270, 80
      %s272 = smul.addr %s271, 4
      %s273 = scalar_lea.vmem %s0, %s272
      %p274 = scmp.lt.s32.totalorder %s18, 1
      %s275 = scalar_select %p274, %s18, 1
      %s276 = smul.addr %s275, 8
      %s277 = smul.addr %s276, 8
      %s278 = scalar_lea.vmem %s7, %s277
      %v280 = vld [vmem:[%s2] sm:$0x1]
      %v282 = vlaneseq
      %v283 = vshrl.u32 %v282, 7
      %v284 = vsub.s32 0, %v283
      %v285 = vrot.slane %v280, %v284
      %v287 = vld [vmem:[%s273] sm:$0xf]
      %v288 = vld [vmem:[%s273 + $0x4] sm:$0xf]
      %v289 = vld [vmem:[%s273 + $0x8] sm:$0xf]
      %v290 = vld [vmem:[%s273 + $0xc] sm:$0xf]
      %v291 = vld [vmem:[%s273 + $0x10] sm:$0xf]
      %v292 = vld [vmem:[%s273 + $0x14] sm:$0xf]
      %v293 = vld [vmem:[%s273 + $0x18] sm:$0xf]
      %v294 = vld [vmem:[%s273 + $0x1c] sm:$0xf]
      %v295 = vld [vmem:[%s273 + $0x20] sm:$0xf]
      %v296 = vld [vmem:[%s273 + $0x24] sm:$0xf]
      %v297 = vld [vmem:[%s273 + $0x28] sm:$0xf]
      %v298 = vld [vmem:[%s273 + $0x2c] sm:$0xf]
      %v299 = vld [vmem:[%s273 + $0x30] sm:$0xf]
      %v300 = vld [vmem:[%s273 + $0x34] sm:$0xf]
      %v301 = vld [vmem:[%s273 + $0x38] sm:$0xf]
      %v302 = vld [vmem:[%s273 + $0x3c] sm:$0xf]
      %v303 = vld [vmem:[%s1] sm:$0xf]
      %v304 = vld [vmem:[%s1 + $0x4] sm:$0xf]
      %v305 = vld [vmem:[%s1 + $0x8] sm:$0xf]
      %v306 = vld [vmem:[%s1 + $0xc] sm:$0xf]
      %v307 = vld [vmem:[%s1 + $0x10] sm:$0xf]
      %v308 = vld [vmem:[%s1 + $0x14] sm:$0xf]
      %v309 = vld [vmem:[%s1 + $0x18] sm:$0xf]
      %v310 = vld [vmem:[%s1 + $0x1c] sm:$0xf]
      %v311 = vld [vmem:[%s1 + $0x20] sm:$0xf]
      %v312 = vld [vmem:[%s1 + $0x24] sm:$0xf]
      %v313 = vld [vmem:[%s1 + $0x28] sm:$0xf]
      %v314 = vld [vmem:[%s1 + $0x2c] sm:$0xf]
      %v315 = vld [vmem:[%s1 + $0x30] sm:$0xf]
      %v316 = vld [vmem:[%s1 + $0x34] sm:$0xf]
      %v317 = vld [vmem:[%s1 + $0x38] sm:$0xf]
      %v318 = vld [vmem:[%s1 + $0x3c] sm:$0xf]
      %v335 = vunpack.c.l.b16 %v287
      %v336 = vunpack.c.l.b16 %v288
      %v337 = vunpack.c.l.b16 %v289
      %v338 = vunpack.c.l.b16 %v290
      %v339 = vunpack.c.l.b16 %v291
      %v340 = vunpack.c.l.b16 %v292
      %v341 = vunpack.c.l.b16 %v293
      %v342 = vunpack.c.l.b16 %v294
      %v343 = vunpack.c.l.b16 %v295
      %v344 = vunpack.c.l.b16 %v296
      %v345 = vunpack.c.l.b16 %v297
      %v346 = vunpack.c.l.b16 %v298
      %v347 = vunpack.c.l.b16 %v299
      %v348 = vunpack.c.l.b16 %v300
      %v349 = vunpack.c.l.b16 %v301
      %v350 = vunpack.c.l.b16 %v302
      %v351 = vpack.c.b16 %v336, %v335
      %v352 = vpack.c.b16 %v338, %v337
      %v353 = vpack.c.b16 %v340, %v339
      %v354 = vpack.c.b16 %v342, %v341
      %v355 = vpack.c.b16 %v344, %v343
      %v356 = vpack.c.b16 %v346, %v345
      %v357 = vpack.c.b16 %v348, %v347
      %v358 = vpack.c.b16 %v350, %v349
      %v383 = vunpack.c.l.b16 %v303
      %v384 = vunpack.c.l.b16 %v304
      %v385 = vunpack.c.l.b16 %v305
      %v386 = vunpack.c.l.b16 %v306
      %v387 = vunpack.c.l.b16 %v307
      %v388 = vunpack.c.l.b16 %v308
      %v389 = vunpack.c.l.b16 %v309
      %v390 = vunpack.c.l.b16 %v310
      %v391 = vunpack.c.l.b16 %v311
      %v392 = vunpack.c.l.b16 %v312
      %v393 = vunpack.c.l.b16 %v313
      %v394 = vunpack.c.l.b16 %v314
      %v395 = vunpack.c.l.b16 %v315
      %v396 = vunpack.c.l.b16 %v316
      %v397 = vunpack.c.l.b16 %v317
      %v398 = vunpack.c.l.b16 %v318
      %v399 = vpack.c.b16 %v384, %v383
      %v400 = vpack.c.b16 %v386, %v385
      %v401 = vpack.c.b16 %v388, %v387
      %v402 = vpack.c.b16 %v390, %v389
      %v403 = vpack.c.b16 %v392, %v391
      %v404 = vpack.c.b16 %v394, %v393
      %v405 = vpack.c.b16 %v396, %v395
      %v406 = vpack.c.b16 %v398, %v397
      %415 = vmatprep.subr.bf16.mxu0 0
      %416 = vmatpush1.bf16.msra.mxu0 %v399
      %417 = vmatprep.subr.bf16.mxu0 0
      %418 = vmatpush1.bf16.msra.mxu0 %v400
      %419 = vmatprep.subr.bf16.mxu0 0
      %420 = vmatpush1.bf16.msra.mxu0 %v401
      %421 = vmatprep.subr.bf16.mxu0 0
      %422 = vmatpush1.bf16.msra.mxu0 %v402
      %423 = vmatprep.subr.bf16.mxu0 0
      %424 = vmatpush1.bf16.msra.mxu0 %v403
      %425 = vmatprep.subr.bf16.mxu0 0
      %426 = vmatpush1.bf16.msra.mxu0 %v404
      %427 = vmatprep.subr.bf16.mxu0 0
      %428 = vmatpush1.bf16.msra.mxu0 %v405
      %429 = vmatprep.subr.bf16.mxu0 0
      %430 = vmatpush1.bf16.msra.mxu0 %v406
      %431 = vmatprep.subr.bf16.mxu0 0
      %432 = vmatpush1.bf16.msra.mxu0 0
      %433 = vmatprep.subr.bf16.mxu0 0
      %434 = vmatpush1.bf16.msra.mxu0 0
      %435 = vmatprep.subr.bf16.mxu0 0
      %436 = vmatpush1.bf16.msra.mxu0 0
      %437 = vmatprep.subr.bf16.mxu0 0
      %438 = vmatpush1.bf16.msra.mxu0 0
      %439 = vmatprep.subr.bf16.mxu0 0
      %440 = vmatpush1.bf16.msra.mxu0 0
      %441 = vmatprep.subr.bf16.mxu0 0
      %442 = vmatpush1.bf16.msra.mxu0 0
      %443 = vmatprep.subr.bf16.mxu0 0
      %444 = vmatpush1.bf16.msra.mxu0 0
      %445 = vmatprep.subr.bf16.mxu0 0
      %446 = vmatpush1.bf16.msra.mxu0 0
      %447 = vmatprep.mubr.bf16.mxu0 0
      %448 = vmatmul.mubr.bf16.gmra.mrb[0].mxu0 %v351
      %v449 = vpop.f32.mrb[0].mxu0
      %v450 = vadd.f32 0.0, %v449
      %v451 = vpop.f32.mrb[0].mxu0
      %v452 = vpop.f32.mrb[0].mxu0
      %v453 = vadd.f32 0.0, %v452
      %v454 = vpop.f32.mrb[0].mxu0
      %455 = vmatprep.mubr.bf16.mxu0 0
      %456 = vmatmul.mubr.bf16.gmra.mrb[0].mxu0 %v352
      %v457 = vpop.f32.mrb[0].mxu0
      %v458 = vadd.f32 0.0, %v457
      %v459 = vpop.f32.mrb[0].mxu0
      %v460 = vpop.f32.mrb[0].mxu0
      %v461 = vadd.f32 0.0, %v460
      %v462 = vpop.f32.mrb[0].mxu0
      %463 = vmatprep.mubr.bf16.mxu0 0
      %464 = vmatmul.mubr.bf16.gmra.mrb[0].mxu0 %v353
      %v465 = vpop.f32.mrb[0].mxu0
      %v466 = vadd.f32 0.0, %v465
      %v467 = vpop.f32.mrb[0].mxu0
      %v468 = vpop.f32.mrb[0].mxu0
      %v469 = vadd.f32 0.0, %v468
      %v470 = vpop.f32.mrb[0].mxu0
      %471 = vmatprep.mubr.bf16.mxu0 0
      %472 = vmatmul.mubr.bf16.gmra.mrb[0].mxu0 %v354
      %v473 = vpop.f32.mrb[0].mxu0
      %v474 = vadd.f32 0.0, %v473
      %v475 = vpop.f32.mrb[0].mxu0
      %v476 = vpop.f32.mrb[0].mxu0
      %v477 = vadd.f32 0.0, %v476
      %v478 = vpop.f32.mrb[0].mxu0
      %479 = vmatprep.mubr.bf16.mxu0 0
      %480 = vmatmul.mubr.bf16.gmra.mrb[0].mxu0 %v355
      %v481 = vpop.f32.mrb[0].mxu0
      %v482 = vadd.f32 0.0, %v481
      %v483 = vpop.f32.mrb[0].mxu0
      %v484 = vpop.f32.mrb[0].mxu0
      %v485 = vadd.f32 0.0, %v484
      %v486 = vpop.f32.mrb[0].mxu0
      %487 = vmatprep.mubr.bf16.mxu0 0
      %488 = vmatmul.mubr.bf16.gmra.mrb[0].mxu0 %v356
      %v489 = vpop.f32.mrb[0].mxu0
      %v490 = vadd.f32 0.0, %v489
      %v491 = vpop.f32.mrb[0].mxu0
      %v492 = vpop.f32.mrb[0].mxu0
      %v493 = vadd.f32 0.0, %v492
      %v494 = vpop.f32.mrb[0].mxu0
      %495 = vmatprep.mubr.bf16.mxu0 0
      %496 = vmatmul.mubr.bf16.gmra.mrb[0].mxu0 %v357
      %v497 = vpop.f32.mrb[0].mxu0
      %v498 = vadd.f32 0.0, %v497
      %v499 = vpop.f32.mrb[0].mxu0
      %v500 = vpop.f32.mrb[0].mxu0
      %v501 = vadd.f32 0.0, %v500
      %v502 = vpop.f32.mrb[0].mxu0
      %503 = vmatprep.mubr.bf16.mxu0 0
      %504 = vmatmul.mubr.bf16.gmra.mrb[0].mxu0 %v358
      %v505 = vpop.f32.mrb[0].mxu0
      %v506 = vadd.f32 0.0, %v505
      %v507 = vpop.f32.mrb[0].mxu0
      %v508 = vpop.f32.mrb[0].mxu0
      %v509 = vadd.f32 0.0, %v508
      %v510 = vpop.f32.mrb[0].mxu0
      %511 = vdwg.mxu0
      %v512 = vadd.f32 %v285, %v450
      %v513 = vadd.f32 %v285, %v453
      %v514 = vadd.f32 %v285, %v458
      %v515 = vadd.f32 %v285, %v461
      %v516 = vadd.f32 %v285, %v466
      %v517 = vadd.f32 %v285, %v469
      %v518 = vadd.f32 %v285, %v474
      %v519 = vadd.f32 %v285, %v477
      %v520 = vadd.f32 %v285, %v482
      %v521 = vadd.f32 %v285, %v485
      %v522 = vadd.f32 %v285, %v490
      %v523 = vadd.f32 %v285, %v493
      %v524 = vadd.f32 %v285, %v498
      %v525 = vadd.f32 %v285, %v501
      %v526 = vadd.f32 %v285, %v506
      %v527 = vadd.f32 %v285, %v509
      %s528 = scalar_lea.vmem %s273, 80
      %v529 = vld [vmem:[%s528] sm:$0xf]
      %v530 = vld [vmem:[%s528 + $0x4] sm:$0xf]
      %v531 = vld [vmem:[%s528 + $0x8] sm:$0xf]
      %v532 = vld [vmem:[%s528 + $0xc] sm:$0xf]
      %v533 = vld [vmem:[%s528 + $0x10] sm:$0xf]
      %v534 = vld [vmem:[%s528 + $0x14] sm:$0xf]
      %v535 = vld [vmem:[%s528 + $0x18] sm:$0xf]
      %v536 = vld [vmem:[%s528 + $0x1c] sm:$0xf]
      %v537 = vld [vmem:[%s528 + $0x20] sm:$0xf]
      %v538 = vld [vmem:[%s528 + $0x24] sm:$0xf]
      %v539 = vld [vmem:[%s528 + $0x28] sm:$0xf]
      %v540 = vld [vmem:[%s528 + $0x2c] sm:$0xf]
      %v541 = vld [vmem:[%s528 + $0x30] sm:$0xf]
      %v542 = vld [vmem:[%s528 + $0x34] sm:$0xf]
      %v543 = vld [vmem:[%s528 + $0x38] sm:$0xf]
      %v544 = vld [vmem:[%s528 + $0x3c] sm:$0xf]
      %s545 = scalar_lea.vmem %s1, 64
      %v546 = vld [vmem:[%s545] sm:$0xf]
      %v547 = vld [vmem:[%s545 + $0x4] sm:$0xf]
      %v548 = vld [vmem:[%s545 + $0x8] sm:$0xf]
      %v549 = vld [vmem:[%s545 + $0xc] sm:$0xf]
      %v550 = vld [vmem:[%s545 + $0x10] sm:$0xf]
      %v551 = vld [vmem:[%s545 + $0x14] sm:$0xf]
      %v552 = vld [vmem:[%s545 + $0x18] sm:$0xf]
      %v553 = vld [vmem:[%s545 + $0x1c] sm:$0xf]
      %v554 = vld [vmem:[%s545 + $0x20] sm:$0xf]
      %v555 = vld [vmem:[%s545 + $0x24] sm:$0xf]
      %v556 = vld [vmem:[%s545 + $0x28] sm:$0xf]
      %v557 = vld [vmem:[%s545 + $0x2c] sm:$0xf]
      %v558 = vld [vmem:[%s545 + $0x30] sm:$0xf]
      %v559 = vld [vmem:[%s545 + $0x34] sm:$0xf]
      %v560 = vld [vmem:[%s545 + $0x38] sm:$0xf]
      %v561 = vld [vmem:[%s545 + $0x3c] sm:$0xf]
      %v578 = vunpack.c.l.b16 %v529
      %v579 = vunpack.c.l.b16 %v530
      %v580 = vunpack.c.l.b16 %v531
      %v581 = vunpack.c.l.b16 %v532
      %v582 = vunpack.c.l.b16 %v533
      %v583 = vunpack.c.l.b16 %v534
      %v584 = vunpack.c.l.b16 %v535
      %v585 = vunpack.c.l.b16 %v536
      %v586 = vunpack.c.l.b16 %v537
      %v587 = vunpack.c.l.b16 %v538
      %v588 = vunpack.c.l.b16 %v539
      %v589 = vunpack.c.l.b16 %v540
      %v590 = vunpack.c.l.b16 %v541
      %v591 = vunpack.c.l.b16 %v542
      %v592 = vunpack.c.l.b16 %v543
      %v593 = vunpack.c.l.b16 %v544
      %v594 = vpack.c.b16 %v579, %v578
      %v595 = vpack.c.b16 %v581, %v580
      %v596 = vpack.c.b16 %v583, %v582
      %v597 = vpack.c.b16 %v585, %v584
      %v598 = vpack.c.b16 %v587, %v586
      %v599 = vpack.c.b16 %v589, %v588
      %v600 = vpack.c.b16 %v591, %v590
      %v601 = vpack.c.b16 %v593, %v592
      %v626 = vunpack.c.l.b16 %v546
      %v627 = vunpack.c.l.b16 %v547
      %v628 = vunpack.c.l.b16 %v548
      %v629 = vunpack.c.l.b16 %v549
      %v630 = vunpack.c.l.b16 %v550
      %v631 = vunpack.c.l.b16 %v551
      %v632 = vunpack.c.l.b16 %v552
      %v633 = vunpack.c.l.b16 %v553
      %v634 = vunpack.c.l.b16 %v554
      %v635 = vunpack.c.l.b16 %v555
      %v636 = vunpack.c.l.b16 %v556
      %v637 = vunpack.c.l.b16 %v557
      %v638 = vunpack.c.l.b16 %v558
      %v639 = vunpack.c.l.b16 %v559
      %v640 = vunpack.c.l.b16 %v560
      %v641 = vunpack.c.l.b16 %v561
      %v642 = vpack.c.b16 %v627, %v626
      %v643 = vpack.c.b16 %v629, %v628
      %v644 = vpack.c.b16 %v631, %v630
      %v645 = vpack.c.b16 %v633, %v632
      %v646 = vpack.c.b16 %v635, %v634
      %v647 = vpack.c.b16 %v637, %v636
      %v648 = vpack.c.b16 %v639, %v638
      %v649 = vpack.c.b16 %v641, %v640
      %658 = vmatprep.subr.bf16.mxu0 0
      %659 = vmatpush1.bf16.msra.mxu0 %v642
      %660 = vmatprep.subr.bf16.mxu0 0
      %661 = vmatpush1.bf16.msra.mxu0 %v643
      %662 = vmatprep.subr.bf16.mxu0 0
      %663 = vmatpush1.bf16.msra.mxu0 %v644
      %664 = vmatprep.subr.bf16.mxu0 0
      %665 = vmatpush1.bf16.msra.mxu0 %v645
      %666 = vmatprep.subr.bf16.mxu0 0
      %667 = vmatpush1.bf16.msra.mxu0 %v646
      %668 = vmatprep.subr.bf16.mxu0 0
      %669 = vmatpush1.bf16.msra.mxu0 %v647
      %670 = vmatprep.subr.bf16.mxu0 0
      %671 = vmatpush1.bf16.msra.mxu0 %v648
      %672 = vmatprep.subr.bf16.mxu0 0
      %673 = vmatpush1.bf16.msra.mxu0 %v649
      %674 = vmatprep.subr.bf16.mxu0 0
      %675 = vmatpush1.bf16.msra.mxu0 0
      %676 = vmatprep.subr.bf16.mxu0 0
      %677 = vmatpush1.bf16.msra.mxu0 0
      %678 = vmatprep.subr.bf16.mxu0 0
      %679 = vmatpush1.bf16.msra.mxu0 0
      %680 = vmatprep.subr.bf16.mxu0 0
      %681 = vmatpush1.bf16.msra.mxu0 0
      %682 = vmatprep.subr.bf16.mxu0 0
      %683 = vmatpush1.bf16.msra.mxu0 0
      %684 = vmatprep.subr.bf16.mxu0 0
      %685 = vmatpush1.bf16.msra.mxu0 0
      %686 = vmatprep.subr.bf16.mxu0 0
      %687 = vmatpush1.bf16.msra.mxu0 0
      %688 = vmatprep.subr.bf16.mxu0 0
      %689 = vmatpush1.bf16.msra.mxu0 0
      %690 = vmatprep.mubr.bf16.mxu0 0
      %691 = vmatmul.mubr.bf16.gmra.mrb[0].mxu0 %v594
      %v692 = vpop.f32.mrb[0].mxu0
      %v693 = vadd.f32 0.0, %v692
      %v694 = vpop.f32.mrb[0].mxu0
      %v695 = vpop.f32.mrb[0].mxu0
      %v696 = vadd.f32 0.0, %v695
      %v697 = vpop.f32.mrb[0].mxu0
      %698 = vmatprep.mubr.bf16.mxu0 0
      %699 = vmatmul.mubr.bf16.gmra.mrb[0].mxu0 %v595
      %v700 = vpop.f32.mrb[0].mxu0
      %v701 = vadd.f32 0.0, %v700
      %v702 = vpop.f32.mrb[0].mxu0
      %v703 = vpop.f32.mrb[0].mxu0
      %v704 = vadd.f32 0.0, %v703
      %v705 = vpop.f32.mrb[0].mxu0
      %706 = vmatprep.mubr.bf16.mxu0 0
      %707 = vmatmul.mubr.bf16.gmra.mrb[0].mxu0 %v596
      %v708 = vpop.f32.mrb[0].mxu0
      %v709 = vadd.f32 0.0, %v708
      %v710 = vpop.f32.mrb[0].mxu0
      %v711 = vpop.f32.mrb[0].mxu0
      %v712 = vadd.f32 0.0, %v711
      %v713 = vpop.f32.mrb[0].mxu0
      %714 = vmatprep.mubr.bf16.mxu0 0
      %715 = vmatmul.mubr.bf16.gmra.mrb[0].mxu0 %v597
      %v716 = vpop.f32.mrb[0].mxu0
      %v717 = vadd.f32 0.0, %v716
      %v718 = vpop.f32.mrb[0].mxu0
      %v719 = vpop.f32.mrb[0].mxu0
      %v720 = vadd.f32 0.0, %v719
      %v721 = vpop.f32.mrb[0].mxu0
      %722 = vmatprep.mubr.bf16.mxu0 0
      %723 = vmatmul.mubr.bf16.gmra.mrb[0].mxu0 %v598
      %v724 = vpop.f32.mrb[0].mxu0
      %v725 = vadd.f32 0.0, %v724
      %v726 = vpop.f32.mrb[0].mxu0
      %v727 = vpop.f32.mrb[0].mxu0
      %v728 = vadd.f32 0.0, %v727
      %v729 = vpop.f32.mrb[0].mxu0
      %730 = vmatprep.mubr.bf16.mxu0 0
      %731 = vmatmul.mubr.bf16.gmra.mrb[0].mxu0 %v599
      %v732 = vpop.f32.mrb[0].mxu0
      %v733 = vadd.f32 0.0, %v732
      %v734 = vpop.f32.mrb[0].mxu0
      %v735 = vpop.f32.mrb[0].mxu0
      %v736 = vadd.f32 0.0, %v735
      %v737 = vpop.f32.mrb[0].mxu0
      %738 = vmatprep.mubr.bf16.mxu0 0
      %739 = vmatmul.mubr.bf16.gmra.mrb[0].mxu0 %v600
      %v740 = vpop.f32.mrb[0].mxu0
      %v741 = vadd.f32 0.0, %v740
      %v742 = vpop.f32.mrb[0].mxu0
      %v743 = vpop.f32.mrb[0].mxu0
      %v744 = vadd.f32 0.0, %v743
      %v745 = vpop.f32.mrb[0].mxu0
      %746 = vmatprep.mubr.bf16.mxu0 0
      %747 = vmatmul.mubr.bf16.gmra.mrb[0].mxu0 %v601
      %v748 = vpop.f32.mrb[0].mxu0
      %v749 = vadd.f32 0.0, %v748
      %v750 = vpop.f32.mrb[0].mxu0
      %v751 = vpop.f32.mrb[0].mxu0
      %v752 = vadd.f32 0.0, %v751
      %v753 = vpop.f32.mrb[0].mxu0
      %754 = vdwg.mxu0
      %v755 = vadd.f32 %v512, %v693
      %v756 = vadd.f32 %v513, %v696
      %v757 = vadd.f32 %v514, %v701
      %v758 = vadd.f32 %v515, %v704
      %v759 = vadd.f32 %v516, %v709
      %v760 = vadd.f32 %v517, %v712
      %v761 = vadd.f32 %v518, %v717
      %v762 = vadd.f32 %v519, %v720
      %v763 = vadd.f32 %v520, %v725
      %v764 = vadd.f32 %v521, %v728
      %v765 = vadd.f32 %v522, %v733
      %v766 = vadd.f32 %v523, %v736
      %v767 = vadd.f32 %v524, %v741
      %v768 = vadd.f32 %v525, %v744
      %v769 = vadd.f32 %v526, %v749
      %v770 = vadd.f32 %v527, %v752
      %v771 = vld [vmem:[%s273] sm:$0xf]
      %v772 = vld [vmem:[%s273 + $0x4] sm:$0xf]
      %v773 = vld [vmem:[%s273 + $0x8] sm:$0xf]
      %v774 = vld [vmem:[%s273 + $0xc] sm:$0xf]
      %v775 = vld [vmem:[%s273 + $0x10] sm:$0xf]
      %v776 = vld [vmem:[%s273 + $0x14] sm:$0xf]
      %v777 = vld [vmem:[%s273 + $0x18] sm:$0xf]
      %v778 = vld [vmem:[%s273 + $0x1c] sm:$0xf]
      %v779 = vld [vmem:[%s273 + $0x20] sm:$0xf]
      %v780 = vld [vmem:[%s273 + $0x24] sm:$0xf]
      %v781 = vld [vmem:[%s273 + $0x28] sm:$0xf]
      %v782 = vld [vmem:[%s273 + $0x2c] sm:$0xf]
      %v783 = vld [vmem:[%s273 + $0x30] sm:$0xf]
      %v784 = vld [vmem:[%s273 + $0x34] sm:$0xf]
      %v785 = vld [vmem:[%s273 + $0x38] sm:$0xf]
      %v786 = vld [vmem:[%s273 + $0x3c] sm:$0xf]
      %v787 = vld [vmem:[%s273 + $0x40] sm:$0x1]
      %s788 = scalar_lea.vmem %s1, 128
      %v789 = vld [vmem:[%s788] sm:$0xf]
      %v790 = vld [vmem:[%s788 + $0x4] sm:$0xf]
      %v791 = vld [vmem:[%s788 + $0x8] sm:$0xf]
      %v792 = vld [vmem:[%s788 + $0xc] sm:$0xf]
      %v793 = vld [vmem:[%s788 + $0x10] sm:$0xf]
      %v794 = vld [vmem:[%s788 + $0x14] sm:$0xf]
      %v795 = vld [vmem:[%s788 + $0x18] sm:$0xf]
      %v796 = vld [vmem:[%s788 + $0x1c] sm:$0xf]
      %v797 = vld [vmem:[%s788 + $0x20] sm:$0xf]
      %v798 = vld [vmem:[%s788 + $0x24] sm:$0xf]
      %v799 = vld [vmem:[%s788 + $0x28] sm:$0xf]
      %v800 = vld [vmem:[%s788 + $0x2c] sm:$0xf]
      %v801 = vld [vmem:[%s788 + $0x30] sm:$0xf]
      %v802 = vld [vmem:[%s788 + $0x34] sm:$0xf]
      %v803 = vld [vmem:[%s788 + $0x38] sm:$0xf]
      %v804 = vld [vmem:[%s788 + $0x3c] sm:$0xf]
      %v822 = vunpack.c.l.b16 %v771
      %v823 = vunpack.c.l.b16 %v772
      %v824 = vunpack.c.l.b16 %v773
      %v825 = vunpack.c.l.b16 %v774
      %v826 = vunpack.c.l.b16 %v775
      %v827 = vunpack.c.l.b16 %v776
      %v828 = vunpack.c.l.b16 %v777
      %v829 = vunpack.c.l.b16 %v778
      %v830 = vunpack.c.l.b16 %v779
      %v831 = vunpack.c.l.b16 %v780
      %v832 = vunpack.c.l.b16 %v781
      %v833 = vunpack.c.l.b16 %v782
      %v834 = vunpack.c.l.b16 %v783
      %v835 = vunpack.c.l.b16 %v784
      %v836 = vunpack.c.l.b16 %v785
      %v837 = vunpack.c.l.b16 %v786
      %v838 = vunpack.c.l.b16 %v787
      %v839 = vpack.c.b16 %v823, %v822
      %v840 = vpack.c.b16 %v825, %v824
      %v841 = vpack.c.b16 %v827, %v826
      %v842 = vpack.c.b16 %v829, %v828
      %v843 = vpack.c.b16 %v831, %v830
      %v844 = vpack.c.b16 %v833, %v832
      %v845 = vpack.c.b16 %v835, %v834
      %v846 = vpack.c.b16 %v837, %v836
      %v847 = vpack.c.b16 %v838, %v838
      %vm848 = vsmask.f32 7424
      %v850 = vshrl.u32 %v839, 16
      %v852 = vshll.u32 %v839, 16
      %v854 = vrot.slane %v852, 1
      %v855 = vor.u32 %v850, %v854
      %v857 = vshll.u32 %v840, 16
      %v859 = vrot.slane %v857, 1
      %v860 = vsel %vm848, %v855, %v859
      %v861 = vshrl.u32 %v840, 16
      %v863 = vor.u32 %v861, %v859
      %v865 = vshll.u32 %v841, 16
      %v867 = vrot.slane %v865, 1
      %v868 = vsel %vm848, %v863, %v867
      %v869 = vshrl.u32 %v841, 16
      %v871 = vor.u32 %v869, %v867
      %v873 = vshll.u32 %v842, 16
      %v875 = vrot.slane %v873, 1
      %v876 = vsel %vm848, %v871, %v875
      %v877 = vshrl.u32 %v842, 16
      %v879 = vor.u32 %v877, %v875
      %v881 = vshll.u32 %v843, 16
      %v883 = vrot.slane %v881, 1
      %v884 = vsel %vm848, %v879, %v883
      %v885 = vshrl.u32 %v843, 16
      %v887 = vor.u32 %v885, %v883
      %v889 = vshll.u32 %v844, 16
      %v891 = vrot.slane %v889, 1
      %v892 = vsel %vm848, %v887, %v891
      %v893 = vshrl.u32 %v844, 16
      %v895 = vor.u32 %v893, %v891
      %v897 = vshll.u32 %v845, 16
      %v899 = vrot.slane %v897, 1
      %v900 = vsel %vm848, %v895, %v899
      %v901 = vshrl.u32 %v845, 16
      %v903 = vor.u32 %v901, %v899
      %v905 = vshll.u32 %v846, 16
      %v907 = vrot.slane %v905, 1
      %v908 = vsel %vm848, %v903, %v907
      %v909 = vshrl.u32 %v846, 16
      %v911 = vor.u32 %v909, %v907
      %v913 = vshll.u32 %v847, 16
      %v915 = vrot.slane %v913, 1
      %v916 = vsel %vm848, %v911, %v915
      %v941 = vunpack.c.l.b16 %v789
      %v942 = vunpack.c.l.b16 %v790
      %v943 = vunpack.c.l.b16 %v791
      %v944 = vunpack.c.l.b16 %v792
      %v945 = vunpack.c.l.b16 %v793
      %v946 = vunpack.c.l.b16 %v794
      %v947 = vunpack.c.l.b16 %v795
      %v948 = vunpack.c.l.b16 %v796
      %v949 = vunpack.c.l.b16 %v797
      %v950 = vunpack.c.l.b16 %v798
      %v951 = vunpack.c.l.b16 %v799
      %v952 = vunpack.c.l.b16 %v800
      %v953 = vunpack.c.l.b16 %v801
      %v954 = vunpack.c.l.b16 %v802
      %v955 = vunpack.c.l.b16 %v803
      %v956 = vunpack.c.l.b16 %v804
      %v957 = vpack.c.b16 %v942, %v941
      %v958 = vpack.c.b16 %v944, %v943
      %v959 = vpack.c.b16 %v946, %v945
      %v960 = vpack.c.b16 %v948, %v947
      %v961 = vpack.c.b16 %v950, %v949
      %v962 = vpack.c.b16 %v952, %v951
      %v963 = vpack.c.b16 %v954, %v953
      %v964 = vpack.c.b16 %v956, %v955
      %973 = vmatprep.subr.bf16.mxu0 0
      %974 = vmatpush1.bf16.msra.mxu0 %v957
      %975 = vmatprep.subr.bf16.mxu0 0
      %976 = vmatpush1.bf16.msra.mxu0 %v958
      %977 = vmatprep.subr.bf16.mxu0 0
      %978 = vmatpush1.bf16.msra.mxu0 %v959
      %979 = vmatprep.subr.bf16.mxu0 0
      %980 = vmatpush1.bf16.msra.mxu0 %v960
      %981 = vmatprep.subr.bf16.mxu0 0
      %982 = vmatpush1.bf16.msra.mxu0 %v961
      %983 = vmatprep.subr.bf16.mxu0 0
      %984 = vmatpush1.bf16.msra.mxu0 %v962
      %985 = vmatprep.subr.bf16.mxu0 0
      %986 = vmatpush1.bf16.msra.mxu0 %v963
      %987 = vmatprep.subr.bf16.mxu0 0
      %988 = vmatpush1.bf16.msra.mxu0 %v964
      %989 = vmatprep.subr.bf16.mxu0 0
      %990 = vmatpush1.bf16.msra.mxu0 0
      %991 = vmatprep.subr.bf16.mxu0 0
      %992 = vmatpush1.bf16.msra.mxu0 0
      %993 = vmatprep.subr.bf16.mxu0 0
      %994 = vmatpush1.bf16.msra.mxu0 0
      %995 = vmatprep.subr.bf16.mxu0 0
      %996 = vmatpush1.bf16.msra.mxu0 0
      %997 = vmatprep.subr.bf16.mxu0 0
      %998 = vmatpush1.bf16.msra.mxu0 0
      %999 = vmatprep.subr.bf16.mxu0 0
      %1000 = vmatpush1.bf16.msra.mxu0 0
      %1001 = vmatprep.subr.bf16.mxu0 0
      %1002 = vmatpush1.bf16.msra.mxu0 0
      %1003 = vmatprep.subr.bf16.mxu0 0
      %1004 = vmatpush1.bf16.msra.mxu0 0
      %1005 = vmatprep.mubr.bf16.mxu0 0
      %1006 = vmatmul.mubr.bf16.gmra.mrb[0].mxu0 %v860
      %v1007 = vpop.f32.mrb[0].mxu0
      %v1008 = vadd.f32 0.0, %v1007
      %v1009 = vpop.f32.mrb[0].mxu0
      %v1010 = vpop.f32.mrb[0].mxu0
      %v1011 = vadd.f32 0.0, %v1010
      %v1012 = vpop.f32.mrb[0].mxu0
      %1013 = vmatprep.mubr.bf16.mxu0 0
      %1014 = vmatmul.mubr.bf16.gmra.mrb[0].mxu0 %v868
      %v1015 = vpop.f32.mrb[0].mxu0
      %v1016 = vadd.f32 0.0, %v1015
      %v1017 = vpop.f32.mrb[0].mxu0
      %v1018 = vpop.f32.mrb[0].mxu0
      %v1019 = vadd.f32 0.0, %v1018
      %v1020 = vpop.f32.mrb[0].mxu0
      %1021 = vmatprep.mubr.bf16.mxu0 0
      %1022 = vmatmul.mubr.bf16.gmra.mrb[0].mxu0 %v876
      %v1023 = vpop.f32.mrb[0].mxu0
      %v1024 = vadd.f32 0.0, %v1023
      %v1025 = vpop.f32.mrb[0].mxu0
      %v1026 = vpop.f32.mrb[0].mxu0
      %v1027 = vadd.f32 0.0, %v1026
      %v1028 = vpop.f32.mrb[0].mxu0
      %1029 = vmatprep.mubr.bf16.mxu0 0
      %1030 = vmatmul.mubr.bf16.gmra.mrb[0].mxu0 %v884
      %v1031 = vpop.f32.mrb[0].mxu0
      %v1032 = vadd.f32 0.0, %v1031
      %v1033 = vpop.f32.mrb[0].mxu0
      %v1034 = vpop.f32.mrb[0].mxu0
      %v1035 = vadd.f32 0.0, %v1034
      %v1036 = vpop.f32.mrb[0].mxu0
      %1037 = vmatprep.mubr.bf16.mxu0 0
      %1038 = vmatmul.mubr.bf16.gmra.mrb[0].mxu0 %v892
      %v1039 = vpop.f32.mrb[0].mxu0
      %v1040 = vadd.f32 0.0, %v1039
      %v1041 = vpop.f32.mrb[0].mxu0
      %v1042 = vpop.f32.mrb[0].mxu0
      %v1043 = vadd.f32 0.0, %v1042
      %v1044 = vpop.f32.mrb[0].mxu0
      %1045 = vmatprep.mubr.bf16.mxu0 0
      %1046 = vmatmul.mubr.bf16.gmra.mrb[0].mxu0 %v900
      %v1047 = vpop.f32.mrb[0].mxu0
      %v1048 = vadd.f32 0.0, %v1047
      %v1049 = vpop.f32.mrb[0].mxu0
      %v1050 = vpop.f32.mrb[0].mxu0
      %v1051 = vadd.f32 0.0, %v1050
      %v1052 = vpop.f32.mrb[0].mxu0
      %1053 = vmatprep.mubr.bf16.mxu0 0
      %1054 = vmatmul.mubr.bf16.gmra.mrb[0].mxu0 %v908
      %v1055 = vpop.f32.mrb[0].mxu0
      %v1056 = vadd.f32 0.0, %v1055
      %v1057 = vpop.f32.mrb[0].mxu0
      %v1058 = vpop.f32.mrb[0].mxu0
      %v1059 = vadd.f32 0.0, %v1058
      %v1060 = vpop.f32.mrb[0].mxu0
      %1061 = vmatprep.mubr.bf16.mxu0 0
      %1062 = vmatmul.mubr.bf16.gmra.mrb[0].mxu0 %v916
      %v1063 = vpop.f32.mrb[0].mxu0
      %v1064 = vadd.f32 0.0, %v1063
      %v1065 = vpop.f32.mrb[0].mxu0
      %v1066 = vpop.f32.mrb[0].mxu0
      %v1067 = vadd.f32 0.0, %v1066
      %v1068 = vpop.f32.mrb[0].mxu0
      %1069 = vdwg.mxu0
      %v1070 = vadd.f32 %v755, %v1008
      %v1071 = vadd.f32 %v756, %v1011
      %v1072 = vadd.f32 %v757, %v1016
      %v1073 = vadd.f32 %v758, %v1019
      %v1074 = vadd.f32 %v759, %v1024
      %v1075 = vadd.f32 %v760, %v1027
      %v1076 = vadd.f32 %v761, %v1032
      %v1077 = vadd.f32 %v762, %v1035
      %v1078 = vadd.f32 %v763, %v1040
      %v1079 = vadd.f32 %v764, %v1043
      %v1080 = vadd.f32 %v765, %v1048
      %v1081 = vadd.f32 %v766, %v1051
      %v1082 = vadd.f32 %v767, %v1056
      %v1083 = vadd.f32 %v768, %v1059
      %v1084 = vadd.f32 %v769, %v1064
      %v1085 = vadd.f32 %v770, %v1067
      %s1086 = scalar_lea.vmem %s273, 160
      %v1087 = vld [vmem:[%s1086] sm:$0xf]
      %v1088 = vld [vmem:[%s1086 + $0x4] sm:$0xf]
      %v1089 = vld [vmem:[%s1086 + $0x8] sm:$0xf]
      %v1090 = vld [vmem:[%s1086 + $0xc] sm:$0xf]
      %v1091 = vld [vmem:[%s1086 + $0x10] sm:$0xf]
      %v1092 = vld [vmem:[%s1086 + $0x14] sm:$0xf]
      %v1093 = vld [vmem:[%s1086 + $0x18] sm:$0xf]
      %v1094 = vld [vmem:[%s1086 + $0x1c] sm:$0xf]
      %v1095 = vld [vmem:[%s1086 + $0x20] sm:$0xf]
      %v1096 = vld [vmem:[%s1086 + $0x24] sm:$0xf]
      %v1097 = vld [vmem:[%s1086 + $0x28] sm:$0xf]
      %v1098 = vld [vmem:[%s1086 + $0x2c] sm:$0xf]
      %v1099 = vld [vmem:[%s1086 + $0x30] sm:$0xf]
      %v1100 = vld [vmem:[%s1086 + $0x34] sm:$0xf]
      %v1101 = vld [vmem:[%s1086 + $0x38] sm:$0xf]
      %v1102 = vld [vmem:[%s1086 + $0x3c] sm:$0xf]
      %s1103 = scalar_lea.vmem %s1, 192
      %v1104 = vld [vmem:[%s1103] sm:$0xf]
      %v1105 = vld [vmem:[%s1103 + $0x4] sm:$0xf]
      %v1106 = vld [vmem:[%s1103 + $0x8] sm:$0xf]
      %v1107 = vld [vmem:[%s1103 + $0xc] sm:$0xf]
      %v1108 = vld [vmem:[%s1103 + $0x10] sm:$0xf]
      %v1109 = vld [vmem:[%s1103 + $0x14] sm:$0xf]
      %v1110 = vld [vmem:[%s1103 + $0x18] sm:$0xf]
      %v1111 = vld [vmem:[%s1103 + $0x1c] sm:$0xf]
      %v1112 = vld [vmem:[%s1103 + $0x20] sm:$0xf]
      %v1113 = vld [vmem:[%s1103 + $0x24] sm:$0xf]
      %v1114 = vld [vmem:[%s1103 + $0x28] sm:$0xf]
      %v1115 = vld [vmem:[%s1103 + $0x2c] sm:$0xf]
      %v1116 = vld [vmem:[%s1103 + $0x30] sm:$0xf]
      %v1117 = vld [vmem:[%s1103 + $0x34] sm:$0xf]
      %v1118 = vld [vmem:[%s1103 + $0x38] sm:$0xf]
      %v1119 = vld [vmem:[%s1103 + $0x3c] sm:$0xf]
      %v1136 = vunpack.c.l.b16 %v1087
      %v1137 = vunpack.c.l.b16 %v1088
      %v1138 = vunpack.c.l.b16 %v1089
      %v1139 = vunpack.c.l.b16 %v1090
      %v1140 = vunpack.c.l.b16 %v1091
      %v1141 = vunpack.c.l.b16 %v1092
      %v1142 = vunpack.c.l.b16 %v1093
      %v1143 = vunpack.c.l.b16 %v1094
      %v1144 = vunpack.c.l.b16 %v1095
      %v1145 = vunpack.c.l.b16 %v1096
      %v1146 = vunpack.c.l.b16 %v1097
      %v1147 = vunpack.c.l.b16 %v1098
      %v1148 = vunpack.c.l.b16 %v1099
      %v1149 = vunpack.c.l.b16 %v1100
      %v1150 = vunpack.c.l.b16 %v1101
      %v1151 = vunpack.c.l.b16 %v1102
      %v1152 = vpack.c.b16 %v1137, %v1136
      %v1153 = vpack.c.b16 %v1139, %v1138
      %v1154 = vpack.c.b16 %v1141, %v1140
      %v1155 = vpack.c.b16 %v1143, %v1142
      %v1156 = vpack.c.b16 %v1145, %v1144
      %v1157 = vpack.c.b16 %v1147, %v1146
      %v1158 = vpack.c.b16 %v1149, %v1148
      %v1159 = vpack.c.b16 %v1151, %v1150
      %v1184 = vunpack.c.l.b16 %v1104
      %v1185 = vunpack.c.l.b16 %v1105
      %v1186 = vunpack.c.l.b16 %v1106
      %v1187 = vunpack.c.l.b16 %v1107
      %v1188 = vunpack.c.l.b16 %v1108
      %v1189 = vunpack.c.l.b16 %v1109
      %v1190 = vunpack.c.l.b16 %v1110
      %v1191 = vunpack.c.l.b16 %v1111
      %v1192 = vunpack.c.l.b16 %v1112
      %v1193 = vunpack.c.l.b16 %v1113
      %v1194 = vunpack.c.l.b16 %v1114
      %v1195 = vunpack.c.l.b16 %v1115
      %v1196 = vunpack.c.l.b16 %v1116
      %v1197 = vunpack.c.l.b16 %v1117
      %v1198 = vunpack.c.l.b16 %v1118
      %v1199 = vunpack.c.l.b16 %v1119
      %v1200 = vpack.c.b16 %v1185, %v1184
      %v1201 = vpack.c.b16 %v1187, %v1186
      %v1202 = vpack.c.b16 %v1189, %v1188
      %v1203 = vpack.c.b16 %v1191, %v1190
      %v1204 = vpack.c.b16 %v1193, %v1192
      %v1205 = vpack.c.b16 %v1195, %v1194
      %v1206 = vpack.c.b16 %v1197, %v1196
      %v1207 = vpack.c.b16 %v1199, %v1198
      %1216 = vmatprep.subr.bf16.mxu0 0
      %1217 = vmatpush1.bf16.msra.mxu0 %v1200
      %1218 = vmatprep.subr.bf16.mxu0 0
      %1219 = vmatpush1.bf16.msra.mxu0 %v1201
      %1220 = vmatprep.subr.bf16.mxu0 0
      %1221 = vmatpush1.bf16.msra.mxu0 %v1202
      %1222 = vmatprep.subr.bf16.mxu0 0
      %1223 = vmatpush1.bf16.msra.mxu0 %v1203
      %1224 = vmatprep.subr.bf16.mxu0 0
      %1225 = vmatpush1.bf16.msra.mxu0 %v1204
      %1226 = vmatprep.subr.bf16.mxu0 0
      %1227 = vmatpush1.bf16.msra.mxu0 %v1205
      %1228 = vmatprep.subr.bf16.mxu0 0
      %1229 = vmatpush1.bf16.msra.mxu0 %v1206
      %1230 = vmatprep.subr.bf16.mxu0 0
      %1231 = vmatpush1.bf16.msra.mxu0 %v1207
      %1232 = vmatprep.subr.bf16.mxu0 0
      %1233 = vmatpush1.bf16.msra.mxu0 0
      %1234 = vmatprep.subr.bf16.mxu0 0
      %1235 = vmatpush1.bf16.msra.mxu0 0
      %1236 = vmatprep.subr.bf16.mxu0 0
      %1237 = vmatpush1.bf16.msra.mxu0 0
      %1238 = vmatprep.subr.bf16.mxu0 0
      %1239 = vmatpush1.bf16.msra.mxu0 0
      %1240 = vmatprep.subr.bf16.mxu0 0
      %1241 = vmatpush1.bf16.msra.mxu0 0
      %1242 = vmatprep.subr.bf16.mxu0 0
      %1243 = vmatpush1.bf16.msra.mxu0 0
      %1244 = vmatprep.subr.bf16.mxu0 0
      %1245 = vmatpush1.bf16.msra.mxu0 0
      %1246 = vmatprep.subr.bf16.mxu0 0
      %1247 = vmatpush1.bf16.msra.mxu0 0
      %1248 = vmatprep.mubr.bf16.mxu0 0
      %1249 = vmatmul.mubr.bf16.gmra.mrb[0].mxu0 %v1152
      %v1250 = vpop.f32.mrb[0].mxu0
      %v1251 = vadd.f32 0.0, %v1250
      %v1252 = vpop.f32.mrb[0].mxu0
      %v1253 = vpop.f32.mrb[0].mxu0
      %v1254 = vadd.f32 0.0, %v1253
      %v1255 = vpop.f32.mrb[0].mxu0
      %1256 = vmatprep.mubr.bf16.mxu0 0
      %1257 = vmatmul.mubr.bf16.gmra.mrb[0].mxu0 %v1153
      %v1258 = vpop.f32.mrb[0].mxu0
      %v1259 = vadd.f32 0.0, %v1258
      %v1260 = vpop.f32.mrb[0].mxu0
      %v1261 = vpop.f32.mrb[0].mxu0
      %v1262 = vadd.f32 0.0, %v1261
      %v1263 = vpop.f32.mrb[0].mxu0
      %1264 = vmatprep.mubr.bf16.mxu0 0
      %1265 = vmatmul.mubr.bf16.gmra.mrb[0].mxu0 %v1154
      %v1266 = vpop.f32.mrb[0].mxu0
      %v1267 = vadd.f32 0.0, %v1266
      %v1268 = vpop.f32.mrb[0].mxu0
      %v1269 = vpop.f32.mrb[0].mxu0
      %v1270 = vadd.f32 0.0, %v1269
      %v1271 = vpop.f32.mrb[0].mxu0
      %1272 = vmatprep.mubr.bf16.mxu0 0
      %1273 = vmatmul.mubr.bf16.gmra.mrb[0].mxu0 %v1155
      %v1274 = vpop.f32.mrb[0].mxu0
      %v1275 = vadd.f32 0.0, %v1274
      %v1276 = vpop.f32.mrb[0].mxu0
      %v1277 = vpop.f32.mrb[0].mxu0
      %v1278 = vadd.f32 0.0, %v1277
      %v1279 = vpop.f32.mrb[0].mxu0
      %1280 = vmatprep.mubr.bf16.mxu0 0
      %1281 = vmatmul.mubr.bf16.gmra.mrb[0].mxu0 %v1156
      %v1282 = vpop.f32.mrb[0].mxu0
      %v1283 = vadd.f32 0.0, %v1282
      %v1284 = vpop.f32.mrb[0].mxu0
      %v1285 = vpop.f32.mrb[0].mxu0
      %v1286 = vadd.f32 0.0, %v1285
      %v1287 = vpop.f32.mrb[0].mxu0
      %1288 = vmatprep.mubr.bf16.mxu0 0
      %1289 = vmatmul.mubr.bf16.gmra.mrb[0].mxu0 %v1157
      %v1290 = vpop.f32.mrb[0].mxu0
      %v1291 = vadd.f32 0.0, %v1290
      %v1292 = vpop.f32.mrb[0].mxu0
      %v1293 = vpop.f32.mrb[0].mxu0
      %v1294 = vadd.f32 0.0, %v1293
      %v1295 = vpop.f32.mrb[0].mxu0
      %1296 = vmatprep.mubr.bf16.mxu0 0
      %1297 = vmatmul.mubr.bf16.gmra.mrb[0].mxu0 %v1158
      %v1298 = vpop.f32.mrb[0].mxu0
      %v1299 = vadd.f32 0.0, %v1298
      %v1300 = vpop.f32.mrb[0].mxu0
      %v1301 = vpop.f32.mrb[0].mxu0
      %v1302 = vadd.f32 0.0, %v1301
      %v1303 = vpop.f32.mrb[0].mxu0
      %1304 = vmatprep.mubr.bf16.mxu0 0
      %1305 = vmatmul.mubr.bf16.gmra.mrb[0].mxu0 %v1159
      %v1306 = vpop.f32.mrb[0].mxu0
      %v1307 = vadd.f32 0.0, %v1306
      %v1308 = vpop.f32.mrb[0].mxu0
      %v1309 = vpop.f32.mrb[0].mxu0
      %v1310 = vadd.f32 0.0, %v1309
      %v1311 = vpop.f32.mrb[0].mxu0
      %1312 = vdwg.mxu0
      %v1313 = vadd.f32 %v1070, %v1251
      %v1314 = vadd.f32 %v1071, %v1254
      %v1315 = vadd.f32 %v1072, %v1259
      %v1316 = vadd.f32 %v1073, %v1262
      %v1317 = vadd.f32 %v1074, %v1267
      %v1318 = vadd.f32 %v1075, %v1270
      %v1319 = vadd.f32 %v1076, %v1275
      %v1320 = vadd.f32 %v1077, %v1278
      %v1321 = vadd.f32 %v1078, %v1283
      %v1322 = vadd.f32 %v1079, %v1286
      %v1323 = vadd.f32 %v1080, %v1291
      %v1324 = vadd.f32 %v1081, %v1294
      %v1325 = vadd.f32 %v1082, %v1299
      %v1326 = vadd.f32 %v1083, %v1302
      %v1327 = vadd.f32 %v1084, %v1307
      %v1328 = vadd.f32 %v1085, %v1310
      %s1329 = scalar_lea.vmem %s273, 240
      %v1330 = vld [vmem:[%s1329] sm:$0xf]
      %v1331 = vld [vmem:[%s1329 + $0x4] sm:$0xf]
      %v1332 = vld [vmem:[%s1329 + $0x8] sm:$0xf]
      %v1333 = vld [vmem:[%s1329 + $0xc] sm:$0xf]
      %v1334 = vld [vmem:[%s1329 + $0x10] sm:$0xf]
      %v1335 = vld [vmem:[%s1329 + $0x14] sm:$0xf]
      %v1336 = vld [vmem:[%s1329 + $0x18] sm:$0xf]
      %v1337 = vld [vmem:[%s1329 + $0x1c] sm:$0xf]
      %v1338 = vld [vmem:[%s1329 + $0x20] sm:$0xf]
      %v1339 = vld [vmem:[%s1329 + $0x24] sm:$0xf]
      %v1340 = vld [vmem:[%s1329 + $0x28] sm:$0xf]
      %v1341 = vld [vmem:[%s1329 + $0x2c] sm:$0xf]
      %v1342 = vld [vmem:[%s1329 + $0x30] sm:$0xf]
      %v1343 = vld [vmem:[%s1329 + $0x34] sm:$0xf]
      %v1344 = vld [vmem:[%s1329 + $0x38] sm:$0xf]
      %v1345 = vld [vmem:[%s1329 + $0x3c] sm:$0xf]
      %s1346 = scalar_lea.vmem %s1, 256
      %v1347 = vld [vmem:[%s1346] sm:$0xf]
      %v1348 = vld [vmem:[%s1346 + $0x4] sm:$0xf]
      %v1349 = vld [vmem:[%s1346 + $0x8] sm:$0xf]
      %v1350 = vld [vmem:[%s1346 + $0xc] sm:$0xf]
      %v1351 = vld [vmem:[%s1346 + $0x10] sm:$0xf]
      %v1352 = vld [vmem:[%s1346 + $0x14] sm:$0xf]
      %v1353 = vld [vmem:[%s1346 + $0x18] sm:$0xf]
      %v1354 = vld [vmem:[%s1346 + $0x1c] sm:$0xf]
      %v1355 = vld [vmem:[%s1346 + $0x20] sm:$0xf]
      %v1356 = vld [vmem:[%s1346 + $0x24] sm:$0xf]
      %v1357 = vld [vmem:[%s1346 + $0x28] sm:$0xf]
      %v1358 = vld [vmem:[%s1346 + $0x2c] sm:$0xf]
      %v1359 = vld [vmem:[%s1346 + $0x30] sm:$0xf]
      %v1360 = vld [vmem:[%s1346 + $0x34] sm:$0xf]
      %v1361 = vld [vmem:[%s1346 + $0x38] sm:$0xf]
      %v1362 = vld [vmem:[%s1346 + $0x3c] sm:$0xf]
      %v1379 = vunpack.c.l.b16 %v1330
      %v1380 = vunpack.c.l.b16 %v1331
      %v1381 = vunpack.c.l.b16 %v1332
      %v1382 = vunpack.c.l.b16 %v1333
      %v1383 = vunpack.c.l.b16 %v1334
      %v1384 = vunpack.c.l.b16 %v1335
      %v1385 = vunpack.c.l.b16 %v1336
      %v1386 = vunpack.c.l.b16 %v1337
      %v1387 = vunpack.c.l.b16 %v1338
      %v1388 = vunpack.c.l.b16 %v1339
      %v1389 = vunpack.c.l.b16 %v1340
      %v1390 = vunpack.c.l.b16 %v1341
      %v1391 = vunpack.c.l.b16 %v1342
      %v1392 = vunpack.c.l.b16 %v1343
      %v1393 = vunpack.c.l.b16 %v1344
      %v1394 = vunpack.c.l.b16 %v1345
      %v1395 = vpack.c.b16 %v1380, %v1379
      %v1396 = vpack.c.b16 %v1382, %v1381
      %v1397 = vpack.c.b16 %v1384, %v1383
      %v1398 = vpack.c.b16 %v1386, %v1385
      %v1399 = vpack.c.b16 %v1388, %v1387
      %v1400 = vpack.c.b16 %v1390, %v1389
      %v1401 = vpack.c.b16 %v1392, %v1391
      %v1402 = vpack.c.b16 %v1394, %v1393
      %v1427 = vunpack.c.l.b16 %v1347
      %v1428 = vunpack.c.l.b16 %v1348
      %v1429 = vunpack.c.l.b16 %v1349
      %v1430 = vunpack.c.l.b16 %v1350
      %v1431 = vunpack.c.l.b16 %v1351
      %v1432 = vunpack.c.l.b16 %v1352
      %v1433 = vunpack.c.l.b16 %v1353
      %v1434 = vunpack.c.l.b16 %v1354
      %v1435 = vunpack.c.l.b16 %v1355
      %v1436 = vunpack.c.l.b16 %v1356
      %v1437 = vunpack.c.l.b16 %v1357
      %v1438 = vunpack.c.l.b16 %v1358
      %v1439 = vunpack.c.l.b16 %v1359
      %v1440 = vunpack.c.l.b16 %v1360
      %v1441 = vunpack.c.l.b16 %v1361
      %v1442 = vunpack.c.l.b16 %v1362
      %v1443 = vpack.c.b16 %v1428, %v1427
      %v1444 = vpack.c.b16 %v1430, %v1429
      %v1445 = vpack.c.b16 %v1432, %v1431
      %v1446 = vpack.c.b16 %v1434, %v1433
      %v1447 = vpack.c.b16 %v1436, %v1435
      %v1448 = vpack.c.b16 %v1438, %v1437
      %v1449 = vpack.c.b16 %v1440, %v1439
      %v1450 = vpack.c.b16 %v1442, %v1441
      %1459 = vmatprep.subr.bf16.mxu0 0
      %1460 = vmatpush1.bf16.msra.mxu0 %v1443
      %1461 = vmatprep.subr.bf16.mxu0 0
      %1462 = vmatpush1.bf16.msra.mxu0 %v1444
      %1463 = vmatprep.subr.bf16.mxu0 0
      %1464 = vmatpush1.bf16.msra.mxu0 %v1445
      %1465 = vmatprep.subr.bf16.mxu0 0
      %1466 = vmatpush1.bf16.msra.mxu0 %v1446
      %1467 = vmatprep.subr.bf16.mxu0 0
      %1468 = vmatpush1.bf16.msra.mxu0 %v1447
      %1469 = vmatprep.subr.bf16.mxu0 0
      %1470 = vmatpush1.bf16.msra.mxu0 %v1448
      %1471 = vmatprep.subr.bf16.mxu0 0
      %1472 = vmatpush1.bf16.msra.mxu0 %v1449
      %1473 = vmatprep.subr.bf16.mxu0 0
      %1474 = vmatpush1.bf16.msra.mxu0 %v1450
      %1475 = vmatprep.subr.bf16.mxu0 0
      %1476 = vmatpush1.bf16.msra.mxu0 0
      %1477 = vmatprep.subr.bf16.mxu0 0
      %1478 = vmatpush1.bf16.msra.mxu0 0
      %1479 = vmatprep.subr.bf16.mxu0 0
      %1480 = vmatpush1.bf16.msra.mxu0 0
      %1481 = vmatprep.subr.bf16.mxu0 0
      %1482 = vmatpush1.bf16.msra.mxu0 0
      %1483 = vmatprep.subr.bf16.mxu0 0
      %1484 = vmatpush1.bf16.msra.mxu0 0
      %1485 = vmatprep.subr.bf16.mxu0 0
      %1486 = vmatpush1.bf16.msra.mxu0 0
      %1487 = vmatprep.subr.bf16.mxu0 0
      %1488 = vmatpush1.bf16.msra.mxu0 0
      %1489 = vmatprep.subr.bf16.mxu0 0
      %1490 = vmatpush1.bf16.msra.mxu0 0
      %1491 = vmatprep.mubr.bf16.mxu0 0
      %1492 = vmatmul.mubr.bf16.gmra.mrb[0].mxu0 %v1395
      %v1493 = vpop.f32.mrb[0].mxu0
      %v1494 = vadd.f32 0.0, %v1493
      %v1495 = vpop.f32.mrb[0].mxu0
      %v1496 = vpop.f32.mrb[0].mxu0
      %v1497 = vadd.f32 0.0, %v1496
      %v1498 = vpop.f32.mrb[0].mxu0
      %1499 = vmatprep.mubr.bf16.mxu0 0
      %1500 = vmatmul.mubr.bf16.gmra.mrb[0].mxu0 %v1396
      %v1501 = vpop.f32.mrb[0].mxu0
      %v1502 = vadd.f32 0.0, %v1501
      %v1503 = vpop.f32.mrb[0].mxu0
      %v1504 = vpop.f32.mrb[0].mxu0
      %v1505 = vadd.f32 0.0, %v1504
      %v1506 = vpop.f32.mrb[0].mxu0
      %1507 = vmatprep.mubr.bf16.mxu0 0
      %1508 = vmatmul.mubr.bf16.gmra.mrb[0].mxu0 %v1397
      %v1509 = vpop.f32.mrb[0].mxu0
      %v1510 = vadd.f32 0.0, %v1509
      %v1511 = vpop.f32.mrb[0].mxu0
      %v1512 = vpop.f32.mrb[0].mxu0
      %v1513 = vadd.f32 0.0, %v1512
      %v1514 = vpop.f32.mrb[0].mxu0
      %1515 = vmatprep.mubr.bf16.mxu0 0
      %1516 = vmatmul.mubr.bf16.gmra.mrb[0].mxu0 %v1398
      %v1517 = vpop.f32.mrb[0].mxu0
      %v1518 = vadd.f32 0.0, %v1517
      %v1519 = vpop.f32.mrb[0].mxu0
      %v1520 = vpop.f32.mrb[0].mxu0
      %v1521 = vadd.f32 0.0, %v1520
      %v1522 = vpop.f32.mrb[0].mxu0
      %1523 = vmatprep.mubr.bf16.mxu0 0
      %1524 = vmatmul.mubr.bf16.gmra.mrb[0].mxu0 %v1399
      %v1525 = vpop.f32.mrb[0].mxu0
      %v1526 = vadd.f32 0.0, %v1525
      %v1527 = vpop.f32.mrb[0].mxu0
      %v1528 = vpop.f32.mrb[0].mxu0
      %v1529 = vadd.f32 0.0, %v1528
      %v1530 = vpop.f32.mrb[0].mxu0
      %1531 = vmatprep.mubr.bf16.mxu0 0
      %1532 = vmatmul.mubr.bf16.gmra.mrb[0].mxu0 %v1400
      %v1533 = vpop.f32.mrb[0].mxu0
      %v1534 = vadd.f32 0.0, %v1533
      %v1535 = vpop.f32.mrb[0].mxu0
      %v1536 = vpop.f32.mrb[0].mxu0
      %v1537 = vadd.f32 0.0, %v1536
      %v1538 = vpop.f32.mrb[0].mxu0
      %1539 = vmatprep.mubr.bf16.mxu0 0
      %1540 = vmatmul.mubr.bf16.gmra.mrb[0].mxu0 %v1401
      %v1541 = vpop.f32.mrb[0].mxu0
      %v1542 = vadd.f32 0.0, %v1541
      %v1543 = vpop.f32.mrb[0].mxu0
      %v1544 = vpop.f32.mrb[0].mxu0
      %v1545 = vadd.f32 0.0, %v1544
      %v1546 = vpop.f32.mrb[0].mxu0
      %1547 = vmatprep.mubr.bf16.mxu0 0
      %1548 = vmatmul.mubr.bf16.gmra.mrb[0].mxu0 %v1402
      %v1549 = vpop.f32.mrb[0].mxu0
      %v1550 = vadd.f32 0.0, %v1549
      %v1551 = vpop.f32.mrb[0].mxu0
      %v1552 = vpop.f32.mrb[0].mxu0
      %v1553 = vadd.f32 0.0, %v1552
      %v1554 = vpop.f32.mrb[0].mxu0
      %1555 = vdwg.mxu0
      %v1556 = vadd.f32 %v1313, %v1494
      %v1557 = vadd.f32 %v1314, %v1497
      %v1558 = vadd.f32 %v1315, %v1502
      %v1559 = vadd.f32 %v1316, %v1505
      %v1560 = vadd.f32 %v1317, %v1510
      %v1561 = vadd.f32 %v1318, %v1513
      %v1562 = vadd.f32 %v1319, %v1518
      %v1563 = vadd.f32 %v1320, %v1521
      %v1564 = vadd.f32 %v1321, %v1526
      %v1565 = vadd.f32 %v1322, %v1529
      %v1566 = vadd.f32 %v1323, %v1534
      %v1567 = vadd.f32 %v1324, %v1537
      %v1568 = vadd.f32 %v1325, %v1542
      %v1569 = vadd.f32 %v1326, %v1545
      %v1570 = vadd.f32 %v1327, %v1550
      %v1571 = vadd.f32 %v1328, %v1553
      %v1572 = vld [vmem:[%s1086] sm:$0xf]
      %v1573 = vld [vmem:[%s1086 + $0x4] sm:$0xf]
      %v1574 = vld [vmem:[%s1086 + $0x8] sm:$0xf]
      %v1575 = vld [vmem:[%s1086 + $0xc] sm:$0xf]
      %v1576 = vld [vmem:[%s1086 + $0x10] sm:$0xf]
      %v1577 = vld [vmem:[%s1086 + $0x14] sm:$0xf]
      %v1578 = vld [vmem:[%s1086 + $0x18] sm:$0xf]
      %v1579 = vld [vmem:[%s1086 + $0x1c] sm:$0xf]
      %v1580 = vld [vmem:[%s1086 + $0x20] sm:$0xf]
      %v1581 = vld [vmem:[%s1086 + $0x24] sm:$0xf]
      %v1582 = vld [vmem:[%s1086 + $0x28] sm:$0xf]
      %v1583 = vld [vmem:[%s1086 + $0x2c] sm:$0xf]
      %v1584 = vld [vmem:[%s1086 + $0x30] sm:$0xf]
      %v1585 = vld [vmem:[%s1086 + $0x34] sm:$0xf]
      %v1586 = vld [vmem:[%s1086 + $0x38] sm:$0xf]
      %v1587 = vld [vmem:[%s1086 + $0x3c] sm:$0xf]
      %v1588 = vld [vmem:[%s1086 + $0x40] sm:$0x1]
      %s1589 = scalar_lea.vmem %s1, 320
      %v1590 = vld [vmem:[%s1589] sm:$0xf]
      %v1591 = vld [vmem:[%s1589 + $0x4] sm:$0xf]
      %v1592 = vld [vmem:[%s1589 + $0x8] sm:$0xf]
      %v1593 = vld [vmem:[%s1589 + $0xc] sm:$0xf]
      %v1594 = vld [vmem:[%s1589 + $0x10] sm:$0xf]
      %v1595 = vld [vmem:[%s1589 + $0x14] sm:$0xf]
      %v1596 = vld [vmem:[%s1589 + $0x18] sm:$0xf]
      %v1597 = vld [vmem:[%s1589 + $0x1c] sm:$0xf]
      %v1598 = vld [vmem:[%s1589 + $0x20] sm:$0xf]
      %v1599 = vld [vmem:[%s1589 + $0x24] sm:$0xf]
      %v1600 = vld [vmem:[%s1589 + $0x28] sm:$0xf]
      %v1601 = vld [vmem:[%s1589 + $0x2c] sm:$0xf]
      %v1602 = vld [vmem:[%s1589 + $0x30] sm:$0xf]
      %v1603 = vld [vmem:[%s1589 + $0x34] sm:$0xf]
      %v1604 = vld [vmem:[%s1589 + $0x38] sm:$0xf]
      %v1605 = vld [vmem:[%s1589 + $0x3c] sm:$0xf]
      %v1623 = vunpack.c.l.b16 %v1572
      %v1624 = vunpack.c.l.b16 %v1573
      %v1625 = vunpack.c.l.b16 %v1574
      %v1626 = vunpack.c.l.b16 %v1575
      %v1627 = vunpack.c.l.b16 %v1576
      %v1628 = vunpack.c.l.b16 %v1577
      %v1629 = vunpack.c.l.b16 %v1578
      %v1630 = vunpack.c.l.b16 %v1579
      %v1631 = vunpack.c.l.b16 %v1580
      %v1632 = vunpack.c.l.b16 %v1581
      %v1633 = vunpack.c.l.b16 %v1582
      %v1634 = vunpack.c.l.b16 %v1583
      %v1635 = vunpack.c.l.b16 %v1584
      %v1636 = vunpack.c.l.b16 %v1585
      %v1637 = vunpack.c.l.b16 %v1586
      %v1638 = vunpack.c.l.b16 %v1587
      %v1639 = vunpack.c.l.b16 %v1588
      %v1640 = vpack.c.b16 %v1624, %v1623
      %v1641 = vpack.c.b16 %v1626, %v1625
      %v1642 = vpack.c.b16 %v1628, %v1627
      %v1643 = vpack.c.b16 %v1630, %v1629
      %v1644 = vpack.c.b16 %v1632, %v1631
      %v1645 = vpack.c.b16 %v1634, %v1633
      %v1646 = vpack.c.b16 %v1636, %v1635
      %v1647 = vpack.c.b16 %v1638, %v1637
      %v1648 = vpack.c.b16 %v1639, %v1639
      %v1650 = vshrl.u32 %v1640, 16
      %v1652 = vshll.u32 %v1640, 16
      %v1654 = vrot.slane %v1652, 1
      %v1655 = vor.u32 %v1650, %v1654
      %v1657 = vshll.u32 %v1641, 16
      %v1659 = vrot.slane %v1657, 1
      %v1660 = vsel %vm848, %v1655, %v1659
      %v1661 = vshrl.u32 %v1641, 16
      %v1663 = vor.u32 %v1661, %v1659
      %v1665 = vshll.u32 %v1642, 16
      %v1667 = vrot.slane %v1665, 1
      %v1668 = vsel %vm848, %v1663, %v1667
      %v1669 = vshrl.u32 %v1642, 16
      %v1671 = vor.u32 %v1669, %v1667
      %v1673 = vshll.u32 %v1643, 16
      %v1675 = vrot.slane %v1673, 1
      %v1676 = vsel %vm848, %v1671, %v1675
      %v1677 = vshrl.u32 %v1643, 16
      %v1679 = vor.u32 %v1677, %v1675
      %v1681 = vshll.u32 %v1644, 16
      %v1683 = vrot.slane %v1681, 1
      %v1684 = vsel %vm848, %v1679, %v1683
      %v1685 = vshrl.u32 %v1644, 16
      %v1687 = vor.u32 %v1685, %v1683
      %v1689 = vshll.u32 %v1645, 16
      %v1691 = vrot.slane %v1689, 1
      %v1692 = vsel %vm848, %v1687, %v1691
      %v1693 = vshrl.u32 %v1645, 16
      %v1695 = vor.u32 %v1693, %v1691
      %v1697 = vshll.u32 %v1646, 16
      %v1699 = vrot.slane %v1697, 1
      %v1700 = vsel %vm848, %v1695, %v1699
      %v1701 = vshrl.u32 %v1646, 16
      %v1703 = vor.u32 %v1701, %v1699
      %v1705 = vshll.u32 %v1647, 16
      %v1707 = vrot.slane %v1705, 1
      %v1708 = vsel %vm848, %v1703, %v1707
      %v1709 = vshrl.u32 %v1647, 16
      %v1711 = vor.u32 %v1709, %v1707
      %v1713 = vshll.u32 %v1648, 16
      %v1715 = vrot.slane %v1713, 1
      %v1716 = vsel %vm848, %v1711, %v1715
      %v1741 = vunpack.c.l.b16 %v1590
      %v1742 = vunpack.c.l.b16 %v1591
      %v1743 = vunpack.c.l.b16 %v1592
      %v1744 = vunpack.c.l.b16 %v1593
      %v1745 = vunpack.c.l.b16 %v1594
      %v1746 = vunpack.c.l.b16 %v1595
      %v1747 = vunpack.c.l.b16 %v1596
      %v1748 = vunpack.c.l.b16 %v1597
      %v1749 = vunpack.c.l.b16 %v1598
      %v1750 = vunpack.c.l.b16 %v1599
      %v1751 = vunpack.c.l.b16 %v1600
      %v1752 = vunpack.c.l.b16 %v1601
      %v1753 = vunpack.c.l.b16 %v1602
      %v1754 = vunpack.c.l.b16 %v1603
      %v1755 = vunpack.c.l.b16 %v1604
      %v1756 = vunpack.c.l.b16 %v1605
      %v1757 = vpack.c.b16 %v1742, %v1741
      %v1758 = vpack.c.b16 %v1744, %v1743
      %v1759 = vpack.c.b16 %v1746, %v1745
      %v1760 = vpack.c.b16 %v1748, %v1747
      %v1761 = vpack.c.b16 %v1750, %v1749
      %v1762 = vpack.c.b16 %v1752, %v1751
      %v1763 = vpack.c.b16 %v1754, %v1753
      %v1764 = vpack.c.b16 %v1756, %v1755
      %1773 = vmatprep.subr.bf16.mxu0 0
      %1774 = vmatpush1.bf16.msra.mxu0 %v1757
      %1775 = vmatprep.subr.bf16.mxu0 0
      %1776 = vmatpush1.bf16.msra.mxu0 %v1758
      %1777 = vmatprep.subr.bf16.mxu0 0
      %1778 = vmatpush1.bf16.msra.mxu0 %v1759
      %1779 = vmatprep.subr.bf16.mxu0 0
      %1780 = vmatpush1.bf16.msra.mxu0 %v1760
      %1781 = vmatprep.subr.bf16.mxu0 0
      %1782 = vmatpush1.bf16.msra.mxu0 %v1761
      %1783 = vmatprep.subr.bf16.mxu0 0
      %1784 = vmatpush1.bf16.msra.mxu0 %v1762
      %1785 = vmatprep.subr.bf16.mxu0 0
      %1786 = vmatpush1.bf16.msra.mxu0 %v1763
      %1787 = vmatprep.subr.bf16.mxu0 0
      %1788 = vmatpush1.bf16.msra.mxu0 %v1764
      %1789 = vmatprep.subr.bf16.mxu0 0
      %1790 = vmatpush1.bf16.msra.mxu0 0
      %1791 = vmatprep.subr.bf16.mxu0 0
      %1792 = vmatpush1.bf16.msra.mxu0 0
      %1793 = vmatprep.subr.bf16.mxu0 0
      %1794 = vmatpush1.bf16.msra.mxu0 0
      %1795 = vmatprep.subr.bf16.mxu0 0
      %1796 = vmatpush1.bf16.msra.mxu0 0
      %1797 = vmatprep.subr.bf16.mxu0 0
      %1798 = vmatpush1.bf16.msra.mxu0 0
      %1799 = vmatprep.subr.bf16.mxu0 0
      %1800 = vmatpush1.bf16.msra.mxu0 0
      %1801 = vmatprep.subr.bf16.mxu0 0
      %1802 = vmatpush1.bf16.msra.mxu0 0
      %1803 = vmatprep.subr.bf16.mxu0 0
      %1804 = vmatpush1.bf16.msra.mxu0 0
      %1805 = vmatprep.mubr.bf16.mxu0 0
      %1806 = vmatmul.mubr.bf16.gmra.mrb[0].mxu0 %v1660
      %v1807 = vpop.f32.mrb[0].mxu0
      %v1808 = vadd.f32 0.0, %v1807
      %v1809 = vpop.f32.mrb[0].mxu0
      %v1810 = vpop.f32.mrb[0].mxu0
      %v1811 = vadd.f32 0.0, %v1810
      %v1812 = vpop.f32.mrb[0].mxu0
      %1813 = vmatprep.mubr.bf16.mxu0 0
      %1814 = vmatmul.mubr.bf16.gmra.mrb[0].mxu0 %v1668
      %v1815 = vpop.f32.mrb[0].mxu0
      %v1816 = vadd.f32 0.0, %v1815
      %v1817 = vpop.f32.mrb[0].mxu0
      %v1818 = vpop.f32.mrb[0].mxu0
      %v1819 = vadd.f32 0.0, %v1818
      %v1820 = vpop.f32.mrb[0].mxu0
      %1821 = vmatprep.mubr.bf16.mxu0 0
      %1822 = vmatmul.mubr.bf16.gmra.mrb[0].mxu0 %v1676
      %v1823 = vpop.f32.mrb[0].mxu0
      %v1824 = vadd.f32 0.0, %v1823
      %v1825 = vpop.f32.mrb[0].mxu0
      %v1826 = vpop.f32.mrb[0].mxu0
      %v1827 = vadd.f32 0.0, %v1826
      %v1828 = vpop.f32.mrb[0].mxu0
      %1829 = vmatprep.mubr.bf16.mxu0 0
      %1830 = vmatmul.mubr.bf16.gmra.mrb[0].mxu0 %v1684
      %v1831 = vpop.f32.mrb[0].mxu0
      %v1832 = vadd.f32 0.0, %v1831
      %v1833 = vpop.f32.mrb[0].mxu0
      %v1834 = vpop.f32.mrb[0].mxu0
      %v1835 = vadd.f32 0.0, %v1834
      %v1836 = vpop.f32.mrb[0].mxu0
      %1837 = vmatprep.mubr.bf16.mxu0 0
      %1838 = vmatmul.mubr.bf16.gmra.mrb[0].mxu0 %v1692
      %v1839 = vpop.f32.mrb[0].mxu0
      %v1840 = vadd.f32 0.0, %v1839
      %v1841 = vpop.f32.mrb[0].mxu0
      %v1842 = vpop.f32.mrb[0].mxu0
      %v1843 = vadd.f32 0.0, %v1842
      %v1844 = vpop.f32.mrb[0].mxu0
      %1845 = vmatprep.mubr.bf16.mxu0 0
      %1846 = vmatmul.mubr.bf16.gmra.mrb[0].mxu0 %v1700
      %v1847 = vpop.f32.mrb[0].mxu0
      %v1848 = vadd.f32 0.0, %v1847
      %v1849 = vpop.f32.mrb[0].mxu0
      %v1850 = vpop.f32.mrb[0].mxu0
      %v1851 = vadd.f32 0.0, %v1850
      %v1852 = vpop.f32.mrb[0].mxu0
      %1853 = vmatprep.mubr.bf16.mxu0 0
      %1854 = vmatmul.mubr.bf16.gmra.mrb[0].mxu0 %v1708
      %v1855 = vpop.f32.mrb[0].mxu0
      %v1856 = vadd.f32 0.0, %v1855
      %v1857 = vpop.f32.mrb[0].mxu0
      %v1858 = vpop.f32.mrb[0].mxu0
      %v1859 = vadd.f32 0.0, %v1858
      %v1860 = vpop.f32.mrb[0].mxu0
      %1861 = vmatprep.mubr.bf16.mxu0 0
      %1862 = vmatmul.mubr.bf16.gmra.mrb[0].mxu0 %v1716
      %v1863 = vpop.f32.mrb[0].mxu0
      %v1864 = vadd.f32 0.0, %v1863
      %v1865 = vpop.f32.mrb[0].mxu0
      %v1866 = vpop.f32.mrb[0].mxu0
      %v1867 = vadd.f32 0.0, %v1866
      %v1868 = vpop.f32.mrb[0].mxu0
      %1869 = vdwg.mxu0
      %v1870 = vadd.f32 %v1556, %v1808
      %v1871 = vadd.f32 %v1557, %v1811
      %v1872 = vadd.f32 %v1558, %v1816
      %v1873 = vadd.f32 %v1559, %v1819
      %v1874 = vadd.f32 %v1560, %v1824
      %v1875 = vadd.f32 %v1561, %v1827
      %v1876 = vadd.f32 %v1562, %v1832
      %v1877 = vadd.f32 %v1563, %v1835
      %v1878 = vadd.f32 %v1564, %v1840
      %v1879 = vadd.f32 %v1565, %v1843
      %v1880 = vadd.f32 %v1566, %v1848
      %v1881 = vadd.f32 %v1567, %v1851
      %v1882 = vadd.f32 %v1568, %v1856
      %v1883 = vadd.f32 %v1569, %v1859
      %v1884 = vadd.f32 %v1570, %v1864
      %v1885 = vadd.f32 %v1571, %v1867
      %v1886 = vld [vmem:[%s273 + $0x8] sm:$0xf]
      %v1887 = vld [vmem:[%s273 + $0xc] sm:$0xf]
      %v1888 = vld [vmem:[%s273 + $0x10] sm:$0xf]
      %v1889 = vld [vmem:[%s273 + $0x14] sm:$0xf]
      %v1890 = vld [vmem:[%s273 + $0x18] sm:$0xf]
      %v1891 = vld [vmem:[%s273 + $0x1c] sm:$0xf]
      %v1892 = vld [vmem:[%s273 + $0x20] sm:$0xf]
      %v1893 = vld [vmem:[%s273 + $0x24] sm:$0xf]
      %v1894 = vld [vmem:[%s273 + $0x28] sm:$0xf]
      %v1895 = vld [vmem:[%s273 + $0x2c] sm:$0xf]
      %v1896 = vld [vmem:[%s273 + $0x30] sm:$0xf]
      %v1897 = vld [vmem:[%s273 + $0x34] sm:$0xf]
      %v1898 = vld [vmem:[%s273 + $0x38] sm:$0xf]
      %v1899 = vld [vmem:[%s273 + $0x3c] sm:$0xf]
      %v1900 = vld [vmem:[%s273 + $0x40] sm:$0xf]
      %v1901 = vld [vmem:[%s273 + $0x44] sm:$0xf]
      %s1902 = scalar_lea.vmem %s1, 384
      %v1903 = vld [vmem:[%s1902] sm:$0xf]
      %v1904 = vld [vmem:[%s1902 + $0x4] sm:$0xf]
      %v1905 = vld [vmem:[%s1902 + $0x8] sm:$0xf]
      %v1906 = vld [vmem:[%s1902 + $0xc] sm:$0xf]
      %v1907 = vld [vmem:[%s1902 + $0x10] sm:$0xf]
      %v1908 = vld [vmem:[%s1902 + $0x14] sm:$0xf]
      %v1909 = vld [vmem:[%s1902 + $0x18] sm:$0xf]
      %v1910 = vld [vmem:[%s1902 + $0x1c] sm:$0xf]
      %v1911 = vld [vmem:[%s1902 + $0x20] sm:$0xf]
      %v1912 = vld [vmem:[%s1902 + $0x24] sm:$0xf]
      %v1913 = vld [vmem:[%s1902 + $0x28] sm:$0xf]
      %v1914 = vld [vmem:[%s1902 + $0x2c] sm:$0xf]
      %v1915 = vld [vmem:[%s1902 + $0x30] sm:$0xf]
      %v1916 = vld [vmem:[%s1902 + $0x34] sm:$0xf]
      %v1917 = vld [vmem:[%s1902 + $0x38] sm:$0xf]
      %v1918 = vld [vmem:[%s1902 + $0x3c] sm:$0xf]
      %v1935 = vunpack.c.l.b16 %v1886
      %v1936 = vunpack.c.l.b16 %v1887
      %v1937 = vunpack.c.l.b16 %v1888
      %v1938 = vunpack.c.l.b16 %v1889
      %v1939 = vunpack.c.l.b16 %v1890
      %v1940 = vunpack.c.l.b16 %v1891
      %v1941 = vunpack.c.l.b16 %v1892
      %v1942 = vunpack.c.l.b16 %v1893
      %v1943 = vunpack.c.l.b16 %v1894
      %v1944 = vunpack.c.l.b16 %v1895
      %v1945 = vunpack.c.l.b16 %v1896
      %v1946 = vunpack.c.l.b16 %v1897
      %v1947 = vunpack.c.l.b16 %v1898
      %v1948 = vunpack.c.l.b16 %v1899
      %v1949 = vunpack.c.l.b16 %v1900
      %v1950 = vunpack.c.l.b16 %v1901
      %v1951 = vpack.c.b16 %v1936, %v1935
      %v1952 = vpack.c.b16 %v1938, %v1937
      %v1953 = vpack.c.b16 %v1940, %v1939
      %v1954 = vpack.c.b16 %v1942, %v1941
      %v1955 = vpack.c.b16 %v1944, %v1943
      %v1956 = vpack.c.b16 %v1946, %v1945
      %v1957 = vpack.c.b16 %v1948, %v1947
      %v1958 = vpack.c.b16 %v1950, %v1949
      %v1983 = vunpack.c.l.b16 %v1903
      %v1984 = vunpack.c.l.b16 %v1904
      %v1985 = vunpack.c.l.b16 %v1905
      %v1986 = vunpack.c.l.b16 %v1906
      %v1987 = vunpack.c.l.b16 %v1907
      %v1988 = vunpack.c.l.b16 %v1908
      %v1989 = vunpack.c.l.b16 %v1909
      %v1990 = vunpack.c.l.b16 %v1910
      %v1991 = vunpack.c.l.b16 %v1911
      %v1992 = vunpack.c.l.b16 %v1912
      %v1993 = vunpack.c.l.b16 %v1913
      %v1994 = vunpack.c.l.b16 %v1914
      %v1995 = vunpack.c.l.b16 %v1915
      %v1996 = vunpack.c.l.b16 %v1916
      %v1997 = vunpack.c.l.b16 %v1917
      %v1998 = vunpack.c.l.b16 %v1918
      %v1999 = vpack.c.b16 %v1984, %v1983
      %v2000 = vpack.c.b16 %v1986, %v1985
      %v2001 = vpack.c.b16 %v1988, %v1987
      %v2002 = vpack.c.b16 %v1990, %v1989
      %v2003 = vpack.c.b16 %v1992, %v1991
      %v2004 = vpack.c.b16 %v1994, %v1993
      %v2005 = vpack.c.b16 %v1996, %v1995
      %v2006 = vpack.c.b16 %v1998, %v1997
      %2015 = vmatprep.subr.bf16.mxu0 0
      %2016 = vmatpush1.bf16.msra.mxu0 %v1999
      %2017 = vmatprep.subr.bf16.mxu0 0
      %2018 = vmatpush1.bf16.msra.mxu0 %v2000
      %2019 = vmatprep.subr.bf16.mxu0 0
      %2020 = vmatpush1.bf16.msra.mxu0 %v2001
      %2021 = vmatprep.subr.bf16.mxu0 0
      %2022 = vmatpush1.bf16.msra.mxu0 %v2002
      %2023 = vmatprep.subr.bf16.mxu0 0
      %2024 = vmatpush1.bf16.msra.mxu0 %v2003
      %2025 = vmatprep.subr.bf16.mxu0 0
      %2026 = vmatpush1.bf16.msra.mxu0 %v2004
      %2027 = vmatprep.subr.bf16.mxu0 0
      %2028 = vmatpush1.bf16.msra.mxu0 %v2005
      %2029 = vmatprep.subr.bf16.mxu0 0
      %2030 = vmatpush1.bf16.msra.mxu0 %v2006
      %2031 = vmatprep.subr.bf16.mxu0 0
      %2032 = vmatpush1.bf16.msra.mxu0 0
      %2033 = vmatprep.subr.bf16.mxu0 0
      %2034 = vmatpush1.bf16.msra.mxu0 0
      %2035 = vmatprep.subr.bf16.mxu0 0
      %2036 = vmatpush1.bf16.msra.mxu0 0
      %2037 = vmatprep.subr.bf16.mxu0 0
      %2038 = vmatpush1.bf16.msra.mxu0 0
      %2039 = vmatprep.subr.bf16.mxu0 0
      %2040 = vmatpush1.bf16.msra.mxu0 0
      %2041 = vmatprep.subr.bf16.mxu0 0
      %2042 = vmatpush1.bf16.msra.mxu0 0
      %2043 = vmatprep.subr.bf16.mxu0 0
      %2044 = vmatpush1.bf16.msra.mxu0 0
      %2045 = vmatprep.subr.bf16.mxu0 0
      %2046 = vmatpush1.bf16.msra.mxu0 0
      %2047 = vmatprep.mubr.bf16.mxu0 0
      %2048 = vmatmul.mubr.bf16.gmra.mrb[0].mxu0 %v1951
      %v2049 = vpop.f32.mrb[0].mxu0
      %v2050 = vadd.f32 0.0, %v2049
      %v2051 = vpop.f32.mrb[0].mxu0
      %v2052 = vpop.f32.mrb[0].mxu0
      %v2053 = vadd.f32 0.0, %v2052
      %v2054 = vpop.f32.mrb[0].mxu0
      %2055 = vmatprep.mubr.bf16.mxu0 0
      %2056 = vmatmul.mubr.bf16.gmra.mrb[0].mxu0 %v1952
      %v2057 = vpop.f32.mrb[0].mxu0
      %v2058 = vadd.f32 0.0, %v2057
      %v2059 = vpop.f32.mrb[0].mxu0
      %v2060 = vpop.f32.mrb[0].mxu0
      %v2061 = vadd.f32 0.0, %v2060
      %v2062 = vpop.f32.mrb[0].mxu0
      %2063 = vmatprep.mubr.bf16.mxu0 0
      %2064 = vmatmul.mubr.bf16.gmra.mrb[0].mxu0 %v1953
      %v2065 = vpop.f32.mrb[0].mxu0
      %v2066 = vadd.f32 0.0, %v2065
      %v2067 = vpop.f32.mrb[0].mxu0
      %v2068 = vpop.f32.mrb[0].mxu0
      %v2069 = vadd.f32 0.0, %v2068
      %v2070 = vpop.f32.mrb[0].mxu0
      %2071 = vmatprep.mubr.bf16.mxu0 0
      %2072 = vmatmul.mubr.bf16.gmra.mrb[0].mxu0 %v1954
      %v2073 = vpop.f32.mrb[0].mxu0
      %v2074 = vadd.f32 0.0, %v2073
      %v2075 = vpop.f32.mrb[0].mxu0
      %v2076 = vpop.f32.mrb[0].mxu0
      %v2077 = vadd.f32 0.0, %v2076
      %v2078 = vpop.f32.mrb[0].mxu0
      %2079 = vmatprep.mubr.bf16.mxu0 0
      %2080 = vmatmul.mubr.bf16.gmra.mrb[0].mxu0 %v1955
      %v2081 = vpop.f32.mrb[0].mxu0
      %v2082 = vadd.f32 0.0, %v2081
      %v2083 = vpop.f32.mrb[0].mxu0
      %v2084 = vpop.f32.mrb[0].mxu0
      %v2085 = vadd.f32 0.0, %v2084
      %v2086 = vpop.f32.mrb[0].mxu0
      %2087 = vmatprep.mubr.bf16.mxu0 0
      %2088 = vmatmul.mubr.bf16.gmra.mrb[0].mxu0 %v1956
      %v2089 = vpop.f32.mrb[0].mxu0
      %v2090 = vadd.f32 0.0, %v2089
      %v2091 = vpop.f32.mrb[0].mxu0
      %v2092 = vpop.f32.mrb[0].mxu0
      %v2093 = vadd.f32 0.0, %v2092
      %v2094 = vpop.f32.mrb[0].mxu0
      %2095 = vmatprep.mubr.bf16.mxu0 0
      %2096 = vmatmul.mubr.bf16.gmra.mrb[0].mxu0 %v1957
      %v2097 = vpop.f32.mrb[0].mxu0
      %v2098 = vadd.f32 0.0, %v2097
      %v2099 = vpop.f32.mrb[0].mxu0
      %v2100 = vpop.f32.mrb[0].mxu0
      %v2101 = vadd.f32 0.0, %v2100
      %v2102 = vpop.f32.mrb[0].mxu0
      %2103 = vmatprep.mubr.bf16.mxu0 0
      %2104 = vmatmul.mubr.bf16.gmra.mrb[0].mxu0 %v1958
      %v2105 = vpop.f32.mrb[0].mxu0
      %v2106 = vadd.f32 0.0, %v2105
      %v2107 = vpop.f32.mrb[0].mxu0
      %v2108 = vpop.f32.mrb[0].mxu0
      %v2109 = vadd.f32 0.0, %v2108
      %v2110 = vpop.f32.mrb[0].mxu0
      %2111 = vdwg.mxu0
      %v2112 = vadd.f32 %v1870, %v2050
      %v2113 = vadd.f32 %v1871, %v2053
      %v2114 = vadd.f32 %v1872, %v2058
      %v2115 = vadd.f32 %v1873, %v2061
      %v2116 = vadd.f32 %v1874, %v2066
      %v2117 = vadd.f32 %v1875, %v2069
      %v2118 = vadd.f32 %v1876, %v2074
      %v2119 = vadd.f32 %v1877, %v2077
      %v2120 = vadd.f32 %v1878, %v2082
      %v2121 = vadd.f32 %v1879, %v2085
      %v2122 = vadd.f32 %v1880, %v2090
      %v2123 = vadd.f32 %v1881, %v2093
      %v2124 = vadd.f32 %v1882, %v2098
      %v2125 = vadd.f32 %v1883, %v2101
      %v2126 = vadd.f32 %v1884, %v2106
      %v2127 = vadd.f32 %v1885, %v2109
      %v2128 = vld [vmem:[%s528 + $0x8] sm:$0xf]
      %v2129 = vld [vmem:[%s528 + $0xc] sm:$0xf]
      %v2130 = vld [vmem:[%s528 + $0x10] sm:$0xf]
      %v2131 = vld [vmem:[%s528 + $0x14] sm:$0xf]
      %v2132 = vld [vmem:[%s528 + $0x18] sm:$0xf]
      %v2133 = vld [vmem:[%s528 + $0x1c] sm:$0xf]
      %v2134 = vld [vmem:[%s528 + $0x20] sm:$0xf]
      %v2135 = vld [vmem:[%s528 + $0x24] sm:$0xf]
      %v2136 = vld [vmem:[%s528 + $0x28] sm:$0xf]
      %v2137 = vld [vmem:[%s528 + $0x2c] sm:$0xf]
      %v2138 = vld [vmem:[%s528 + $0x30] sm:$0xf]
      %v2139 = vld [vmem:[%s528 + $0x34] sm:$0xf]
      %v2140 = vld [vmem:[%s528 + $0x38] sm:$0xf]
      %v2141 = vld [vmem:[%s528 + $0x3c] sm:$0xf]
      %v2142 = vld [vmem:[%s528 + $0x40] sm:$0xf]
      %v2143 = vld [vmem:[%s528 + $0x44] sm:$0xf]
      %s2144 = scalar_lea.vmem %s1, 448
      %v2145 = vld [vmem:[%s2144] sm:$0xf]
      %v2146 = vld [vmem:[%s2144 + $0x4] sm:$0xf]
      %v2147 = vld [vmem:[%s2144 + $0x8] sm:$0xf]
      %v2148 = vld [vmem:[%s2144 + $0xc] sm:$0xf]
      %v2149 = vld [vmem:[%s2144 + $0x10] sm:$0xf]
      %v2150 = vld [vmem:[%s2144 + $0x14] sm:$0xf]
      %v2151 = vld [vmem:[%s2144 + $0x18] sm:$0xf]
      %v2152 = vld [vmem:[%s2144 + $0x1c] sm:$0xf]
      %v2153 = vld [vmem:[%s2144 + $0x20] sm:$0xf]
      %v2154 = vld [vmem:[%s2144 + $0x24] sm:$0xf]
      %v2155 = vld [vmem:[%s2144 + $0x28] sm:$0xf]
      %v2156 = vld [vmem:[%s2144 + $0x2c] sm:$0xf]
      %v2157 = vld [vmem:[%s2144 + $0x30] sm:$0xf]
      %v2158 = vld [vmem:[%s2144 + $0x34] sm:$0xf]
      %v2159 = vld [vmem:[%s2144 + $0x38] sm:$0xf]
      %v2160 = vld [vmem:[%s2144 + $0x3c] sm:$0xf]
      %v2177 = vunpack.c.l.b16 %v2128
      %v2178 = vunpack.c.l.b16 %v2129
      %v2179 = vunpack.c.l.b16 %v2130
      %v2180 = vunpack.c.l.b16 %v2131
      %v2181 = vunpack.c.l.b16 %v2132
      %v2182 = vunpack.c.l.b16 %v2133
      %v2183 = vunpack.c.l.b16 %v2134
      %v2184 = vunpack.c.l.b16 %v2135
      %v2185 = vunpack.c.l.b16 %v2136
      %v2186 = vunpack.c.l.b16 %v2137
      %v2187 = vunpack.c.l.b16 %v2138
      %v2188 = vunpack.c.l.b16 %v2139
      %v2189 = vunpack.c.l.b16 %v2140
      %v2190 = vunpack.c.l.b16 %v2141
      %v2191 = vunpack.c.l.b16 %v2142
      %v2192 = vunpack.c.l.b16 %v2143
      %v2193 = vpack.c.b16 %v2178, %v2177
      %v2194 = vpack.c.b16 %v2180, %v2179
      %v2195 = vpack.c.b16 %v2182, %v2181
      %v2196 = vpack.c.b16 %v2184, %v2183
      %v2197 = vpack.c.b16 %v2186, %v2185
      %v2198 = vpack.c.b16 %v2188, %v2187
      %v2199 = vpack.c.b16 %v2190, %v2189
      %v2200 = vpack.c.b16 %v2192, %v2191
      %v2225 = vunpack.c.l.b16 %v2145
      %v2226 = vunpack.c.l.b16 %v2146
      %v2227 = vunpack.c.l.b16 %v2147
      %v2228 = vunpack.c.l.b16 %v2148
      %v2229 = vunpack.c.l.b16 %v2149
      %v2230 = vunpack.c.l.b16 %v2150
      %v2231 = vunpack.c.l.b16 %v2151
      %v2232 = vunpack.c.l.b16 %v2152
      %v2233 = vunpack.c.l.b16 %v2153
      %v2234 = vunpack.c.l.b16 %v2154
      %v2235 = vunpack.c.l.b16 %v2155
      %v2236 = vunpack.c.l.b16 %v2156
      %v2237 = vunpack.c.l.b16 %v2157
      %v2238 = vunpack.c.l.b16 %v2158
      %v2239 = vunpack.c.l.b16 %v2159
      %v2240 = vunpack.c.l.b16 %v2160
      %v2241 = vpack.c.b16 %v2226, %v2225
      %v2242 = vpack.c.b16 %v2228, %v2227
      %v2243 = vpack.c.b16 %v2230, %v2229
      %v2244 = vpack.c.b16 %v2232, %v2231
      %v2245 = vpack.c.b16 %v2234, %v2233
      %v2246 = vpack.c.b16 %v2236, %v2235
      %v2247 = vpack.c.b16 %v2238, %v2237
      %v2248 = vpack.c.b16 %v2240, %v2239
      %2257 = vmatprep.subr.bf16.mxu0 0
      %2258 = vmatpush1.bf16.msra.mxu0 %v2241
      %2259 = vmatprep.subr.bf16.mxu0 0
      %2260 = vmatpush1.bf16.msra.mxu0 %v2242
      %2261 = vmatprep.subr.bf16.mxu0 0
      %2262 = vmatpush1.bf16.msra.mxu0 %v2243
      %2263 = vmatprep.subr.bf16.mxu0 0
      %2264 = vmatpush1.bf16.msra.mxu0 %v2244
      %2265 = vmatprep.subr.bf16.mxu0 0
      %2266 = vmatpush1.bf16.msra.mxu0 %v2245
      %2267 = vmatprep.subr.bf16.mxu0 0
      %2268 = vmatpush1.bf16.msra.mxu0 %v2246
      %2269 = vmatprep.subr.bf16.mxu0 0
      %2270 = vmatpush1.bf16.msra.mxu0 %v2247
      %2271 = vmatprep.subr.bf16.mxu0 0
      %2272 = vmatpush1.bf16.msra.mxu0 %v2248
      %2273 = vmatprep.subr.bf16.mxu0 0
      %2274 = vmatpush1.bf16.msra.mxu0 0
      %2275 = vmatprep.subr.bf16.mxu0 0
      %2276 = vmatpush1.bf16.msra.mxu0 0
      %2277 = vmatprep.subr.bf16.mxu0 0
      %2278 = vmatpush1.bf16.msra.mxu0 0
      %2279 = vmatprep.subr.bf16.mxu0 0
      %2280 = vmatpush1.bf16.msra.mxu0 0
      %2281 = vmatprep.subr.bf16.mxu0 0
      %2282 = vmatpush1.bf16.msra.mxu0 0
      %2283 = vmatprep.subr.bf16.mxu0 0
      %2284 = vmatpush1.bf16.msra.mxu0 0
      %2285 = vmatprep.subr.bf16.mxu0 0
      %2286 = vmatpush1.bf16.msra.mxu0 0
      %2287 = vmatprep.subr.bf16.mxu0 0
      %2288 = vmatpush1.bf16.msra.mxu0 0
      %2289 = vmatprep.mubr.bf16.mxu0 0
      %2290 = vmatmul.mubr.bf16.gmra.mrb[0].mxu0 %v2193
      %v2291 = vpop.f32.mrb[0].mxu0
      %v2292 = vadd.f32 0.0, %v2291
      %v2293 = vpop.f32.mrb[0].mxu0
      %v2294 = vpop.f32.mrb[0].mxu0
      %v2295 = vadd.f32 0.0, %v2294
      %v2296 = vpop.f32.mrb[0].mxu0
      %2297 = vmatprep.mubr.bf16.mxu0 0
      %2298 = vmatmul.mubr.bf16.gmra.mrb[0].mxu0 %v2194
      %v2299 = vpop.f32.mrb[0].mxu0
      %v2300 = vadd.f32 0.0, %v2299
      %v2301 = vpop.f32.mrb[0].mxu0
      %v2302 = vpop.f32.mrb[0].mxu0
      %v2303 = vadd.f32 0.0, %v2302
      %v2304 = vpop.f32.mrb[0].mxu0
      %2305 = vmatprep.mubr.bf16.mxu0 0
      %2306 = vmatmul.mubr.bf16.gmra.mrb[0].mxu0 %v2195
      %v2307 = vpop.f32.mrb[0].mxu0
      %v2308 = vadd.f32 0.0, %v2307
      %v2309 = vpop.f32.mrb[0].mxu0
      %v2310 = vpop.f32.mrb[0].mxu0
      %v2311 = vadd.f32 0.0, %v2310
      %v2312 = vpop.f32.mrb[0].mxu0
      %2313 = vmatprep.mubr.bf16.mxu0 0
      %2314 = vmatmul.mubr.bf16.gmra.mrb[0].mxu0 %v2196
      %v2315 = vpop.f32.mrb[0].mxu0
      %v2316 = vadd.f32 0.0, %v2315
      %v2317 = vpop.f32.mrb[0].mxu0
      %v2318 = vpop.f32.mrb[0].mxu0
      %v2319 = vadd.f32 0.0, %v2318
      %v2320 = vpop.f32.mrb[0].mxu0
      %2321 = vmatprep.mubr.bf16.mxu0 0
      %2322 = vmatmul.mubr.bf16.gmra.mrb[0].mxu0 %v2197
      %v2323 = vpop.f32.mrb[0].mxu0
      %v2324 = vadd.f32 0.0, %v2323
      %v2325 = vpop.f32.mrb[0].mxu0
      %v2326 = vpop.f32.mrb[0].mxu0
      %v2327 = vadd.f32 0.0, %v2326
      %v2328 = vpop.f32.mrb[0].mxu0
      %2329 = vmatprep.mubr.bf16.mxu0 0
      %2330 = vmatmul.mubr.bf16.gmra.mrb[0].mxu0 %v2198
      %v2331 = vpop.f32.mrb[0].mxu0
      %v2332 = vadd.f32 0.0, %v2331
      %v2333 = vpop.f32.mrb[0].mxu0
      %v2334 = vpop.f32.mrb[0].mxu0
      %v2335 = vadd.f32 0.0, %v2334
      %v2336 = vpop.f32.mrb[0].mxu0
      %2337 = vmatprep.mubr.bf16.mxu0 0
      %2338 = vmatmul.mubr.bf16.gmra.mrb[0].mxu0 %v2199
      %v2339 = vpop.f32.mrb[0].mxu0
      %v2340 = vadd.f32 0.0, %v2339
      %v2341 = vpop.f32.mrb[0].mxu0
      %v2342 = vpop.f32.mrb[0].mxu0
      %v2343 = vadd.f32 0.0, %v2342
      %v2344 = vpop.f32.mrb[0].mxu0
      %2345 = vmatprep.mubr.bf16.mxu0 0
      %2346 = vmatmul.mubr.bf16.gmra.mrb[0].mxu0 %v2200
      %v2347 = vpop.f32.mrb[0].mxu0
      %v2348 = vadd.f32 0.0, %v2347
      %v2349 = vpop.f32.mrb[0].mxu0
      %v2350 = vpop.f32.mrb[0].mxu0
      %v2351 = vadd.f32 0.0, %v2350
      %v2352 = vpop.f32.mrb[0].mxu0
      %2353 = vdwg.mxu0
      %v2354 = vadd.f32 %v2112, %v2292
      %v2355 = vadd.f32 %v2113, %v2295
      %v2356 = vadd.f32 %v2114, %v2300
      %v2357 = vadd.f32 %v2115, %v2303
      %v2358 = vadd.f32 %v2116, %v2308
      %v2359 = vadd.f32 %v2117, %v2311
      %v2360 = vadd.f32 %v2118, %v2316
      %v2361 = vadd.f32 %v2119, %v2319
      %v2362 = vadd.f32 %v2120, %v2324
      %v2363 = vadd.f32 %v2121, %v2327
      %v2364 = vadd.f32 %v2122, %v2332
      %v2365 = vadd.f32 %v2123, %v2335
      %v2366 = vadd.f32 %v2124, %v2340
      %v2367 = vadd.f32 %v2125, %v2343
      %v2368 = vadd.f32 %v2126, %v2348
      %v2369 = vadd.f32 %v2127, %v2351
      %v2370 = vld [vmem:[%s273 + $0x8] sm:$0xf]
      %v2371 = vld [vmem:[%s273 + $0xc] sm:$0xf]
      %v2372 = vld [vmem:[%s273 + $0x10] sm:$0xf]
      %v2373 = vld [vmem:[%s273 + $0x14] sm:$0xf]
      %v2374 = vld [vmem:[%s273 + $0x18] sm:$0xf]
      %v2375 = vld [vmem:[%s273 + $0x1c] sm:$0xf]
      %v2376 = vld [vmem:[%s273 + $0x20] sm:$0xf]
      %v2377 = vld [vmem:[%s273 + $0x24] sm:$0xf]
      %v2378 = vld [vmem:[%s273 + $0x28] sm:$0xf]
      %v2379 = vld [vmem:[%s273 + $0x2c] sm:$0xf]
      %v2380 = vld [vmem:[%s273 + $0x30] sm:$0xf]
      %v2381 = vld [vmem:[%s273 + $0x34] sm:$0xf]
      %v2382 = vld [vmem:[%s273 + $0x38] sm:$0xf]
      %v2383 = vld [vmem:[%s273 + $0x3c] sm:$0xf]
      %v2384 = vld [vmem:[%s273 + $0x40] sm:$0xf]
      %v2385 = vld [vmem:[%s273 + $0x44] sm:$0xf]
      %v2386 = vld [vmem:[%s273 + $0x48] sm:$0x1]
      %s2387 = scalar_lea.vmem %s1, 512
      %v2388 = vld [vmem:[%s2387] sm:$0xf]
      %v2389 = vld [vmem:[%s2387 + $0x4] sm:$0xf]
      %v2390 = vld [vmem:[%s2387 + $0x8] sm:$0xf]
      %v2391 = vld [vmem:[%s2387 + $0xc] sm:$0xf]
      %v2392 = vld [vmem:[%s2387 + $0x10] sm:$0xf]
      %v2393 = vld [vmem:[%s2387 + $0x14] sm:$0xf]
      %v2394 = vld [vmem:[%s2387 + $0x18] sm:$0xf]
      %v2395 = vld [vmem:[%s2387 + $0x1c] sm:$0xf]
      %v2396 = vld [vmem:[%s2387 + $0x20] sm:$0xf]
      %v2397 = vld [vmem:[%s2387 + $0x24] sm:$0xf]
      %v2398 = vld [vmem:[%s2387 + $0x28] sm:$0xf]
      %v2399 = vld [vmem:[%s2387 + $0x2c] sm:$0xf]
      %v2400 = vld [vmem:[%s2387 + $0x30] sm:$0xf]
      %v2401 = vld [vmem:[%s2387 + $0x34] sm:$0xf]
      %v2402 = vld [vmem:[%s2387 + $0x38] sm:$0xf]
      %v2403 = vld [vmem:[%s2387 + $0x3c] sm:$0xf]
      %v2421 = vunpack.c.l.b16 %v2370
      %v2422 = vunpack.c.l.b16 %v2371
      %v2423 = vunpack.c.l.b16 %v2372
      %v2424 = vunpack.c.l.b16 %v2373
      %v2425 = vunpack.c.l.b16 %v2374
      %v2426 = vunpack.c.l.b16 %v2375
      %v2427 = vunpack.c.l.b16 %v2376
      %v2428 = vunpack.c.l.b16 %v2377
      %v2429 = vunpack.c.l.b16 %v2378
      %v2430 = vunpack.c.l.b16 %v2379
      %v2431 = vunpack.c.l.b16 %v2380
      %v2432 = vunpack.c.l.b16 %v2381
      %v2433 = vunpack.c.l.b16 %v2382
      %v2434 = vunpack.c.l.b16 %v2383
      %v2435 = vunpack.c.l.b16 %v2384
      %v2436 = vunpack.c.l.b16 %v2385
      %v2437 = vunpack.c.l.b16 %v2386
      %v2438 = vpack.c.b16 %v2422, %v2421
      %v2439 = vpack.c.b16 %v2424, %v2423
      %v2440 = vpack.c.b16 %v2426, %v2425
      %v2441 = vpack.c.b16 %v2428, %v2427
      %v2442 = vpack.c.b16 %v2430, %v2429
      %v2443 = vpack.c.b16 %v2432, %v2431
      %v2444 = vpack.c.b16 %v2434, %v2433
      %v2445 = vpack.c.b16 %v2436, %v2435
      %v2446 = vpack.c.b16 %v2437, %v2437
      %v2448 = vshrl.u32 %v2438, 16
      %v2450 = vshll.u32 %v2438, 16
      %v2452 = vrot.slane %v2450, 1
      %v2453 = vor.u32 %v2448, %v2452
      %v2455 = vshll.u32 %v2439, 16
      %v2457 = vrot.slane %v2455, 1
      %v2458 = vsel %vm848, %v2453, %v2457
      %v2459 = vshrl.u32 %v2439, 16
      %v2461 = vor.u32 %v2459, %v2457
      %v2463 = vshll.u32 %v2440, 16
      %v2465 = vrot.slane %v2463, 1
      %v2466 = vsel %vm848, %v2461, %v2465
      %v2467 = vshrl.u32 %v2440, 16
      %v2469 = vor.u32 %v2467, %v2465
      %v2471 = vshll.u32 %v2441, 16
      %v2473 = vrot.slane %v2471, 1
      %v2474 = vsel %vm848, %v2469, %v2473
      %v2475 = vshrl.u32 %v2441, 16
      %v2477 = vor.u32 %v2475, %v2473
      %v2479 = vshll.u32 %v2442, 16
      %v2481 = vrot.slane %v2479, 1
      %v2482 = vsel %vm848, %v2477, %v2481
      %v2483 = vshrl.u32 %v2442, 16
      %v2485 = vor.u32 %v2483, %v2481
      %v2487 = vshll.u32 %v2443, 16
      %v2489 = vrot.slane %v2487, 1
      %v2490 = vsel %vm848, %v2485, %v2489
      %v2491 = vshrl.u32 %v2443, 16
      %v2493 = vor.u32 %v2491, %v2489
      %v2495 = vshll.u32 %v2444, 16
      %v2497 = vrot.slane %v2495, 1
      %v2498 = vsel %vm848, %v2493, %v2497
      %v2499 = vshrl.u32 %v2444, 16
      %v2501 = vor.u32 %v2499, %v2497
      %v2503 = vshll.u32 %v2445, 16
      %v2505 = vrot.slane %v2503, 1
      %v2506 = vsel %vm848, %v2501, %v2505
      %v2507 = vshrl.u32 %v2445, 16
      %v2509 = vor.u32 %v2507, %v2505
      %v2511 = vshll.u32 %v2446, 16
      %v2513 = vrot.slane %v2511, 1
      %v2514 = vsel %vm848, %v2509, %v2513
      %v2539 = vunpack.c.l.b16 %v2388
      %v2540 = vunpack.c.l.b16 %v2389
      %v2541 = vunpack.c.l.b16 %v2390
      %v2542 = vunpack.c.l.b16 %v2391
      %v2543 = vunpack.c.l.b16 %v2392
      %v2544 = vunpack.c.l.b16 %v2393
      %v2545 = vunpack.c.l.b16 %v2394
      %v2546 = vunpack.c.l.b16 %v2395
      %v2547 = vunpack.c.l.b16 %v2396
      %v2548 = vunpack.c.l.b16 %v2397
      %v2549 = vunpack.c.l.b16 %v2398
      %v2550 = vunpack.c.l.b16 %v2399
      %v2551 = vunpack.c.l.b16 %v2400
      %v2552 = vunpack.c.l.b16 %v2401
      %v2553 = vunpack.c.l.b16 %v2402
      %v2554 = vunpack.c.l.b16 %v2403
      %v2555 = vpack.c.b16 %v2540, %v2539
      %v2556 = vpack.c.b16 %v2542, %v2541
      %v2557 = vpack.c.b16 %v2544, %v2543
      %v2558 = vpack.c.b16 %v2546, %v2545
      %v2559 = vpack.c.b16 %v2548, %v2547
      %v2560 = vpack.c.b16 %v2550, %v2549
      %v2561 = vpack.c.b16 %v2552, %v2551
      %v2562 = vpack.c.b16 %v2554, %v2553
      %2571 = vmatprep.subr.bf16.mxu0 0
      %2572 = vmatpush1.bf16.msra.mxu0 %v2555
      %2573 = vmatprep.subr.bf16.mxu0 0
      %2574 = vmatpush1.bf16.msra.mxu0 %v2556
      %2575 = vmatprep.subr.bf16.mxu0 0
      %2576 = vmatpush1.bf16.msra.mxu0 %v2557
      %2577 = vmatprep.subr.bf16.mxu0 0
      %2578 = vmatpush1.bf16.msra.mxu0 %v2558
      %2579 = vmatprep.subr.bf16.mxu0 0
      %2580 = vmatpush1.bf16.msra.mxu0 %v2559
      %2581 = vmatprep.subr.bf16.mxu0 0
      %2582 = vmatpush1.bf16.msra.mxu0 %v2560
      %2583 = vmatprep.subr.bf16.mxu0 0
      %2584 = vmatpush1.bf16.msra.mxu0 %v2561
      %2585 = vmatprep.subr.bf16.mxu0 0
      %2586 = vmatpush1.bf16.msra.mxu0 %v2562
      %2587 = vmatprep.subr.bf16.mxu0 0
      %2588 = vmatpush1.bf16.msra.mxu0 0
      %2589 = vmatprep.subr.bf16.mxu0 0
      %2590 = vmatpush1.bf16.msra.mxu0 0
      %2591 = vmatprep.subr.bf16.mxu0 0
      %2592 = vmatpush1.bf16.msra.mxu0 0
      %2593 = vmatprep.subr.bf16.mxu0 0
      %2594 = vmatpush1.bf16.msra.mxu0 0
      %2595 = vmatprep.subr.bf16.mxu0 0
      %2596 = vmatpush1.bf16.msra.mxu0 0
      %2597 = vmatprep.subr.bf16.mxu0 0
      %2598 = vmatpush1.bf16.msra.mxu0 0
      %2599 = vmatprep.subr.bf16.mxu0 0
      %2600 = vmatpush1.bf16.msra.mxu0 0
      %2601 = vmatprep.subr.bf16.mxu0 0
      %2602 = vmatpush1.bf16.msra.mxu0 0
      %2603 = vmatprep.mubr.bf16.mxu0 0
      %2604 = vmatmul.mubr.bf16.gmra.mrb[0].mxu0 %v2458
      %v2605 = vpop.f32.mrb[0].mxu0
      %v2606 = vadd.f32 0.0, %v2605
      %v2607 = vpop.f32.mrb[0].mxu0
      %v2608 = vpop.f32.mrb[0].mxu0
      %v2609 = vadd.f32 0.0, %v2608
      %v2610 = vpop.f32.mrb[0].mxu0
      %2611 = vmatprep.mubr.bf16.mxu0 0
      %2612 = vmatmul.mubr.bf16.gmra.mrb[0].mxu0 %v2466
      %v2613 = vpop.f32.mrb[0].mxu0
      %v2614 = vadd.f32 0.0, %v2613
      %v2615 = vpop.f32.mrb[0].mxu0
      %v2616 = vpop.f32.mrb[0].mxu0
      %v2617 = vadd.f32 0.0, %v2616
      %v2618 = vpop.f32.mrb[0].mxu0
      %2619 = vmatprep.mubr.bf16.mxu0 0
      %2620 = vmatmul.mubr.bf16.gmra.mrb[0].mxu0 %v2474
      %v2621 = vpop.f32.mrb[0].mxu0
      %v2622 = vadd.f32 0.0, %v2621
      %v2623 = vpop.f32.mrb[0].mxu0
      %v2624 = vpop.f32.mrb[0].mxu0
      %v2625 = vadd.f32 0.0, %v2624
      %v2626 = vpop.f32.mrb[0].mxu0
      %2627 = vmatprep.mubr.bf16.mxu0 0
      %2628 = vmatmul.mubr.bf16.gmra.mrb[0].mxu0 %v2482
      %v2629 = vpop.f32.mrb[0].mxu0
      %v2630 = vadd.f32 0.0, %v2629
      %v2631 = vpop.f32.mrb[0].mxu0
      %v2632 = vpop.f32.mrb[0].mxu0
      %v2633 = vadd.f32 0.0, %v2632
      %v2634 = vpop.f32.mrb[0].mxu0
      %2635 = vmatprep.mubr.bf16.mxu0 0
      %2636 = vmatmul.mubr.bf16.gmra.mrb[0].mxu0 %v2490
      %v2637 = vpop.f32.mrb[0].mxu0
      %v2638 = vadd.f32 0.0, %v2637
      %v2639 = vpop.f32.mrb[0].mxu0
      %v2640 = vpop.f32.mrb[0].mxu0
      %v2641 = vadd.f32 0.0, %v2640
      %v2642 = vpop.f32.mrb[0].mxu0
      %2643 = vmatprep.mubr.bf16.mxu0 0
      %2644 = vmatmul.mubr.bf16.gmra.mrb[0].mxu0 %v2498
      %v2645 = vpop.f32.mrb[0].mxu0
      %v2646 = vadd.f32 0.0, %v2645
      %v2647 = vpop.f32.mrb[0].mxu0
      %v2648 = vpop.f32.mrb[0].mxu0
      %v2649 = vadd.f32 0.0, %v2648
      %v2650 = vpop.f32.mrb[0].mxu0
      %2651 = vmatprep.mubr.bf16.mxu0 0
      %2652 = vmatmul.mubr.bf16.gmra.mrb[0].mxu0 %v2506
      %v2653 = vpop.f32.mrb[0].mxu0
      %v2654 = vadd.f32 0.0, %v2653
      %v2655 = vpop.f32.mrb[0].mxu0
      %v2656 = vpop.f32.mrb[0].mxu0
      %v2657 = vadd.f32 0.0, %v2656
      %v2658 = vpop.f32.mrb[0].mxu0
      %2659 = vmatprep.mubr.bf16.mxu0 0
      %2660 = vmatmul.mubr.bf16.gmra.mrb[0].mxu0 %v2514
      %v2661 = vpop.f32.mrb[0].mxu0
      %v2662 = vadd.f32 0.0, %v2661
      %v2663 = vpop.f32.mrb[0].mxu0
      %v2664 = vpop.f32.mrb[0].mxu0
      %v2665 = vadd.f32 0.0, %v2664
      %v2666 = vpop.f32.mrb[0].mxu0
      %2667 = vdwg.mxu0
      %v2668 = vadd.f32 %v2354, %v2606
      %v2669 = vadd.f32 %v2355, %v2609
      %v2670 = vadd.f32 %v2356, %v2614
      %v2671 = vadd.f32 %v2357, %v2617
      %v2672 = vadd.f32 %v2358, %v2622
      %v2673 = vadd.f32 %v2359, %v2625
      %v2674 = vadd.f32 %v2360, %v2630
      %v2675 = vadd.f32 %v2361, %v2633
      %v2676 = vadd.f32 %v2362, %v2638
      %v2677 = vadd.f32 %v2363, %v2641
      %v2678 = vadd.f32 %v2364, %v2646
      %v2679 = vadd.f32 %v2365, %v2649
      %v2680 = vadd.f32 %v2366, %v2654
      %v2681 = vadd.f32 %v2367, %v2657
      %v2682 = vadd.f32 %v2368, %v2662
      %v2683 = vadd.f32 %v2369, %v2665
      %v2684 = vlaneseq
      %v2685 = vshrl.u32 %v2684, 7
      %v2686 = vadd.s32 %v2685, 8
      %vm2687 = vcmp.lt.s32.totalorder %v2685, 8
      %vm2688 = vcmp.lt.s32.totalorder %v2686, 8
      %v2689 = vmax.f32 %v2668, 0.0
      %v2690 = vmax.f32 %v2669, 0.0
      %v2691 = vmax.f32 %v2670, 0.0
      %v2692 = vmax.f32 %v2671, 0.0
      %v2693 = vmax.f32 %v2672, 0.0
      %v2694 = vmax.f32 %v2673, 0.0
      %v2695 = vmax.f32 %v2674, 0.0
      %v2696 = vmax.f32 %v2675, 0.0
      %v2697 = vmax.f32 %v2676, 0.0
      %v2698 = vmax.f32 %v2677, 0.0
      %v2699 = vmax.f32 %v2678, 0.0
      %v2700 = vmax.f32 %v2679, 0.0
      %v2701 = vmax.f32 %v2680, 0.0
      %v2702 = vmax.f32 %v2681, 0.0
      %v2703 = vmax.f32 %v2682, 0.0
      %v2704 = vmax.f32 %v2683, 0.0
      %v2705 = vsel %vm2687, 1, 0
      %v2706 = vsel %vm2688, 1, 0
      %vm2707 = vcmp.eq.s32.totalorder %v2705, 1
      %vm2708 = vcmp.eq.s32.totalorder %v2706, 1
      %v2709 = vsel %vm2707, %v2689, 0.0
      %v2710 = vsel %vm2708, %v2690, 0.0
      %v2711 = vsel %vm2707, %v2691, 0.0
      %v2712 = vsel %vm2708, %v2692, 0.0
      %v2713 = vsel %vm2707, %v2693, 0.0
      %v2714 = vsel %vm2708, %v2694, 0.0
      %v2715 = vsel %vm2707, %v2695, 0.0
      %v2716 = vsel %vm2708, %v2696, 0.0
      %v2717 = vsel %vm2707, %v2697, 0.0
      %v2718 = vsel %vm2708, %v2698, 0.0
      %v2719 = vsel %vm2707, %v2699, 0.0
      %v2720 = vsel %vm2708, %v2700, 0.0
      %v2721 = vsel %vm2707, %v2701, 0.0
      %v2722 = vsel %vm2708, %v2702, 0.0
      %v2723 = vsel %vm2707, %v2703, 0.0
      %v2724 = vsel %vm2708, %v2704, 0.0
      %2725 = vst [vmem:[#allocation2] sm:$0xff] 0
      %2726 = vst [vmem:[#allocation2 + $0x8] sm:$0xff] 0
      %v2727 = vpack.c.bf16 %v2710, %v2709
      %v2728 = vpack.c.bf16 %v2712, %v2711
      %v2729 = vpack.c.bf16 %v2714, %v2713
      %v2730 = vpack.c.bf16 %v2716, %v2715
      %v2731 = vpack.c.bf16 %v2718, %v2717
      %v2732 = vpack.c.bf16 %v2720, %v2719
      %v2733 = vpack.c.bf16 %v2722, %v2721
      %v2734 = vpack.c.bf16 %v2724, %v2723
      %2735 = vst [vmem:[#allocation2 + $0x10] sm:$0xff] %v2727
      %2736 = vst [vmem:[#allocation2 + $0x18] sm:$0xff] %v2728
      %2737 = vst [vmem:[#allocation2 + $0x20] sm:$0xff] %v2729
      %2738 = vst [vmem:[#allocation2 + $0x28] sm:$0xff] %v2730
      %2739 = vst [vmem:[#allocation2 + $0x30] sm:$0xff] %v2731
      %2740 = vst [vmem:[#allocation2 + $0x38] sm:$0xff] %v2732
      %2741 = vst [vmem:[#allocation2 + $0x40] sm:$0xff] %v2733
      %2742 = vst [vmem:[#allocation2 + $0x48] sm:$0xff] %v2734
      %2743 = vst [vmem:[#allocation2 + $0x50] sm:$0xff] 0
      %v2744 = vld [vmem:[%s4] sm:$0x1]
      %v2746 = vlaneseq
      %v2747 = vshrl.u32 %v2746, 7
      %v2748 = vsub.s32 0, %v2747
      %v2749 = vrot.slane %v2744, %v2748
      %v2751 = vld [vmem:[#allocation2] sm:$0x80]
      %v2752 = vld [vmem:[#allocation2 + $0x8] sm:$0xff]
      %v2753 = vld [vmem:[#allocation2 + $0x10] sm:$0xff]
      %v2754 = vld [vmem:[#allocation2 + $0x18] sm:$0xff]
      %v2755 = vld [vmem:[#allocation2 + $0x20] sm:$0xff]
      %v2756 = vld [vmem:[#allocation2 + $0x28] sm:$0xff]
      %v2757 = vld [vmem:[#allocation2 + $0x30] sm:$0xff]
      %v2758 = vld [vmem:[#allocation2 + $0x38] sm:$0xff]
      %v2759 = vld [vmem:[#allocation2 + $0x40] sm:$0xff]
      %v2760 = vld [vmem:[%s3] sm:$0xf]
      %v2761 = vld [vmem:[%s3 + $0x4] sm:$0xf]
      %v2762 = vld [vmem:[%s3 + $0x8] sm:$0xf]
      %v2763 = vld [vmem:[%s3 + $0xc] sm:$0xf]
      %v2764 = vld [vmem:[%s3 + $0x10] sm:$0xf]
      %v2765 = vld [vmem:[%s3 + $0x14] sm:$0xf]
      %v2766 = vld [vmem:[%s3 + $0x18] sm:$0xf]
      %v2767 = vld [vmem:[%s3 + $0x1c] sm:$0xf]
      %v2768 = vld [vmem:[%s3 + $0x20] sm:$0xf]
      %v2769 = vld [vmem:[%s3 + $0x24] sm:$0xf]
      %v2770 = vld [vmem:[%s3 + $0x28] sm:$0xf]
      %v2771 = vld [vmem:[%s3 + $0x2c] sm:$0xf]
      %v2772 = vld [vmem:[%s3 + $0x30] sm:$0xf]
      %v2773 = vld [vmem:[%s3 + $0x34] sm:$0xf]
      %v2774 = vld [vmem:[%s3 + $0x38] sm:$0xf]
      %v2775 = vld [vmem:[%s3 + $0x3c] sm:$0xf]
      %vm2776 = vsmask.f32 256
      %v2778 = vshrl.u32 %v2751, 16
      %v2780 = vrot.slane %v2778, 7
      %v2782 = vshrl.u32 %v2752, 16
      %v2784 = vrot.slane %v2782, 7
      %v2785 = vshll.u32 %v2752, 16
      %v2787 = vor.u32 %v2784, %v2785
      %v2788 = vsel %vm2776, %v2780, %v2787
      %v2790 = vshrl.u32 %v2753, 16
      %v2792 = vrot.slane %v2790, 7
      %v2793 = vshll.u32 %v2753, 16
      %v2795 = vor.u32 %v2792, %v2793
      %v2796 = vsel %vm2776, %v2784, %v2795
      %v2798 = vshrl.u32 %v2754, 16
      %v2800 = vrot.slane %v2798, 7
      %v2801 = vshll.u32 %v2754, 16
      %v2803 = vor.u32 %v2800, %v2801
      %v2804 = vsel %vm2776, %v2792, %v2803
      %v2806 = vshrl.u32 %v2755, 16
      %v2808 = vrot.slane %v2806, 7
      %v2809 = vshll.u32 %v2755, 16
      %v2811 = vor.u32 %v2808, %v2809
      %v2812 = vsel %vm2776, %v2800, %v2811
      %v2814 = vshrl.u32 %v2756, 16
      %v2816 = vrot.slane %v2814, 7
      %v2817 = vshll.u32 %v2756, 16
      %v2819 = vor.u32 %v2816, %v2817
      %v2820 = vsel %vm2776, %v2808, %v2819
      %v2822 = vshrl.u32 %v2757, 16
      %v2824 = vrot.slane %v2822, 7
      %v2825 = vshll.u32 %v2757, 16
      %v2827 = vor.u32 %v2824, %v2825
      %v2828 = vsel %vm2776, %v2816, %v2827
      %v2830 = vshrl.u32 %v2758, 16
      %v2832 = vrot.slane %v2830, 7
      %v2833 = vshll.u32 %v2758, 16
      %v2835 = vor.u32 %v2832, %v2833
      %v2836 = vsel %vm2776, %v2824, %v2835
      %v2838 = vshrl.u32 %v2759, 16
      %v2840 = vrot.slane %v2838, 7
      %v2841 = vshll.u32 %v2759, 16
      %v2843 = vor.u32 %v2840, %v2841
      %v2844 = vsel %vm2776, %v2832, %v2843
      %v2869 = vunpack.c.l.b16 %v2760
      %v2870 = vunpack.c.l.b16 %v2761
      %v2871 = vunpack.c.l.b16 %v2762
      %v2872 = vunpack.c.l.b16 %v2763
      %v2873 = vunpack.c.l.b16 %v2764
      %v2874 = vunpack.c.l.b16 %v2765
      %v2875 = vunpack.c.l.b16 %v2766
      %v2876 = vunpack.c.l.b16 %v2767
      %v2877 = vunpack.c.l.b16 %v2768
      %v2878 = vunpack.c.l.b16 %v2769
      %v2879 = vunpack.c.l.b16 %v2770
      %v2880 = vunpack.c.l.b16 %v2771
      %v2881 = vunpack.c.l.b16 %v2772
      %v2882 = vunpack.c.l.b16 %v2773
      %v2883 = vunpack.c.l.b16 %v2774
      %v2884 = vunpack.c.l.b16 %v2775
      %v2885 = vpack.c.b16 %v2870, %v2869
      %v2886 = vpack.c.b16 %v2872, %v2871
      %v2887 = vpack.c.b16 %v2874, %v2873
      %v2888 = vpack.c.b16 %v2876, %v2875
      %v2889 = vpack.c.b16 %v2878, %v2877
      %v2890 = vpack.c.b16 %v2880, %v2879
      %v2891 = vpack.c.b16 %v2882, %v2881
      %v2892 = vpack.c.b16 %v2884, %v2883
      %2901 = vmatprep.subr.bf16.mxu0 0
      %2902 = vmatpush1.bf16.msra.mxu0 %v2885
      %2903 = vmatprep.subr.bf16.mxu0 0
      %2904 = vmatpush1.bf16.msra.mxu0 %v2886
      %2905 = vmatprep.subr.bf16.mxu0 0
      %2906 = vmatpush1.bf16.msra.mxu0 %v2887
      %2907 = vmatprep.subr.bf16.mxu0 0
      %2908 = vmatpush1.bf16.msra.mxu0 %v2888
      %2909 = vmatprep.subr.bf16.mxu0 0
      %2910 = vmatpush1.bf16.msra.mxu0 %v2889
      %2911 = vmatprep.subr.bf16.mxu0 0
      %2912 = vmatpush1.bf16.msra.mxu0 %v2890
      %2913 = vmatprep.subr.bf16.mxu0 0
      %2914 = vmatpush1.bf16.msra.mxu0 %v2891
      %2915 = vmatprep.subr.bf16.mxu0 0
      %2916 = vmatpush1.bf16.msra.mxu0 %v2892
      %2917 = vmatprep.subr.bf16.mxu0 0
      %2918 = vmatpush1.bf16.msra.mxu0 0
      %2919 = vmatprep.subr.bf16.mxu0 0
      %2920 = vmatpush1.bf16.msra.mxu0 0
      %2921 = vmatprep.subr.bf16.mxu0 0
      %2922 = vmatpush1.bf16.msra.mxu0 0
      %2923 = vmatprep.subr.bf16.mxu0 0
      %2924 = vmatpush1.bf16.msra.mxu0 0
      %2925 = vmatprep.subr.bf16.mxu0 0
      %2926 = vmatpush1.bf16.msra.mxu0 0
      %2927 = vmatprep.subr.bf16.mxu0 0
      %2928 = vmatpush1.bf16.msra.mxu0 0
      %2929 = vmatprep.subr.bf16.mxu0 0
      %2930 = vmatpush1.bf16.msra.mxu0 0
      %2931 = vmatprep.subr.bf16.mxu0 0
      %2932 = vmatpush1.bf16.msra.mxu0 0
      %2933 = vmatprep.mubr.bf16.mxu0 0
      %2934 = vmatmul.mubr.bf16.gmra.mrb[0].mxu0 %v2788
      %v2935 = vpop.f32.mrb[0].mxu0
      %v2936 = vadd.f32 0.0, %v2935
      %v2937 = vpop.f32.mrb[0].mxu0
      %v2938 = vpop.f32.mrb[0].mxu0
      %v2939 = vpop.f32.mrb[0].mxu0
      %2940 = vmatprep.mubr.bf16.mxu0 0
      %2941 = vmatmul.mubr.bf16.gmra.mrb[0].mxu0 %v2796
      %v2942 = vpop.f32.mrb[0].mxu0
      %v2943 = vadd.f32 0.0, %v2942
      %v2944 = vpop.f32.mrb[0].mxu0
      %v2945 = vpop.f32.mrb[0].mxu0
      %v2946 = vpop.f32.mrb[0].mxu0
      %2947 = vmatprep.mubr.bf16.mxu0 0
      %2948 = vmatmul.mubr.bf16.gmra.mrb[0].mxu0 %v2804
      %v2949 = vpop.f32.mrb[0].mxu0
      %v2950 = vadd.f32 0.0, %v2949
      %v2951 = vpop.f32.mrb[0].mxu0
      %v2952 = vpop.f32.mrb[0].mxu0
      %v2953 = vpop.f32.mrb[0].mxu0
      %2954 = vmatprep.mubr.bf16.mxu0 0
      %2955 = vmatmul.mubr.bf16.gmra.mrb[0].mxu0 %v2812
      %v2956 = vpop.f32.mrb[0].mxu0
      %v2957 = vadd.f32 0.0, %v2956
      %v2958 = vpop.f32.mrb[0].mxu0
      %v2959 = vpop.f32.mrb[0].mxu0
      %v2960 = vpop.f32.mrb[0].mxu0
      %2961 = vmatprep.mubr.bf16.mxu0 0
      %2962 = vmatmul.mubr.bf16.gmra.mrb[0].mxu0 %v2820
      %v2963 = vpop.f32.mrb[0].mxu0
      %v2964 = vadd.f32 0.0, %v2963
      %v2965 = vpop.f32.mrb[0].mxu0
      %v2966 = vpop.f32.mrb[0].mxu0
      %v2967 = vpop.f32.mrb[0].mxu0
      %2968 = vmatprep.mubr.bf16.mxu0 0
      %2969 = vmatmul.mubr.bf16.gmra.mrb[0].mxu0 %v2828
      %v2970 = vpop.f32.mrb[0].mxu0
      %v2971 = vadd.f32 0.0, %v2970
      %v2972 = vpop.f32.mrb[0].mxu0
      %v2973 = vpop.f32.mrb[0].mxu0
      %v2974 = vpop.f32.mrb[0].mxu0
      %2975 = vmatprep.mubr.bf16.mxu0 0
      %2976 = vmatmul.mubr.bf16.gmra.mrb[0].mxu0 %v2836
      %v2977 = vpop.f32.mrb[0].mxu0
      %v2978 = vadd.f32 0.0, %v2977
      %v2979 = vpop.f32.mrb[0].mxu0
      %v2980 = vpop.f32.mrb[0].mxu0
      %v2981 = vpop.f32.mrb[0].mxu0
      %2982 = vmatprep.mubr.bf16.mxu0 0
      %2983 = vmatmul.mubr.bf16.gmra.mrb[0].mxu0 %v2844
      %v2984 = vpop.f32.mrb[0].mxu0
      %v2985 = vadd.f32 0.0, %v2984
      %v2986 = vpop.f32.mrb[0].mxu0
      %v2987 = vpop.f32.mrb[0].mxu0
      %v2988 = vpop.f32.mrb[0].mxu0
      %2989 = vdwg.mxu0
      %v2990 = vadd.f32 %v2749, %v2936
      %v2991 = vadd.f32 %v2749, %v2943
      %v2992 = vadd.f32 %v2749, %v2950
      %v2993 = vadd.f32 %v2749, %v2957
      %v2994 = vadd.f32 %v2749, %v2964
      %v2995 = vadd.f32 %v2749, %v2971
      %v2996 = vadd.f32 %v2749, %v2978
      %v2997 = vadd.f32 %v2749, %v2985
      %s2998 = scalar_lea.vmem %s3, 64
      %v2999 = vld [vmem:[%s2998] sm:$0xf]
      %v3000 = vld [vmem:[%s2998 + $0x4] sm:$0xf]
      %v3001 = vld [vmem:[%s2998 + $0x8] sm:$0xf]
      %v3002 = vld [vmem:[%s2998 + $0xc] sm:$0xf]
      %v3003 = vld [vmem:[%s2998 + $0x10] sm:$0xf]
      %v3004 = vld [vmem:[%s2998 + $0x14] sm:$0xf]
      %v3005 = vld [vmem:[%s2998 + $0x18] sm:$0xf]
      %v3006 = vld [vmem:[%s2998 + $0x1c] sm:$0xf]
      %v3007 = vld [vmem:[%s2998 + $0x20] sm:$0xf]
      %v3008 = vld [vmem:[%s2998 + $0x24] sm:$0xf]
      %v3009 = vld [vmem:[%s2998 + $0x28] sm:$0xf]
      %v3010 = vld [vmem:[%s2998 + $0x2c] sm:$0xf]
      %v3011 = vld [vmem:[%s2998 + $0x30] sm:$0xf]
      %v3012 = vld [vmem:[%s2998 + $0x34] sm:$0xf]
      %v3013 = vld [vmem:[%s2998 + $0x38] sm:$0xf]
      %v3014 = vld [vmem:[%s2998 + $0x3c] sm:$0xf]
      %v3031 = vunpack.c.l.b16 %v2999
      %v3032 = vunpack.c.l.b16 %v3000
      %v3033 = vunpack.c.l.b16 %v3001
      %v3034 = vunpack.c.l.b16 %v3002
      %v3035 = vunpack.c.l.b16 %v3003
      %v3036 = vunpack.c.l.b16 %v3004
      %v3037 = vunpack.c.l.b16 %v3005
      %v3038 = vunpack.c.l.b16 %v3006
      %v3039 = vunpack.c.l.b16 %v3007
      %v3040 = vunpack.c.l.b16 %v3008
      %v3041 = vunpack.c.l.b16 %v3009
      %v3042 = vunpack.c.l.b16 %v3010
      %v3043 = vunpack.c.l.b16 %v3011
      %v3044 = vunpack.c.l.b16 %v3012
      %v3045 = vunpack.c.l.b16 %v3013
      %v3046 = vunpack.c.l.b16 %v3014
      %v3047 = vpack.c.b16 %v3032, %v3031
      %v3048 = vpack.c.b16 %v3034, %v3033
      %v3049 = vpack.c.b16 %v3036, %v3035
      %v3050 = vpack.c.b16 %v3038, %v3037
      %v3051 = vpack.c.b16 %v3040, %v3039
      %v3052 = vpack.c.b16 %v3042, %v3041
      %v3053 = vpack.c.b16 %v3044, %v3043
      %v3054 = vpack.c.b16 %v3046, %v3045
      %3063 = vmatprep.subr.bf16.mxu0 0
      %3064 = vmatpush1.bf16.msra.mxu0 %v3047
      %3065 = vmatprep.subr.bf16.mxu0 0
      %3066 = vmatpush1.bf16.msra.mxu0 %v3048
      %3067 = vmatprep.subr.bf16.mxu0 0
      %3068 = vmatpush1.bf16.msra.mxu0 %v3049
      %3069 = vmatprep.subr.bf16.mxu0 0
      %3070 = vmatpush1.bf16.msra.mxu0 %v3050
      %3071 = vmatprep.subr.bf16.mxu0 0
      %3072 = vmatpush1.bf16.msra.mxu0 %v3051
      %3073 = vmatprep.subr.bf16.mxu0 0
      %3074 = vmatpush1.bf16.msra.mxu0 %v3052
      %3075 = vmatprep.subr.bf16.mxu0 0
      %3076 = vmatpush1.bf16.msra.mxu0 %v3053
      %3077 = vmatprep.subr.bf16.mxu0 0
      %3078 = vmatpush1.bf16.msra.mxu0 %v3054
      %3079 = vmatprep.subr.bf16.mxu0 0
      %3080 = vmatpush1.bf16.msra.mxu0 0
      %3081 = vmatprep.subr.bf16.mxu0 0
      %3082 = vmatpush1.bf16.msra.mxu0 0
      %3083 = vmatprep.subr.bf16.mxu0 0
      %3084 = vmatpush1.bf16.msra.mxu0 0
      %3085 = vmatprep.subr.bf16.mxu0 0
      %3086 = vmatpush1.bf16.msra.mxu0 0
      %3087 = vmatprep.subr.bf16.mxu0 0
      %3088 = vmatpush1.bf16.msra.mxu0 0
      %3089 = vmatprep.subr.bf16.mxu0 0
      %3090 = vmatpush1.bf16.msra.mxu0 0
      %3091 = vmatprep.subr.bf16.mxu0 0
      %3092 = vmatpush1.bf16.msra.mxu0 0
      %3093 = vmatprep.subr.bf16.mxu0 0
      %3094 = vmatpush1.bf16.msra.mxu0 0
      %3095 = vmatprep.mubr.bf16.mxu0 0
      %3096 = vmatmul.mubr.bf16.gmra.mrb[0].mxu0 %v2752
      %v3097 = vpop.f32.mrb[0].mxu0
      %v3098 = vadd.f32 0.0, %v3097
      %v3099 = vpop.f32.mrb[0].mxu0
      %v3100 = vpop.f32.mrb[0].mxu0
      %v3101 = vpop.f32.mrb[0].mxu0
      %3102 = vmatprep.mubr.bf16.mxu0 0
      %3103 = vmatmul.mubr.bf16.gmra.mrb[0].mxu0 %v2753
      %v3104 = vpop.f32.mrb[0].mxu0
      %v3105 = vadd.f32 0.0, %v3104
      %v3106 = vpop.f32.mrb[0].mxu0
      %v3107 = vpop.f32.mrb[0].mxu0
      %v3108 = vpop.f32.mrb[0].mxu0
      %3109 = vmatprep.mubr.bf16.mxu0 0
      %3110 = vmatmul.mubr.bf16.gmra.mrb[0].mxu0 %v2754
      %v3111 = vpop.f32.mrb[0].mxu0
      %v3112 = vadd.f32 0.0, %v3111
      %v3113 = vpop.f32.mrb[0].mxu0
      %v3114 = vpop.f32.mrb[0].mxu0
      %v3115 = vpop.f32.mrb[0].mxu0
      %3116 = vmatprep.mubr.bf16.mxu0 0
      %3117 = vmatmul.mubr.bf16.gmra.mrb[0].mxu0 %v2755
      %v3118 = vpop.f32.mrb[0].mxu0
      %v3119 = vadd.f32 0.0, %v3118
      %v3120 = vpop.f32.mrb[0].mxu0
      %v3121 = vpop.f32.mrb[0].mxu0
      %v3122 = vpop.f32.mrb[0].mxu0
      %3123 = vmatprep.mubr.bf16.mxu0 0
      %3124 = vmatmul.mubr.bf16.gmra.mrb[0].mxu0 %v2756
      %v3125 = vpop.f32.mrb[0].mxu0
      %v3126 = vadd.f32 0.0, %v3125
      %v3127 = vpop.f32.mrb[0].mxu0
      %v3128 = vpop.f32.mrb[0].mxu0
      %v3129 = vpop.f32.mrb[0].mxu0
      %3130 = vmatprep.mubr.bf16.mxu0 0
      %3131 = vmatmul.mubr.bf16.gmra.mrb[0].mxu0 %v2757
      %v3132 = vpop.f32.mrb[0].mxu0
      %v3133 = vadd.f32 0.0, %v3132
      %v3134 = vpop.f32.mrb[0].mxu0
      %v3135 = vpop.f32.mrb[0].mxu0
      %v3136 = vpop.f32.mrb[0].mxu0
      %3137 = vmatprep.mubr.bf16.mxu0 0
      %3138 = vmatmul.mubr.bf16.gmra.mrb[0].mxu0 %v2758
      %v3139 = vpop.f32.mrb[0].mxu0
      %v3140 = vadd.f32 0.0, %v3139
      %v3141 = vpop.f32.mrb[0].mxu0
      %v3142 = vpop.f32.mrb[0].mxu0
      %v3143 = vpop.f32.mrb[0].mxu0
      %3144 = vmatprep.mubr.bf16.mxu0 0
      %3145 = vmatmul.mubr.bf16.gmra.mrb[0].mxu0 %v2759
      %v3146 = vpop.f32.mrb[0].mxu0
      %v3147 = vadd.f32 0.0, %v3146
      %v3148 = vpop.f32.mrb[0].mxu0
      %v3149 = vpop.f32.mrb[0].mxu0
      %v3150 = vpop.f32.mrb[0].mxu0
      %3151 = vdwg.mxu0
      %v3152 = vadd.f32 %v2990, %v3098
      %v3153 = vadd.f32 %v2991, %v3105
      %v3154 = vadd.f32 %v2992, %v3112
      %v3155 = vadd.f32 %v2993, %v3119
      %v3156 = vadd.f32 %v2994, %v3126
      %v3157 = vadd.f32 %v2995, %v3133
      %v3158 = vadd.f32 %v2996, %v3140
      %v3159 = vadd.f32 %v2997, %v3147
      %v3160 = vld [vmem:[#allocation2 + $0x8] sm:$0xff]
      %v3161 = vld [vmem:[#allocation2 + $0x10] sm:$0xff]
      %v3162 = vld [vmem:[#allocation2 + $0x18] sm:$0xff]
      %v3163 = vld [vmem:[#allocation2 + $0x20] sm:$0xff]
      %v3164 = vld [vmem:[#allocation2 + $0x28] sm:$0xff]
      %v3165 = vld [vmem:[#allocation2 + $0x30] sm:$0xff]
      %v3166 = vld [vmem:[#allocation2 + $0x38] sm:$0xff]
      %v3167 = vld [vmem:[#allocation2 + $0x40] sm:$0xff]
      %v3168 = vld [vmem:[#allocation2 + $0x48] sm:$0x1]
      %s3169 = scalar_lea.vmem %s3, 128
      %v3170 = vld [vmem:[%s3169] sm:$0xf]
      %v3171 = vld [vmem:[%s3169 + $0x4] sm:$0xf]
      %v3172 = vld [vmem:[%s3169 + $0x8] sm:$0xf]
      %v3173 = vld [vmem:[%s3169 + $0xc] sm:$0xf]
      %v3174 = vld [vmem:[%s3169 + $0x10] sm:$0xf]
      %v3175 = vld [vmem:[%s3169 + $0x14] sm:$0xf]
      %v3176 = vld [vmem:[%s3169 + $0x18] sm:$0xf]
      %v3177 = vld [vmem:[%s3169 + $0x1c] sm:$0xf]
      %v3178 = vld [vmem:[%s3169 + $0x20] sm:$0xf]
      %v3179 = vld [vmem:[%s3169 + $0x24] sm:$0xf]
      %v3180 = vld [vmem:[%s3169 + $0x28] sm:$0xf]
      %v3181 = vld [vmem:[%s3169 + $0x2c] sm:$0xf]
      %v3182 = vld [vmem:[%s3169 + $0x30] sm:$0xf]
      %v3183 = vld [vmem:[%s3169 + $0x34] sm:$0xf]
      %v3184 = vld [vmem:[%s3169 + $0x38] sm:$0xf]
      %v3185 = vld [vmem:[%s3169 + $0x3c] sm:$0xf]
      %v3187 = vshrl.u32 %v3160, 16
      %v3189 = vshll.u32 %v3160, 16
      %v3191 = vrot.slane %v3189, 1
      %v3192 = vor.u32 %v3187, %v3191
      %v3194 = vshll.u32 %v3161, 16
      %v3196 = vrot.slane %v3194, 1
      %v3197 = vsel %vm848, %v3192, %v3196
      %v3198 = vshrl.u32 %v3161, 16
      %v3200 = vor.u32 %v3198, %v3196
      %v3202 = vshll.u32 %v3162, 16
      %v3204 = vrot.slane %v3202, 1
      %v3205 = vsel %vm848, %v3200, %v3204
      %v3206 = vshrl.u32 %v3162, 16
      %v3208 = vor.u32 %v3206, %v3204
      %v3210 = vshll.u32 %v3163, 16
      %v3212 = vrot.slane %v3210, 1
      %v3213 = vsel %vm848, %v3208, %v3212
      %v3214 = vshrl.u32 %v3163, 16
      %v3216 = vor.u32 %v3214, %v3212
      %v3218 = vshll.u32 %v3164, 16
      %v3220 = vrot.slane %v3218, 1
      %v3221 = vsel %vm848, %v3216, %v3220
      %v3222 = vshrl.u32 %v3164, 16
      %v3224 = vor.u32 %v3222, %v3220
      %v3226 = vshll.u32 %v3165, 16
      %v3228 = vrot.slane %v3226, 1
      %v3229 = vsel %vm848, %v3224, %v3228
      %v3230 = vshrl.u32 %v3165, 16
      %v3232 = vor.u32 %v3230, %v3228
      %v3234 = vshll.u32 %v3166, 16
      %v3236 = vrot.slane %v3234, 1
      %v3237 = vsel %vm848, %v3232, %v3236
      %v3238 = vshrl.u32 %v3166, 16
      %v3240 = vor.u32 %v3238, %v3236
      %v3242 = vshll.u32 %v3167, 16
      %v3244 = vrot.slane %v3242, 1
      %v3245 = vsel %vm848, %v3240, %v3244
      %v3246 = vshrl.u32 %v3167, 16
      %v3248 = vor.u32 %v3246, %v3244
      %v3250 = vshll.u32 %v3168, 16
      %v3252 = vrot.slane %v3250, 1
      %v3253 = vsel %vm848, %v3248, %v3252
      %v3278 = vunpack.c.l.b16 %v3170
      %v3279 = vunpack.c.l.b16 %v3171
      %v3280 = vunpack.c.l.b16 %v3172
      %v3281 = vunpack.c.l.b16 %v3173
      %v3282 = vunpack.c.l.b16 %v3174
      %v3283 = vunpack.c.l.b16 %v3175
      %v3284 = vunpack.c.l.b16 %v3176
      %v3285 = vunpack.c.l.b16 %v3177
      %v3286 = vunpack.c.l.b16 %v3178
      %v3287 = vunpack.c.l.b16 %v3179
      %v3288 = vunpack.c.l.b16 %v3180
      %v3289 = vunpack.c.l.b16 %v3181
      %v3290 = vunpack.c.l.b16 %v3182
      %v3291 = vunpack.c.l.b16 %v3183
      %v3292 = vunpack.c.l.b16 %v3184
      %v3293 = vunpack.c.l.b16 %v3185
      %v3294 = vpack.c.b16 %v3279, %v3278
      %v3295 = vpack.c.b16 %v3281, %v3280
      %v3296 = vpack.c.b16 %v3283, %v3282
      %v3297 = vpack.c.b16 %v3285, %v3284
      %v3298 = vpack.c.b16 %v3287, %v3286
      %v3299 = vpack.c.b16 %v3289, %v3288
      %v3300 = vpack.c.b16 %v3291, %v3290
      %v3301 = vpack.c.b16 %v3293, %v3292
      %3310 = vmatprep.subr.bf16.mxu0 0
      %3311 = vmatpush1.bf16.msra.mxu0 %v3294
      %3312 = vmatprep.subr.bf16.mxu0 0
      %3313 = vmatpush1.bf16.msra.mxu0 %v3295
      %3314 = vmatprep.subr.bf16.mxu0 0
      %3315 = vmatpush1.bf16.msra.mxu0 %v3296
      %3316 = vmatprep.subr.bf16.mxu0 0
      %3317 = vmatpush1.bf16.msra.mxu0 %v3297
      %3318 = vmatprep.subr.bf16.mxu0 0
      %3319 = vmatpush1.bf16.msra.mxu0 %v3298
      %3320 = vmatprep.subr.bf16.mxu0 0
      %3321 = vmatpush1.bf16.msra.mxu0 %v3299
      %3322 = vmatprep.subr.bf16.mxu0 0
      %3323 = vmatpush1.bf16.msra.mxu0 %v3300
      %3324 = vmatprep.subr.bf16.mxu0 0
      %3325 = vmatpush1.bf16.msra.mxu0 %v3301
      %3326 = vmatprep.subr.bf16.mxu0 0
      %3327 = vmatpush1.bf16.msra.mxu0 0
      %3328 = vmatprep.subr.bf16.mxu0 0
      %3329 = vmatpush1.bf16.msra.mxu0 0
      %3330 = vmatprep.subr.bf16.mxu0 0
      %3331 = vmatpush1.bf16.msra.mxu0 0
      %3332 = vmatprep.subr.bf16.mxu0 0
      %3333 = vmatpush1.bf16.msra.mxu0 0
      %3334 = vmatprep.subr.bf16.mxu0 0
      %3335 = vmatpush1.bf16.msra.mxu0 0
      %3336 = vmatprep.subr.bf16.mxu0 0
      %3337 = vmatpush1.bf16.msra.mxu0 0
      %3338 = vmatprep.subr.bf16.mxu0 0
      %3339 = vmatpush1.bf16.msra.mxu0 0
      %3340 = vmatprep.subr.bf16.mxu0 0
      %3341 = vmatpush1.bf16.msra.mxu0 0
      %3342 = vmatprep.mubr.bf16.mxu0 0
      %3343 = vmatmul.mubr.bf16.gmra.mrb[0].mxu0 %v3197
      %v3344 = vpop.f32.mrb[0].mxu0
      %v3345 = vadd.f32 0.0, %v3344
      %v3346 = vpop.f32.mrb[0].mxu0
      %v3347 = vpop.f32.mrb[0].mxu0
      %v3348 = vpop.f32.mrb[0].mxu0
      %3349 = vmatprep.mubr.bf16.mxu0 0
      %3350 = vmatmul.mubr.bf16.gmra.mrb[0].mxu0 %v3205
      %v3351 = vpop.f32.mrb[0].mxu0
      %v3352 = vadd.f32 0.0, %v3351
      %v3353 = vpop.f32.mrb[0].mxu0
      %v3354 = vpop.f32.mrb[0].mxu0
      %v3355 = vpop.f32.mrb[0].mxu0
      %3356 = vmatprep.mubr.bf16.mxu0 0
      %3357 = vmatmul.mubr.bf16.gmra.mrb[0].mxu0 %v3213
      %v3358 = vpop.f32.mrb[0].mxu0
      %v3359 = vadd.f32 0.0, %v3358
      %v3360 = vpop.f32.mrb[0].mxu0
      %v3361 = vpop.f32.mrb[0].mxu0
      %v3362 = vpop.f32.mrb[0].mxu0
      %3363 = vmatprep.mubr.bf16.mxu0 0
      %3364 = vmatmul.mubr.bf16.gmra.mrb[0].mxu0 %v3221
      %v3365 = vpop.f32.mrb[0].mxu0
      %v3366 = vadd.f32 0.0, %v3365
      %v3367 = vpop.f32.mrb[0].mxu0
      %v3368 = vpop.f32.mrb[0].mxu0
      %v3369 = vpop.f32.mrb[0].mxu0
      %3370 = vmatprep.mubr.bf16.mxu0 0
      %3371 = vmatmul.mubr.bf16.gmra.mrb[0].mxu0 %v3229
      %v3372 = vpop.f32.mrb[0].mxu0
      %v3373 = vadd.f32 0.0, %v3372
      %v3374 = vpop.f32.mrb[0].mxu0
      %v3375 = vpop.f32.mrb[0].mxu0
      %v3376 = vpop.f32.mrb[0].mxu0
      %3377 = vmatprep.mubr.bf16.mxu0 0
      %3378 = vmatmul.mubr.bf16.gmra.mrb[0].mxu0 %v3237
      %v3379 = vpop.f32.mrb[0].mxu0
      %v3380 = vadd.f32 0.0, %v3379
      %v3381 = vpop.f32.mrb[0].mxu0
      %v3382 = vpop.f32.mrb[0].mxu0
      %v3383 = vpop.f32.mrb[0].mxu0
      %3384 = vmatprep.mubr.bf16.mxu0 0
      %3385 = vmatmul.mubr.bf16.gmra.mrb[0].mxu0 %v3245
      %v3386 = vpop.f32.mrb[0].mxu0
      %v3387 = vadd.f32 0.0, %v3386
      %v3388 = vpop.f32.mrb[0].mxu0
      %v3389 = vpop.f32.mrb[0].mxu0
      %v3390 = vpop.f32.mrb[0].mxu0
      %3391 = vmatprep.mubr.bf16.mxu0 0
      %3392 = vmatmul.mubr.bf16.gmra.mrb[0].mxu0 %v3253
      %v3393 = vpop.f32.mrb[0].mxu0
      %v3394 = vadd.f32 0.0, %v3393
      %v3395 = vpop.f32.mrb[0].mxu0
      %v3396 = vpop.f32.mrb[0].mxu0
      %v3397 = vpop.f32.mrb[0].mxu0
      %3398 = vdwg.mxu0
      %v3399 = vadd.f32 %v3152, %v3345
      %v3400 = vadd.f32 %v3153, %v3352
      %v3401 = vadd.f32 %v3154, %v3359
      %v3402 = vadd.f32 %v3155, %v3366
      %v3403 = vadd.f32 %v3156, %v3373
      %v3404 = vadd.f32 %v3157, %v3380
      %v3405 = vadd.f32 %v3158, %v3387
      %v3406 = vadd.f32 %v3159, %v3394
      %v3407 = vld [vmem:[#allocation2 + $0x8] sm:$0x80]
      %v3408 = vld [vmem:[#allocation2 + $0x48] sm:$0xff]
      %s3409 = scalar_lea.vmem %s3, 192
      %v3410 = vld [vmem:[%s3409] sm:$0xf]
      %v3411 = vld [vmem:[%s3409 + $0x4] sm:$0xf]
      %v3412 = vld [vmem:[%s3409 + $0x8] sm:$0xf]
      %v3413 = vld [vmem:[%s3409 + $0xc] sm:$0xf]
      %v3414 = vld [vmem:[%s3409 + $0x10] sm:$0xf]
      %v3415 = vld [vmem:[%s3409 + $0x14] sm:$0xf]
      %v3416 = vld [vmem:[%s3409 + $0x18] sm:$0xf]
      %v3417 = vld [vmem:[%s3409 + $0x1c] sm:$0xf]
      %v3418 = vld [vmem:[%s3409 + $0x20] sm:$0xf]
      %v3419 = vld [vmem:[%s3409 + $0x24] sm:$0xf]
      %v3420 = vld [vmem:[%s3409 + $0x28] sm:$0xf]
      %v3421 = vld [vmem:[%s3409 + $0x2c] sm:$0xf]
      %v3422 = vld [vmem:[%s3409 + $0x30] sm:$0xf]
      %v3423 = vld [vmem:[%s3409 + $0x34] sm:$0xf]
      %v3424 = vld [vmem:[%s3409 + $0x38] sm:$0xf]
      %v3425 = vld [vmem:[%s3409 + $0x3c] sm:$0xf]
      %v3427 = vshrl.u32 %v3407, 16
      %v3429 = vrot.slane %v3427, 7
      %v3430 = vrot.slane %v3198, 7
      %v3431 = vor.u32 %v3430, %v3194
      %v3432 = vsel %vm2776, %v3429, %v3431
      %v3433 = vrot.slane %v3206, 7
      %v3434 = vor.u32 %v3433, %v3202
      %v3435 = vsel %vm2776, %v3430, %v3434
      %v3436 = vrot.slane %v3214, 7
      %v3437 = vor.u32 %v3436, %v3210
      %v3438 = vsel %vm2776, %v3433, %v3437
      %v3439 = vrot.slane %v3222, 7
      %v3440 = vor.u32 %v3439, %v3218
      %v3441 = vsel %vm2776, %v3436, %v3440
      %v3442 = vrot.slane %v3230, 7
      %v3443 = vor.u32 %v3442, %v3226
      %v3444 = vsel %vm2776, %v3439, %v3443
      %v3445 = vrot.slane %v3238, 7
      %v3446 = vor.u32 %v3445, %v3234
      %v3447 = vsel %vm2776, %v3442, %v3446
      %v3448 = vrot.slane %v3246, 7
      %v3449 = vor.u32 %v3448, %v3242
      %v3450 = vsel %vm2776, %v3445, %v3449
      %v3452 = vshrl.u32 %v3408, 16
      %v3454 = vrot.slane %v3452, 7
      %v3455 = vshll.u32 %v3408, 16
      %v3457 = vor.u32 %v3454, %v3455
      %v3458 = vsel %vm2776, %v3448, %v3457
      %v3483 = vunpack.c.l.b16 %v3410
      %v3484 = vunpack.c.l.b16 %v3411
      %v3485 = vunpack.c.l.b16 %v3412
      %v3486 = vunpack.c.l.b16 %v3413
      %v3487 = vunpack.c.l.b16 %v3414
      %v3488 = vunpack.c.l.b16 %v3415
      %v3489 = vunpack.c.l.b16 %v3416
      %v3490 = vunpack.c.l.b16 %v3417
      %v3491 = vunpack.c.l.b16 %v3418
      %v3492 = vunpack.c.l.b16 %v3419
      %v3493 = vunpack.c.l.b16 %v3420
      %v3494 = vunpack.c.l.b16 %v3421
      %v3495 = vunpack.c.l.b16 %v3422
      %v3496 = vunpack.c.l.b16 %v3423
      %v3497 = vunpack.c.l.b16 %v3424
      %v3498 = vunpack.c.l.b16 %v3425
      %v3499 = vpack.c.b16 %v3484, %v3483
      %v3500 = vpack.c.b16 %v3486, %v3485
      %v3501 = vpack.c.b16 %v3488, %v3487
      %v3502 = vpack.c.b16 %v3490, %v3489
      %v3503 = vpack.c.b16 %v3492, %v3491
      %v3504 = vpack.c.b16 %v3494, %v3493
      %v3505 = vpack.c.b16 %v3496, %v3495
      %v3506 = vpack.c.b16 %v3498, %v3497
      %3515 = vmatprep.subr.bf16.mxu0 0
      %3516 = vmatpush1.bf16.msra.mxu0 %v3499
      %3517 = vmatprep.subr.bf16.mxu0 0
      %3518 = vmatpush1.bf16.msra.mxu0 %v3500
      %3519 = vmatprep.subr.bf16.mxu0 0
      %3520 = vmatpush1.bf16.msra.mxu0 %v3501
      %3521 = vmatprep.subr.bf16.mxu0 0
      %3522 = vmatpush1.bf16.msra.mxu0 %v3502
      %3523 = vmatprep.subr.bf16.mxu0 0
      %3524 = vmatpush1.bf16.msra.mxu0 %v3503
      %3525 = vmatprep.subr.bf16.mxu0 0
      %3526 = vmatpush1.bf16.msra.mxu0 %v3504
      %3527 = vmatprep.subr.bf16.mxu0 0
      %3528 = vmatpush1.bf16.msra.mxu0 %v3505
      %3529 = vmatprep.subr.bf16.mxu0 0
      %3530 = vmatpush1.bf16.msra.mxu0 %v3506
      %3531 = vmatprep.subr.bf16.mxu0 0
      %3532 = vmatpush1.bf16.msra.mxu0 0
      %3533 = vmatprep.subr.bf16.mxu0 0
      %3534 = vmatpush1.bf16.msra.mxu0 0
      %3535 = vmatprep.subr.bf16.mxu0 0
      %3536 = vmatpush1.bf16.msra.mxu0 0
      %3537 = vmatprep.subr.bf16.mxu0 0
      %3538 = vmatpush1.bf16.msra.mxu0 0
      %3539 = vmatprep.subr.bf16.mxu0 0
      %3540 = vmatpush1.bf16.msra.mxu0 0
      %3541 = vmatprep.subr.bf16.mxu0 0
      %3542 = vmatpush1.bf16.msra.mxu0 0
      %3543 = vmatprep.subr.bf16.mxu0 0
      %3544 = vmatpush1.bf16.msra.mxu0 0
      %3545 = vmatprep.subr.bf16.mxu0 0
      %3546 = vmatpush1.bf16.msra.mxu0 0
      %3547 = vmatprep.mubr.bf16.mxu0 0
      %3548 = vmatmul.mubr.bf16.gmra.mrb[0].mxu0 %v3432
      %v3549 = vpop.f32.mrb[0].mxu0
      %v3550 = vadd.f32 0.0, %v3549
      %v3551 = vpop.f32.mrb[0].mxu0
      %v3552 = vpop.f32.mrb[0].mxu0
      %v3553 = vpop.f32.mrb[0].mxu0
      %3554 = vmatprep.mubr.bf16.mxu0 0
      %3555 = vmatmul.mubr.bf16.gmra.mrb[0].mxu0 %v3435
      %v3556 = vpop.f32.mrb[0].mxu0
      %v3557 = vadd.f32 0.0, %v3556
      %v3558 = vpop.f32.mrb[0].mxu0
      %v3559 = vpop.f32.mrb[0].mxu0
      %v3560 = vpop.f32.mrb[0].mxu0
      %3561 = vmatprep.mubr.bf16.mxu0 0
      %3562 = vmatmul.mubr.bf16.gmra.mrb[0].mxu0 %v3438
      %v3563 = vpop.f32.mrb[0].mxu0
      %v3564 = vadd.f32 0.0, %v3563
      %v3565 = vpop.f32.mrb[0].mxu0
      %v3566 = vpop.f32.mrb[0].mxu0
      %v3567 = vpop.f32.mrb[0].mxu0
      %3568 = vmatprep.mubr.bf16.mxu0 0
      %3569 = vmatmul.mubr.bf16.gmra.mrb[0].mxu0 %v3441
      %v3570 = vpop.f32.mrb[0].mxu0
      %v3571 = vadd.f32 0.0, %v3570
      %v3572 = vpop.f32.mrb[0].mxu0
      %v3573 = vpop.f32.mrb[0].mxu0
      %v3574 = vpop.f32.mrb[0].mxu0
      %3575 = vmatprep.mubr.bf16.mxu0 0
      %3576 = vmatmul.mubr.bf16.gmra.mrb[0].mxu0 %v3444
      %v3577 = vpop.f32.mrb[0].mxu0
      %v3578 = vadd.f32 0.0, %v3577
      %v3579 = vpop.f32.mrb[0].mxu0
      %v3580 = vpop.f32.mrb[0].mxu0
      %v3581 = vpop.f32.mrb[0].mxu0
      %3582 = vmatprep.mubr.bf16.mxu0 0
      %3583 = vmatmul.mubr.bf16.gmra.mrb[0].mxu0 %v3447
      %v3584 = vpop.f32.mrb[0].mxu0
      %v3585 = vadd.f32 0.0, %v3584
      %v3586 = vpop.f32.mrb[0].mxu0
      %v3587 = vpop.f32.mrb[0].mxu0
      %v3588 = vpop.f32.mrb[0].mxu0
      %3589 = vmatprep.mubr.bf16.mxu0 0
      %3590 = vmatmul.mubr.bf16.gmra.mrb[0].mxu0 %v3450
      %v3591 = vpop.f32.mrb[0].mxu0
      %v3592 = vadd.f32 0.0, %v3591
      %v3593 = vpop.f32.mrb[0].mxu0
      %v3594 = vpop.f32.mrb[0].mxu0
      %v3595 = vpop.f32.mrb[0].mxu0
      %3596 = vmatprep.mubr.bf16.mxu0 0
      %3597 = vmatmul.mubr.bf16.gmra.mrb[0].mxu0 %v3458
      %v3598 = vpop.f32.mrb[0].mxu0
      %v3599 = vadd.f32 0.0, %v3598
      %v3600 = vpop.f32.mrb[0].mxu0
      %v3601 = vpop.f32.mrb[0].mxu0
      %v3602 = vpop.f32.mrb[0].mxu0
      %3603 = vdwg.mxu0
      %v3604 = vadd.f32 %v3399, %v3550
      %v3605 = vadd.f32 %v3400, %v3557
      %v3606 = vadd.f32 %v3401, %v3564
      %v3607 = vadd.f32 %v3402, %v3571
      %v3608 = vadd.f32 %v3403, %v3578
      %v3609 = vadd.f32 %v3404, %v3585
      %v3610 = vadd.f32 %v3405, %v3592
      %v3611 = vadd.f32 %v3406, %v3599
      %s3612 = scalar_lea.vmem %s3, 256
      %v3613 = vld [vmem:[%s3612] sm:$0xf]
      %v3614 = vld [vmem:[%s3612 + $0x4] sm:$0xf]
      %v3615 = vld [vmem:[%s3612 + $0x8] sm:$0xf]
      %v3616 = vld [vmem:[%s3612 + $0xc] sm:$0xf]
      %v3617 = vld [vmem:[%s3612 + $0x10] sm:$0xf]
      %v3618 = vld [vmem:[%s3612 + $0x14] sm:$0xf]
      %v3619 = vld [vmem:[%s3612 + $0x18] sm:$0xf]
      %v3620 = vld [vmem:[%s3612 + $0x1c] sm:$0xf]
      %v3621 = vld [vmem:[%s3612 + $0x20] sm:$0xf]
      %v3622 = vld [vmem:[%s3612 + $0x24] sm:$0xf]
      %v3623 = vld [vmem:[%s3612 + $0x28] sm:$0xf]
      %v3624 = vld [vmem:[%s3612 + $0x2c] sm:$0xf]
      %v3625 = vld [vmem:[%s3612 + $0x30] sm:$0xf]
      %v3626 = vld [vmem:[%s3612 + $0x34] sm:$0xf]
      %v3627 = vld [vmem:[%s3612 + $0x38] sm:$0xf]
      %v3628 = vld [vmem:[%s3612 + $0x3c] sm:$0xf]
      %v3645 = vunpack.c.l.b16 %v3613
      %v3646 = vunpack.c.l.b16 %v3614
      %v3647 = vunpack.c.l.b16 %v3615
      %v3648 = vunpack.c.l.b16 %v3616
      %v3649 = vunpack.c.l.b16 %v3617
      %v3650 = vunpack.c.l.b16 %v3618
      %v3651 = vunpack.c.l.b16 %v3619
      %v3652 = vunpack.c.l.b16 %v3620
      %v3653 = vunpack.c.l.b16 %v3621
      %v3654 = vunpack.c.l.b16 %v3622
      %v3655 = vunpack.c.l.b16 %v3623
      %v3656 = vunpack.c.l.b16 %v3624
      %v3657 = vunpack.c.l.b16 %v3625
      %v3658 = vunpack.c.l.b16 %v3626
      %v3659 = vunpack.c.l.b16 %v3627
      %v3660 = vunpack.c.l.b16 %v3628
      %v3661 = vpack.c.b16 %v3646, %v3645
      %v3662 = vpack.c.b16 %v3648, %v3647
      %v3663 = vpack.c.b16 %v3650, %v3649
      %v3664 = vpack.c.b16 %v3652, %v3651
      %v3665 = vpack.c.b16 %v3654, %v3653
      %v3666 = vpack.c.b16 %v3656, %v3655
      %v3667 = vpack.c.b16 %v3658, %v3657
      %v3668 = vpack.c.b16 %v3660, %v3659
      %3677 = vmatprep.subr.bf16.mxu0 0
      %3678 = vmatpush1.bf16.msra.mxu0 %v3661
      %3679 = vmatprep.subr.bf16.mxu0 0
      %3680 = vmatpush1.bf16.msra.mxu0 %v3662
      %3681 = vmatprep.subr.bf16.mxu0 0
      %3682 = vmatpush1.bf16.msra.mxu0 %v3663
      %3683 = vmatprep.subr.bf16.mxu0 0
      %3684 = vmatpush1.bf16.msra.mxu0 %v3664
      %3685 = vmatprep.subr.bf16.mxu0 0
      %3686 = vmatpush1.bf16.msra.mxu0 %v3665
      %3687 = vmatprep.subr.bf16.mxu0 0
      %3688 = vmatpush1.bf16.msra.mxu0 %v3666
      %3689 = vmatprep.subr.bf16.mxu0 0
      %3690 = vmatpush1.bf16.msra.mxu0 %v3667
      %3691 = vmatprep.subr.bf16.mxu0 0
      %3692 = vmatpush1.bf16.msra.mxu0 %v3668
      %3693 = vmatprep.subr.bf16.mxu0 0
      %3694 = vmatpush1.bf16.msra.mxu0 0
      %3695 = vmatprep.subr.bf16.mxu0 0
      %3696 = vmatpush1.bf16.msra.mxu0 0
      %3697 = vmatprep.subr.bf16.mxu0 0
      %3698 = vmatpush1.bf16.msra.mxu0 0
      %3699 = vmatprep.subr.bf16.mxu0 0
      %3700 = vmatpush1.bf16.msra.mxu0 0
      %3701 = vmatprep.subr.bf16.mxu0 0
      %3702 = vmatpush1.bf16.msra.mxu0 0
      %3703 = vmatprep.subr.bf16.mxu0 0
      %3704 = vmatpush1.bf16.msra.mxu0 0
      %3705 = vmatprep.subr.bf16.mxu0 0
      %3706 = vmatpush1.bf16.msra.mxu0 0
      %3707 = vmatprep.subr.bf16.mxu0 0
      %3708 = vmatpush1.bf16.msra.mxu0 0
      %3709 = vmatprep.mubr.bf16.mxu0 0
      %3710 = vmatmul.mubr.bf16.gmra.mrb[0].mxu0 %v3161
      %v3711 = vpop.f32.mrb[0].mxu0
      %v3712 = vadd.f32 0.0, %v3711
      %v3713 = vpop.f32.mrb[0].mxu0
      %v3714 = vpop.f32.mrb[0].mxu0
      %v3715 = vpop.f32.mrb[0].mxu0
      %3716 = vmatprep.mubr.bf16.mxu0 0
      %3717 = vmatmul.mubr.bf16.gmra.mrb[0].mxu0 %v3162
      %v3718 = vpop.f32.mrb[0].mxu0
      %v3719 = vadd.f32 0.0, %v3718
      %v3720 = vpop.f32.mrb[0].mxu0
      %v3721 = vpop.f32.mrb[0].mxu0
      %v3722 = vpop.f32.mrb[0].mxu0
      %3723 = vmatprep.mubr.bf16.mxu0 0
      %3724 = vmatmul.mubr.bf16.gmra.mrb[0].mxu0 %v3163
      %v3725 = vpop.f32.mrb[0].mxu0
      %v3726 = vadd.f32 0.0, %v3725
      %v3727 = vpop.f32.mrb[0].mxu0
      %v3728 = vpop.f32.mrb[0].mxu0
      %v3729 = vpop.f32.mrb[0].mxu0
      %3730 = vmatprep.mubr.bf16.mxu0 0
      %3731 = vmatmul.mubr.bf16.gmra.mrb[0].mxu0 %v3164
      %v3732 = vpop.f32.mrb[0].mxu0
      %v3733 = vadd.f32 0.0, %v3732
      %v3734 = vpop.f32.mrb[0].mxu0
      %v3735 = vpop.f32.mrb[0].mxu0
      %v3736 = vpop.f32.mrb[0].mxu0
      %3737 = vmatprep.mubr.bf16.mxu0 0
      %3738 = vmatmul.mubr.bf16.gmra.mrb[0].mxu0 %v3165
      %v3739 = vpop.f32.mrb[0].mxu0
      %v3740 = vadd.f32 0.0, %v3739
      %v3741 = vpop.f32.mrb[0].mxu0
      %v3742 = vpop.f32.mrb[0].mxu0
      %v3743 = vpop.f32.mrb[0].mxu0
      %3744 = vmatprep.mubr.bf16.mxu0 0
      %3745 = vmatmul.mubr.bf16.gmra.mrb[0].mxu0 %v3166
      %v3746 = vpop.f32.mrb[0].mxu0
      %v3747 = vadd.f32 0.0, %v3746
      %v3748 = vpop.f32.mrb[0].mxu0
      %v3749 = vpop.f32.mrb[0].mxu0
      %v3750 = vpop.f32.mrb[0].mxu0
      %3751 = vmatprep.mubr.bf16.mxu0 0
      %3752 = vmatmul.mubr.bf16.gmra.mrb[0].mxu0 %v3167
      %v3753 = vpop.f32.mrb[0].mxu0
      %v3754 = vadd.f32 0.0, %v3753
      %v3755 = vpop.f32.mrb[0].mxu0
      %v3756 = vpop.f32.mrb[0].mxu0
      %v3757 = vpop.f32.mrb[0].mxu0
      %3758 = vmatprep.mubr.bf16.mxu0 0
      %3759 = vmatmul.mubr.bf16.gmra.mrb[0].mxu0 %v3408
      %v3760 = vpop.f32.mrb[0].mxu0
      %v3761 = vadd.f32 0.0, %v3760
      %v3762 = vpop.f32.mrb[0].mxu0
      %v3763 = vpop.f32.mrb[0].mxu0
      %v3764 = vpop.f32.mrb[0].mxu0
      %3765 = vdwg.mxu0
      %v3766 = vadd.f32 %v3604, %v3712
      %v3767 = vadd.f32 %v3605, %v3719
      %v3768 = vadd.f32 %v3606, %v3726
      %v3769 = vadd.f32 %v3607, %v3733
      %v3770 = vadd.f32 %v3608, %v3740
      %v3771 = vadd.f32 %v3609, %v3747
      %v3772 = vadd.f32 %v3610, %v3754
      %v3773 = vadd.f32 %v3611, %v3761
      %v3774 = vld [vmem:[#allocation2 + $0x10] sm:$0xff]
      %v3775 = vld [vmem:[#allocation2 + $0x18] sm:$0xff]
      %v3776 = vld [vmem:[#allocation2 + $0x20] sm:$0xff]
      %v3777 = vld [vmem:[#allocation2 + $0x28] sm:$0xff]
      %v3778 = vld [vmem:[#allocation2 + $0x30] sm:$0xff]
      %v3779 = vld [vmem:[#allocation2 + $0x38] sm:$0xff]
      %v3780 = vld [vmem:[#allocation2 + $0x40] sm:$0xff]
      %v3781 = vld [vmem:[#allocation2 + $0x48] sm:$0xff]
      %v3782 = vld [vmem:[#allocation2 + $0x50] sm:$0x1]
      %s3783 = scalar_lea.vmem %s3, 320
      %v3784 = vld [vmem:[%s3783] sm:$0xf]
      %v3785 = vld [vmem:[%s3783 + $0x4] sm:$0xf]
      %v3786 = vld [vmem:[%s3783 + $0x8] sm:$0xf]
      %v3787 = vld [vmem:[%s3783 + $0xc] sm:$0xf]
      %v3788 = vld [vmem:[%s3783 + $0x10] sm:$0xf]
      %v3789 = vld [vmem:[%s3783 + $0x14] sm:$0xf]
      %v3790 = vld [vmem:[%s3783 + $0x18] sm:$0xf]
      %v3791 = vld [vmem:[%s3783 + $0x1c] sm:$0xf]
      %v3792 = vld [vmem:[%s3783 + $0x20] sm:$0xf]
      %v3793 = vld [vmem:[%s3783 + $0x24] sm:$0xf]
      %v3794 = vld [vmem:[%s3783 + $0x28] sm:$0xf]
      %v3795 = vld [vmem:[%s3783 + $0x2c] sm:$0xf]
      %v3796 = vld [vmem:[%s3783 + $0x30] sm:$0xf]
      %v3797 = vld [vmem:[%s3783 + $0x34] sm:$0xf]
      %v3798 = vld [vmem:[%s3783 + $0x38] sm:$0xf]
      %v3799 = vld [vmem:[%s3783 + $0x3c] sm:$0xf]
      %v3801 = vshrl.u32 %v3774, 16
      %v3803 = vshll.u32 %v3774, 16
      %v3805 = vrot.slane %v3803, 1
      %v3806 = vor.u32 %v3801, %v3805
      %v3808 = vshll.u32 %v3775, 16
      %v3810 = vrot.slane %v3808, 1
      %v3811 = vsel %vm848, %v3806, %v3810
      %v3812 = vshrl.u32 %v3775, 16
      %v3814 = vor.u32 %v3812, %v3810
      %v3816 = vshll.u32 %v3776, 16
      %v3818 = vrot.slane %v3816, 1
      %v3819 = vsel %vm848, %v3814, %v3818
      %v3820 = vshrl.u32 %v3776, 16
      %v3822 = vor.u32 %v3820, %v3818
      %v3824 = vshll.u32 %v3777, 16
      %v3826 = vrot.slane %v3824, 1
      %v3827 = vsel %vm848, %v3822, %v3826
      %v3828 = vshrl.u32 %v3777, 16
      %v3830 = vor.u32 %v3828, %v3826
      %v3832 = vshll.u32 %v3778, 16
      %v3834 = vrot.slane %v3832, 1
      %v3835 = vsel %vm848, %v3830, %v3834
      %v3836 = vshrl.u32 %v3778, 16
      %v3838 = vor.u32 %v3836, %v3834
      %v3840 = vshll.u32 %v3779, 16
      %v3842 = vrot.slane %v3840, 1
      %v3843 = vsel %vm848, %v3838, %v3842
      %v3844 = vshrl.u32 %v3779, 16
      %v3846 = vor.u32 %v3844, %v3842
      %v3848 = vshll.u32 %v3780, 16
      %v3850 = vrot.slane %v3848, 1
      %v3851 = vsel %vm848, %v3846, %v3850
      %v3852 = vshrl.u32 %v3780, 16
      %v3854 = vor.u32 %v3852, %v3850
      %v3856 = vshll.u32 %v3781, 16
      %v3858 = vrot.slane %v3856, 1
      %v3859 = vsel %vm848, %v3854, %v3858
      %v3860 = vshrl.u32 %v3781, 16
      %v3862 = vor.u32 %v3860, %v3858
      %v3864 = vshll.u32 %v3782, 16
      %v3866 = vrot.slane %v3864, 1
      %v3867 = vsel %vm848, %v3862, %v3866
      %v3892 = vunpack.c.l.b16 %v3784
      %v3893 = vunpack.c.l.b16 %v3785
      %v3894 = vunpack.c.l.b16 %v3786
      %v3895 = vunpack.c.l.b16 %v3787
      %v3896 = vunpack.c.l.b16 %v3788
      %v3897 = vunpack.c.l.b16 %v3789
      %v3898 = vunpack.c.l.b16 %v3790
      %v3899 = vunpack.c.l.b16 %v3791
      %v3900 = vunpack.c.l.b16 %v3792
      %v3901 = vunpack.c.l.b16 %v3793
      %v3902 = vunpack.c.l.b16 %v3794
      %v3903 = vunpack.c.l.b16 %v3795
      %v3904 = vunpack.c.l.b16 %v3796
      %v3905 = vunpack.c.l.b16 %v3797
      %v3906 = vunpack.c.l.b16 %v3798
      %v3907 = vunpack.c.l.b16 %v3799
      %v3908 = vpack.c.b16 %v3893, %v3892
      %v3909 = vpack.c.b16 %v3895, %v3894
      %v3910 = vpack.c.b16 %v3897, %v3896
      %v3911 = vpack.c.b16 %v3899, %v3898
      %v3912 = vpack.c.b16 %v3901, %v3900
      %v3913 = vpack.c.b16 %v3903, %v3902
      %v3914 = vpack.c.b16 %v3905, %v3904
      %v3915 = vpack.c.b16 %v3907, %v3906
      %3924 = vmatprep.subr.bf16.mxu0 0
      %3925 = vmatpush1.bf16.msra.mxu0 %v3908
      %3926 = vmatprep.subr.bf16.mxu0 0
      %3927 = vmatpush1.bf16.msra.mxu0 %v3909
      %3928 = vmatprep.subr.bf16.mxu0 0
      %3929 = vmatpush1.bf16.msra.mxu0 %v3910
      %3930 = vmatprep.subr.bf16.mxu0 0
      %3931 = vmatpush1.bf16.msra.mxu0 %v3911
      %3932 = vmatprep.subr.bf16.mxu0 0
      %3933 = vmatpush1.bf16.msra.mxu0 %v3912
      %3934 = vmatprep.subr.bf16.mxu0 0
      %3935 = vmatpush1.bf16.msra.mxu0 %v3913
      %3936 = vmatprep.subr.bf16.mxu0 0
      %3937 = vmatpush1.bf16.msra.mxu0 %v3914
      %3938 = vmatprep.subr.bf16.mxu0 0
      %3939 = vmatpush1.bf16.msra.mxu0 %v3915
      %3940 = vmatprep.subr.bf16.mxu0 0
      %3941 = vmatpush1.bf16.msra.mxu0 0
      %3942 = vmatprep.subr.bf16.mxu0 0
      %3943 = vmatpush1.bf16.msra.mxu0 0
      %3944 = vmatprep.subr.bf16.mxu0 0
      %3945 = vmatpush1.bf16.msra.mxu0 0
      %3946 = vmatprep.subr.bf16.mxu0 0
      %3947 = vmatpush1.bf16.msra.mxu0 0
      %3948 = vmatprep.subr.bf16.mxu0 0
      %3949 = vmatpush1.bf16.msra.mxu0 0
      %3950 = vmatprep.subr.bf16.mxu0 0
      %3951 = vmatpush1.bf16.msra.mxu0 0
      %3952 = vmatprep.subr.bf16.mxu0 0
      %3953 = vmatpush1.bf16.msra.mxu0 0
      %3954 = vmatprep.subr.bf16.mxu0 0
      %3955 = vmatpush1.bf16.msra.mxu0 0
      %3956 = vmatprep.mubr.bf16.mxu0 0
      %3957 = vmatmul.mubr.bf16.gmra.mrb[0].mxu0 %v3811
      %v3958 = vpop.f32.mrb[0].mxu0
      %v3959 = vadd.f32 0.0, %v3958
      %v3960 = vpop.f32.mrb[0].mxu0
      %v3961 = vpop.f32.mrb[0].mxu0
      %v3962 = vpop.f32.mrb[0].mxu0
      %3963 = vmatprep.mubr.bf16.mxu0 0
      %3964 = vmatmul.mubr.bf16.gmra.mrb[0].mxu0 %v3819
      %v3965 = vpop.f32.mrb[0].mxu0
      %v3966 = vadd.f32 0.0, %v3965
      %v3967 = vpop.f32.mrb[0].mxu0
      %v3968 = vpop.f32.mrb[0].mxu0
      %v3969 = vpop.f32.mrb[0].mxu0
      %3970 = vmatprep.mubr.bf16.mxu0 0
      %3971 = vmatmul.mubr.bf16.gmra.mrb[0].mxu0 %v3827
      %v3972 = vpop.f32.mrb[0].mxu0
      %v3973 = vadd.f32 0.0, %v3972
      %v3974 = vpop.f32.mrb[0].mxu0
      %v3975 = vpop.f32.mrb[0].mxu0
      %v3976 = vpop.f32.mrb[0].mxu0
      %3977 = vmatprep.mubr.bf16.mxu0 0
      %3978 = vmatmul.mubr.bf16.gmra.mrb[0].mxu0 %v3835
      %v3979 = vpop.f32.mrb[0].mxu0
      %v3980 = vadd.f32 0.0, %v3979
      %v3981 = vpop.f32.mrb[0].mxu0
      %v3982 = vpop.f32.mrb[0].mxu0
      %v3983 = vpop.f32.mrb[0].mxu0
      %3984 = vmatprep.mubr.bf16.mxu0 0
      %3985 = vmatmul.mubr.bf16.gmra.mrb[0].mxu0 %v3843
      %v3986 = vpop.f32.mrb[0].mxu0
      %v3987 = vadd.f32 0.0, %v3986
      %v3988 = vpop.f32.mrb[0].mxu0
      %v3989 = vpop.f32.mrb[0].mxu0
      %v3990 = vpop.f32.mrb[0].mxu0
      %3991 = vmatprep.mubr.bf16.mxu0 0
      %3992 = vmatmul.mubr.bf16.gmra.mrb[0].mxu0 %v3851
      %v3993 = vpop.f32.mrb[0].mxu0
      %v3994 = vadd.f32 0.0, %v3993
      %v3995 = vpop.f32.mrb[0].mxu0
      %v3996 = vpop.f32.mrb[0].mxu0
      %v3997 = vpop.f32.mrb[0].mxu0
      %3998 = vmatprep.mubr.bf16.mxu0 0
      %3999 = vmatmul.mubr.bf16.gmra.mrb[0].mxu0 %v3859
      %v4000 = vpop.f32.mrb[0].mxu0
      %v4001 = vadd.f32 0.0, %v4000
      %v4002 = vpop.f32.mrb[0].mxu0
      %v4003 = vpop.f32.mrb[0].mxu0
      %v4004 = vpop.f32.mrb[0].mxu0
      %4005 = vmatprep.mubr.bf16.mxu0 0
      %4006 = vmatmul.mubr.bf16.gmra.mrb[0].mxu0 %v3867
      %v4007 = vpop.f32.mrb[0].mxu0
      %v4008 = vadd.f32 0.0, %v4007
      %v4009 = vpop.f32.mrb[0].mxu0
      %v4010 = vpop.f32.mrb[0].mxu0
      %v4011 = vpop.f32.mrb[0].mxu0
      %4012 = vdwg.mxu0
      %v4013 = vadd.f32 %v3766, %v3959
      %v4014 = vadd.f32 %v3767, %v3966
      %v4015 = vadd.f32 %v3768, %v3973
      %v4016 = vadd.f32 %v3769, %v3980
      %v4017 = vadd.f32 %v3770, %v3987
      %v4018 = vadd.f32 %v3771, %v3994
      %v4019 = vadd.f32 %v3772, %v4001
      %v4020 = vadd.f32 %v3773, %v4008
      %v4021 = vld [vmem:[#allocation2 + $0x10] sm:$0x80]
      %v4022 = vld [vmem:[#allocation2 + $0x50] sm:$0xff]
      %s4023 = scalar_lea.vmem %s3, 384
      %v4024 = vld [vmem:[%s4023] sm:$0xf]
      %v4025 = vld [vmem:[%s4023 + $0x4] sm:$0xf]
      %v4026 = vld [vmem:[%s4023 + $0x8] sm:$0xf]
      %v4027 = vld [vmem:[%s4023 + $0xc] sm:$0xf]
      %v4028 = vld [vmem:[%s4023 + $0x10] sm:$0xf]
      %v4029 = vld [vmem:[%s4023 + $0x14] sm:$0xf]
      %v4030 = vld [vmem:[%s4023 + $0x18] sm:$0xf]
      %v4031 = vld [vmem:[%s4023 + $0x1c] sm:$0xf]
      %v4032 = vld [vmem:[%s4023 + $0x20] sm:$0xf]
      %v4033 = vld [vmem:[%s4023 + $0x24] sm:$0xf]
      %v4034 = vld [vmem:[%s4023 + $0x28] sm:$0xf]
      %v4035 = vld [vmem:[%s4023 + $0x2c] sm:$0xf]
      %v4036 = vld [vmem:[%s4023 + $0x30] sm:$0xf]
      %v4037 = vld [vmem:[%s4023 + $0x34] sm:$0xf]
      %v4038 = vld [vmem:[%s4023 + $0x38] sm:$0xf]
      %v4039 = vld [vmem:[%s4023 + $0x3c] sm:$0xf]
      %v4041 = vshrl.u32 %v4021, 16
      %v4043 = vrot.slane %v4041, 7
      %v4044 = vrot.slane %v3812, 7
      %v4045 = vor.u32 %v4044, %v3808
      %v4046 = vsel %vm2776, %v4043, %v4045
      %v4047 = vrot.slane %v3820, 7
      %v4048 = vor.u32 %v4047, %v3816
      %v4049 = vsel %vm2776, %v4044, %v4048
      %v4050 = vrot.slane %v3828, 7
      %v4051 = vor.u32 %v4050, %v3824
      %v4052 = vsel %vm2776, %v4047, %v4051
      %v4053 = vrot.slane %v3836, 7
      %v4054 = vor.u32 %v4053, %v3832
      %v4055 = vsel %vm2776, %v4050, %v4054
      %v4056 = vrot.slane %v3844, 7
      %v4057 = vor.u32 %v4056, %v3840
      %v4058 = vsel %vm2776, %v4053, %v4057
      %v4059 = vrot.slane %v3852, 7
      %v4060 = vor.u32 %v4059, %v3848
      %v4061 = vsel %vm2776, %v4056, %v4060
      %v4062 = vrot.slane %v3860, 7
      %v4063 = vor.u32 %v4062, %v3856
      %v4064 = vsel %vm2776, %v4059, %v4063
      %v4066 = vshrl.u32 %v4022, 16
      %v4068 = vrot.slane %v4066, 7
      %v4069 = vshll.u32 %v4022, 16
      %v4071 = vor.u32 %v4068, %v4069
      %v4072 = vsel %vm2776, %v4062, %v4071
      %v4097 = vunpack.c.l.b16 %v4024
      %v4098 = vunpack.c.l.b16 %v4025
      %v4099 = vunpack.c.l.b16 %v4026
      %v4100 = vunpack.c.l.b16 %v4027
      %v4101 = vunpack.c.l.b16 %v4028
      %v4102 = vunpack.c.l.b16 %v4029
      %v4103 = vunpack.c.l.b16 %v4030
      %v4104 = vunpack.c.l.b16 %v4031
      %v4105 = vunpack.c.l.b16 %v4032
      %v4106 = vunpack.c.l.b16 %v4033
      %v4107 = vunpack.c.l.b16 %v4034
      %v4108 = vunpack.c.l.b16 %v4035
      %v4109 = vunpack.c.l.b16 %v4036
      %v4110 = vunpack.c.l.b16 %v4037
      %v4111 = vunpack.c.l.b16 %v4038
      %v4112 = vunpack.c.l.b16 %v4039
      %v4113 = vpack.c.b16 %v4098, %v4097
      %v4114 = vpack.c.b16 %v4100, %v4099
      %v4115 = vpack.c.b16 %v4102, %v4101
      %v4116 = vpack.c.b16 %v4104, %v4103
      %v4117 = vpack.c.b16 %v4106, %v4105
      %v4118 = vpack.c.b16 %v4108, %v4107
      %v4119 = vpack.c.b16 %v4110, %v4109
      %v4120 = vpack.c.b16 %v4112, %v4111
      %4129 = vmatprep.subr.bf16.mxu0 0
      %4130 = vmatpush1.bf16.msra.mxu0 %v4113
      %4131 = vmatprep.subr.bf16.mxu0 0
      %4132 = vmatpush1.bf16.msra.mxu0 %v4114
      %4133 = vmatprep.subr.bf16.mxu0 0
      %4134 = vmatpush1.bf16.msra.mxu0 %v4115
      %4135 = vmatprep.subr.bf16.mxu0 0
      %4136 = vmatpush1.bf16.msra.mxu0 %v4116
      %4137 = vmatprep.subr.bf16.mxu0 0
      %4138 = vmatpush1.bf16.msra.mxu0 %v4117
      %4139 = vmatprep.subr.bf16.mxu0 0
      %4140 = vmatpush1.bf16.msra.mxu0 %v4118
      %4141 = vmatprep.subr.bf16.mxu0 0
      %4142 = vmatpush1.bf16.msra.mxu0 %v4119
      %4143 = vmatprep.subr.bf16.mxu0 0
      %4144 = vmatpush1.bf16.msra.mxu0 %v4120
      %4145 = vmatprep.subr.bf16.mxu0 0
      %4146 = vmatpush1.bf16.msra.mxu0 0
      %4147 = vmatprep.subr.bf16.mxu0 0
      %4148 = vmatpush1.bf16.msra.mxu0 0
      %4149 = vmatprep.subr.bf16.mxu0 0
      %4150 = vmatpush1.bf16.msra.mxu0 0
      %4151 = vmatprep.subr.bf16.mxu0 0
      %4152 = vmatpush1.bf16.msra.mxu0 0
      %4153 = vmatprep.subr.bf16.mxu0 0
      %4154 = vmatpush1.bf16.msra.mxu0 0
      %4155 = vmatprep.subr.bf16.mxu0 0
      %4156 = vmatpush1.bf16.msra.mxu0 0
      %4157 = vmatprep.subr.bf16.mxu0 0
      %4158 = vmatpush1.bf16.msra.mxu0 0
      %4159 = vmatprep.subr.bf16.mxu0 0
      %4160 = vmatpush1.bf16.msra.mxu0 0
      %4161 = vmatprep.mubr.bf16.mxu0 0
      %4162 = vmatmul.mubr.bf16.gmra.mrb[0].mxu0 %v4046
      %v4163 = vpop.f32.mrb[0].mxu0
      %v4164 = vadd.f32 0.0, %v4163
      %v4165 = vpop.f32.mrb[0].mxu0
      %v4166 = vpop.f32.mrb[0].mxu0
      %v4167 = vpop.f32.mrb[0].mxu0
      %4168 = vmatprep.mubr.bf16.mxu0 0
      %4169 = vmatmul.mubr.bf16.gmra.mrb[0].mxu0 %v4049
      %v4170 = vpop.f32.mrb[0].mxu0
      %v4171 = vadd.f32 0.0, %v4170
      %v4172 = vpop.f32.mrb[0].mxu0
      %v4173 = vpop.f32.mrb[0].mxu0
      %v4174 = vpop.f32.mrb[0].mxu0
      %4175 = vmatprep.mubr.bf16.mxu0 0
      %4176 = vmatmul.mubr.bf16.gmra.mrb[0].mxu0 %v4052
      %v4177 = vpop.f32.mrb[0].mxu0
      %v4178 = vadd.f32 0.0, %v4177
      %v4179 = vpop.f32.mrb[0].mxu0
      %v4180 = vpop.f32.mrb[0].mxu0
      %v4181 = vpop.f32.mrb[0].mxu0
      %4182 = vmatprep.mubr.bf16.mxu0 0
      %4183 = vmatmul.mubr.bf16.gmra.mrb[0].mxu0 %v4055
      %v4184 = vpop.f32.mrb[0].mxu0
      %v4185 = vadd.f32 0.0, %v4184
      %v4186 = vpop.f32.mrb[0].mxu0
      %v4187 = vpop.f32.mrb[0].mxu0
      %v4188 = vpop.f32.mrb[0].mxu0
      %4189 = vmatprep.mubr.bf16.mxu0 0
      %4190 = vmatmul.mubr.bf16.gmra.mrb[0].mxu0 %v4058
      %v4191 = vpop.f32.mrb[0].mxu0
      %v4192 = vadd.f32 0.0, %v4191
      %v4193 = vpop.f32.mrb[0].mxu0
      %v4194 = vpop.f32.mrb[0].mxu0
      %v4195 = vpop.f32.mrb[0].mxu0
      %4196 = vmatprep.mubr.bf16.mxu0 0
      %4197 = vmatmul.mubr.bf16.gmra.mrb[0].mxu0 %v4061
      %v4198 = vpop.f32.mrb[0].mxu0
      %v4199 = vadd.f32 0.0, %v4198
      %v4200 = vpop.f32.mrb[0].mxu0
      %v4201 = vpop.f32.mrb[0].mxu0
      %v4202 = vpop.f32.mrb[0].mxu0
      %4203 = vmatprep.mubr.bf16.mxu0 0
      %4204 = vmatmul.mubr.bf16.gmra.mrb[0].mxu0 %v4064
      %v4205 = vpop.f32.mrb[0].mxu0
      %v4206 = vadd.f32 0.0, %v4205
      %v4207 = vpop.f32.mrb[0].mxu0
      %v4208 = vpop.f32.mrb[0].mxu0
      %v4209 = vpop.f32.mrb[0].mxu0
      %4210 = vmatprep.mubr.bf16.mxu0 0
      %4211 = vmatmul.mubr.bf16.gmra.mrb[0].mxu0 %v4072
      %v4212 = vpop.f32.mrb[0].mxu0
      %v4213 = vadd.f32 0.0, %v4212
      %v4214 = vpop.f32.mrb[0].mxu0
      %v4215 = vpop.f32.mrb[0].mxu0
      %v4216 = vpop.f32.mrb[0].mxu0
      %4217 = vdwg.mxu0
      %v4218 = vadd.f32 %v4013, %v4164
      %v4219 = vadd.f32 %v4014, %v4171
      %v4220 = vadd.f32 %v4015, %v4178
      %v4221 = vadd.f32 %v4016, %v4185
      %v4222 = vadd.f32 %v4017, %v4192
      %v4223 = vadd.f32 %v4018, %v4199
      %v4224 = vadd.f32 %v4019, %v4206
      %v4225 = vadd.f32 %v4020, %v4213
      %s4226 = scalar_lea.vmem %s3, 448
      %v4227 = vld [vmem:[%s4226] sm:$0xf]
      %v4228 = vld [vmem:[%s4226 + $0x4] sm:$0xf]
      %v4229 = vld [vmem:[%s4226 + $0x8] sm:$0xf]
      %v4230 = vld [vmem:[%s4226 + $0xc] sm:$0xf]
      %v4231 = vld [vmem:[%s4226 + $0x10] sm:$0xf]
      %v4232 = vld [vmem:[%s4226 + $0x14] sm:$0xf]
      %v4233 = vld [vmem:[%s4226 + $0x18] sm:$0xf]
      %v4234 = vld [vmem:[%s4226 + $0x1c] sm:$0xf]
      %v4235 = vld [vmem:[%s4226 + $0x20] sm:$0xf]
      %v4236 = vld [vmem:[%s4226 + $0x24] sm:$0xf]
      %v4237 = vld [vmem:[%s4226 + $0x28] sm:$0xf]
      %v4238 = vld [vmem:[%s4226 + $0x2c] sm:$0xf]
      %v4239 = vld [vmem:[%s4226 + $0x30] sm:$0xf]
      %v4240 = vld [vmem:[%s4226 + $0x34] sm:$0xf]
      %v4241 = vld [vmem:[%s4226 + $0x38] sm:$0xf]
      %v4242 = vld [vmem:[%s4226 + $0x3c] sm:$0xf]
      %v4259 = vunpack.c.l.b16 %v4227
      %v4260 = vunpack.c.l.b16 %v4228
      %v4261 = vunpack.c.l.b16 %v4229
      %v4262 = vunpack.c.l.b16 %v4230
      %v4263 = vunpack.c.l.b16 %v4231
      %v4264 = vunpack.c.l.b16 %v4232
      %v4265 = vunpack.c.l.b16 %v4233
      %v4266 = vunpack.c.l.b16 %v4234
      %v4267 = vunpack.c.l.b16 %v4235
      %v4268 = vunpack.c.l.b16 %v4236
      %v4269 = vunpack.c.l.b16 %v4237
      %v4270 = vunpack.c.l.b16 %v4238
      %v4271 = vunpack.c.l.b16 %v4239
      %v4272 = vunpack.c.l.b16 %v4240
      %v4273 = vunpack.c.l.b16 %v4241
      %v4274 = vunpack.c.l.b16 %v4242
      %v4275 = vpack.c.b16 %v4260, %v4259
      %v4276 = vpack.c.b16 %v4262, %v4261
      %v4277 = vpack.c.b16 %v4264, %v4263
      %v4278 = vpack.c.b16 %v4266, %v4265
      %v4279 = vpack.c.b16 %v4268, %v4267
      %v4280 = vpack.c.b16 %v4270, %v4269
      %v4281 = vpack.c.b16 %v4272, %v4271
      %v4282 = vpack.c.b16 %v4274, %v4273
      %4291 = vmatprep.subr.bf16.mxu0 0
      %4292 = vmatpush1.bf16.msra.mxu0 %v4275
      %4293 = vmatprep.subr.bf16.mxu0 0
      %4294 = vmatpush1.bf16.msra.mxu0 %v4276
      %4295 = vmatprep.subr.bf16.mxu0 0
      %4296 = vmatpush1.bf16.msra.mxu0 %v4277
      %4297 = vmatprep.subr.bf16.mxu0 0
      %4298 = vmatpush1.bf16.msra.mxu0 %v4278
      %4299 = vmatprep.subr.bf16.mxu0 0
      %4300 = vmatpush1.bf16.msra.mxu0 %v4279
      %4301 = vmatprep.subr.bf16.mxu0 0
      %4302 = vmatpush1.bf16.msra.mxu0 %v4280
      %4303 = vmatprep.subr.bf16.mxu0 0
      %4304 = vmatpush1.bf16.msra.mxu0 %v4281
      %4305 = vmatprep.subr.bf16.mxu0 0
      %4306 = vmatpush1.bf16.msra.mxu0 %v4282
      %4307 = vmatprep.subr.bf16.mxu0 0
      %4308 = vmatpush1.bf16.msra.mxu0 0
      %4309 = vmatprep.subr.bf16.mxu0 0
      %4310 = vmatpush1.bf16.msra.mxu0 0
      %4311 = vmatprep.subr.bf16.mxu0 0
      %4312 = vmatpush1.bf16.msra.mxu0 0
      %4313 = vmatprep.subr.bf16.mxu0 0
      %4314 = vmatpush1.bf16.msra.mxu0 0
      %4315 = vmatprep.subr.bf16.mxu0 0
      %4316 = vmatpush1.bf16.msra.mxu0 0
      %4317 = vmatprep.subr.bf16.mxu0 0
      %4318 = vmatpush1.bf16.msra.mxu0 0
      %4319 = vmatprep.subr.bf16.mxu0 0
      %4320 = vmatpush1.bf16.msra.mxu0 0
      %4321 = vmatprep.subr.bf16.mxu0 0
      %4322 = vmatpush1.bf16.msra.mxu0 0
      %4323 = vmatprep.mubr.bf16.mxu0 0
      %4324 = vmatmul.mubr.bf16.gmra.mrb[0].mxu0 %v3775
      %v4325 = vpop.f32.mrb[0].mxu0
      %v4326 = vadd.f32 0.0, %v4325
      %v4327 = vpop.f32.mrb[0].mxu0
      %v4328 = vpop.f32.mrb[0].mxu0
      %v4329 = vpop.f32.mrb[0].mxu0
      %4330 = vmatprep.mubr.bf16.mxu0 0
      %4331 = vmatmul.mubr.bf16.gmra.mrb[0].mxu0 %v3776
      %v4332 = vpop.f32.mrb[0].mxu0
      %v4333 = vadd.f32 0.0, %v4332
      %v4334 = vpop.f32.mrb[0].mxu0
      %v4335 = vpop.f32.mrb[0].mxu0
      %v4336 = vpop.f32.mrb[0].mxu0
      %4337 = vmatprep.mubr.bf16.mxu0 0
      %4338 = vmatmul.mubr.bf16.gmra.mrb[0].mxu0 %v3777
      %v4339 = vpop.f32.mrb[0].mxu0
      %v4340 = vadd.f32 0.0, %v4339
      %v4341 = vpop.f32.mrb[0].mxu0
      %v4342 = vpop.f32.mrb[0].mxu0
      %v4343 = vpop.f32.mrb[0].mxu0
      %4344 = vmatprep.mubr.bf16.mxu0 0
      %4345 = vmatmul.mubr.bf16.gmra.mrb[0].mxu0 %v3778
      %v4346 = vpop.f32.mrb[0].mxu0
      %v4347 = vadd.f32 0.0, %v4346
      %v4348 = vpop.f32.mrb[0].mxu0
      %v4349 = vpop.f32.mrb[0].mxu0
      %v4350 = vpop.f32.mrb[0].mxu0
      %4351 = vmatprep.mubr.bf16.mxu0 0
      %4352 = vmatmul.mubr.bf16.gmra.mrb[0].mxu0 %v3779
      %v4353 = vpop.f32.mrb[0].mxu0
      %v4354 = vadd.f32 0.0, %v4353
      %v4355 = vpop.f32.mrb[0].mxu0
      %v4356 = vpop.f32.mrb[0].mxu0
      %v4357 = vpop.f32.mrb[0].mxu0
      %4358 = vmatprep.mubr.bf16.mxu0 0
      %4359 = vmatmul.mubr.bf16.gmra.mrb[0].mxu0 %v3780
      %v4360 = vpop.f32.mrb[0].mxu0
      %v4361 = vadd.f32 0.0, %v4360
      %v4362 = vpop.f32.mrb[0].mxu0
      %v4363 = vpop.f32.mrb[0].mxu0
      %v4364 = vpop.f32.mrb[0].mxu0
      %4365 = vmatprep.mubr.bf16.mxu0 0
      %4366 = vmatmul.mubr.bf16.gmra.mrb[0].mxu0 %v3781
      %v4367 = vpop.f32.mrb[0].mxu0
      %v4368 = vadd.f32 0.0, %v4367
      %v4369 = vpop.f32.mrb[0].mxu0
      %v4370 = vpop.f32.mrb[0].mxu0
      %v4371 = vpop.f32.mrb[0].mxu0
      %4372 = vmatprep.mubr.bf16.mxu0 0
      %4373 = vmatmul.mubr.bf16.gmra.mrb[0].mxu0 %v4022
      %v4374 = vpop.f32.mrb[0].mxu0
      %v4375 = vadd.f32 0.0, %v4374
      %v4376 = vpop.f32.mrb[0].mxu0
      %v4377 = vpop.f32.mrb[0].mxu0
      %v4378 = vpop.f32.mrb[0].mxu0
      %4379 = vdwg.mxu0
      %v4380 = vadd.f32 %v4218, %v4326
      %v4381 = vadd.f32 %v4219, %v4333
      %v4382 = vadd.f32 %v4220, %v4340
      %v4383 = vadd.f32 %v4221, %v4347
      %v4384 = vadd.f32 %v4222, %v4354
      %v4385 = vadd.f32 %v4223, %v4361
      %v4386 = vadd.f32 %v4224, %v4368
      %v4387 = vadd.f32 %v4225, %v4375
      %v4388 = vld [vmem:[#allocation2 + $0x18] sm:$0xff]
      %v4389 = vld [vmem:[#allocation2 + $0x20] sm:$0xff]
      %v4390 = vld [vmem:[#allocation2 + $0x28] sm:$0xff]
      %v4391 = vld [vmem:[#allocation2 + $0x30] sm:$0xff]
      %v4392 = vld [vmem:[#allocation2 + $0x38] sm:$0xff]
      %v4393 = vld [vmem:[#allocation2 + $0x40] sm:$0xff]
      %v4394 = vld [vmem:[#allocation2 + $0x48] sm:$0xff]
      %v4395 = vld [vmem:[#allocation2 + $0x50] sm:$0xff]
      %v4396 = vld [vmem:[#allocation2 + $0x58] sm:$0x1]
      %s4397 = scalar_lea.vmem %s3, 512
      %v4398 = vld [vmem:[%s4397] sm:$0xf]
      %v4399 = vld [vmem:[%s4397 + $0x4] sm:$0xf]
      %v4400 = vld [vmem:[%s4397 + $0x8] sm:$0xf]
      %v4401 = vld [vmem:[%s4397 + $0xc] sm:$0xf]
      %v4402 = vld [vmem:[%s4397 + $0x10] sm:$0xf]
      %v4403 = vld [vmem:[%s4397 + $0x14] sm:$0xf]
      %v4404 = vld [vmem:[%s4397 + $0x18] sm:$0xf]
      %v4405 = vld [vmem:[%s4397 + $0x1c] sm:$0xf]
      %v4406 = vld [vmem:[%s4397 + $0x20] sm:$0xf]
      %v4407 = vld [vmem:[%s4397 + $0x24] sm:$0xf]
      %v4408 = vld [vmem:[%s4397 + $0x28] sm:$0xf]
      %v4409 = vld [vmem:[%s4397 + $0x2c] sm:$0xf]
      %v4410 = vld [vmem:[%s4397 + $0x30] sm:$0xf]
      %v4411 = vld [vmem:[%s4397 + $0x34] sm:$0xf]
      %v4412 = vld [vmem:[%s4397 + $0x38] sm:$0xf]
      %v4413 = vld [vmem:[%s4397 + $0x3c] sm:$0xf]
      %v4415 = vshrl.u32 %v4388, 16
      %v4417 = vshll.u32 %v4388, 16
      %v4419 = vrot.slane %v4417, 1
      %v4420 = vor.u32 %v4415, %v4419
      %v4422 = vshll.u32 %v4389, 16
      %v4424 = vrot.slane %v4422, 1
      %v4425 = vsel %vm848, %v4420, %v4424
      %v4426 = vshrl.u32 %v4389, 16
      %v4428 = vor.u32 %v4426, %v4424
      %v4430 = vshll.u32 %v4390, 16
      %v4432 = vrot.slane %v4430, 1
      %v4433 = vsel %vm848, %v4428, %v4432
      %v4434 = vshrl.u32 %v4390, 16
      %v4436 = vor.u32 %v4434, %v4432
      %v4438 = vshll.u32 %v4391, 16
      %v4440 = vrot.slane %v4438, 1
      %v4441 = vsel %vm848, %v4436, %v4440
      %v4442 = vshrl.u32 %v4391, 16
      %v4444 = vor.u32 %v4442, %v4440
      %v4446 = vshll.u32 %v4392, 16
      %v4448 = vrot.slane %v4446, 1
      %v4449 = vsel %vm848, %v4444, %v4448
      %v4450 = vshrl.u32 %v4392, 16
      %v4452 = vor.u32 %v4450, %v4448
      %v4454 = vshll.u32 %v4393, 16
      %v4456 = vrot.slane %v4454, 1
      %v4457 = vsel %vm848, %v4452, %v4456
      %v4458 = vshrl.u32 %v4393, 16
      %v4460 = vor.u32 %v4458, %v4456
      %v4462 = vshll.u32 %v4394, 16
      %v4464 = vrot.slane %v4462, 1
      %v4465 = vsel %vm848, %v4460, %v4464
      %v4466 = vshrl.u32 %v4394, 16
      %v4468 = vor.u32 %v4466, %v4464
      %v4470 = vshll.u32 %v4395, 16
      %v4472 = vrot.slane %v4470, 1
      %v4473 = vsel %vm848, %v4468, %v4472
      %v4474 = vshrl.u32 %v4395, 16
      %v4476 = vor.u32 %v4474, %v4472
      %v4478 = vshll.u32 %v4396, 16
      %v4480 = vrot.slane %v4478, 1
      %v4481 = vsel %vm848, %v4476, %v4480
      %v4506 = vunpack.c.l.b16 %v4398
      %v4507 = vunpack.c.l.b16 %v4399
      %v4508 = vunpack.c.l.b16 %v4400
      %v4509 = vunpack.c.l.b16 %v4401
      %v4510 = vunpack.c.l.b16 %v4402
      %v4511 = vunpack.c.l.b16 %v4403
      %v4512 = vunpack.c.l.b16 %v4404
      %v4513 = vunpack.c.l.b16 %v4405
      %v4514 = vunpack.c.l.b16 %v4406
      %v4515 = vunpack.c.l.b16 %v4407
      %v4516 = vunpack.c.l.b16 %v4408
      %v4517 = vunpack.c.l.b16 %v4409
      %v4518 = vunpack.c.l.b16 %v4410
      %v4519 = vunpack.c.l.b16 %v4411
      %v4520 = vunpack.c.l.b16 %v4412
      %v4521 = vunpack.c.l.b16 %v4413
      %v4522 = vpack.c.b16 %v4507, %v4506
      %v4523 = vpack.c.b16 %v4509, %v4508
      %v4524 = vpack.c.b16 %v4511, %v4510
      %v4525 = vpack.c.b16 %v4513, %v4512
      %v4526 = vpack.c.b16 %v4515, %v4514
      %v4527 = vpack.c.b16 %v4517, %v4516
      %v4528 = vpack.c.b16 %v4519, %v4518
      %v4529 = vpack.c.b16 %v4521, %v4520
      %4538 = vmatprep.subr.bf16.mxu0 0
      %4539 = vmatpush1.bf16.msra.mxu0 %v4522
      %4540 = vmatprep.subr.bf16.mxu0 0
      %4541 = vmatpush1.bf16.msra.mxu0 %v4523
      %4542 = vmatprep.subr.bf16.mxu0 0
      %4543 = vmatpush1.bf16.msra.mxu0 %v4524
      %4544 = vmatprep.subr.bf16.mxu0 0
      %4545 = vmatpush1.bf16.msra.mxu0 %v4525
      %4546 = vmatprep.subr.bf16.mxu0 0
      %4547 = vmatpush1.bf16.msra.mxu0 %v4526
      %4548 = vmatprep.subr.bf16.mxu0 0
      %4549 = vmatpush1.bf16.msra.mxu0 %v4527
      %4550 = vmatprep.subr.bf16.mxu0 0
      %4551 = vmatpush1.bf16.msra.mxu0 %v4528
      %4552 = vmatprep.subr.bf16.mxu0 0
      %4553 = vmatpush1.bf16.msra.mxu0 %v4529
      %4554 = vmatprep.subr.bf16.mxu0 0
      %4555 = vmatpush1.bf16.msra.mxu0 0
      %4556 = vmatprep.subr.bf16.mxu0 0
      %4557 = vmatpush1.bf16.msra.mxu0 0
      %4558 = vmatprep.subr.bf16.mxu0 0
      %4559 = vmatpush1.bf16.msra.mxu0 0
      %4560 = vmatprep.subr.bf16.mxu0 0
      %4561 = vmatpush1.bf16.msra.mxu0 0
      %4562 = vmatprep.subr.bf16.mxu0 0
      %4563 = vmatpush1.bf16.msra.mxu0 0
      %4564 = vmatprep.subr.bf16.mxu0 0
      %4565 = vmatpush1.bf16.msra.mxu0 0
      %4566 = vmatprep.subr.bf16.mxu0 0
      %4567 = vmatpush1.bf16.msra.mxu0 0
      %4568 = vmatprep.subr.bf16.mxu0 0
      %4569 = vmatpush1.bf16.msra.mxu0 0
      %4570 = vmatprep.mubr.bf16.mxu0 0
      %4571 = vmatmul.mubr.bf16.gmra.mrb[0].mxu0 %v4425
      %v4572 = vpop.f32.mrb[0].mxu0
      %v4573 = vadd.f32 0.0, %v4572
      %v4574 = vpop.f32.mrb[0].mxu0
      %v4575 = vpop.f32.mrb[0].mxu0
      %v4576 = vpop.f32.mrb[0].mxu0
      %4577 = vmatprep.mubr.bf16.mxu0 0
      %4578 = vmatmul.mubr.bf16.gmra.mrb[0].mxu0 %v4433
      %v4579 = vpop.f32.mrb[0].mxu0
      %v4580 = vadd.f32 0.0, %v4579
      %v4581 = vpop.f32.mrb[0].mxu0
      %v4582 = vpop.f32.mrb[0].mxu0
      %v4583 = vpop.f32.mrb[0].mxu0
      %4584 = vmatprep.mubr.bf16.mxu0 0
      %4585 = vmatmul.mubr.bf16.gmra.mrb[0].mxu0 %v4441
      %v4586 = vpop.f32.mrb[0].mxu0
      %v4587 = vadd.f32 0.0, %v4586
      %v4588 = vpop.f32.mrb[0].mxu0
      %v4589 = vpop.f32.mrb[0].mxu0
      %v4590 = vpop.f32.mrb[0].mxu0
      %4591 = vmatprep.mubr.bf16.mxu0 0
      %4592 = vmatmul.mubr.bf16.gmra.mrb[0].mxu0 %v4449
      %v4593 = vpop.f32.mrb[0].mxu0
      %v4594 = vadd.f32 0.0, %v4593
      %v4595 = vpop.f32.mrb[0].mxu0
      %v4596 = vpop.f32.mrb[0].mxu0
      %v4597 = vpop.f32.mrb[0].mxu0
      %4598 = vmatprep.mubr.bf16.mxu0 0
      %4599 = vmatmul.mubr.bf16.gmra.mrb[0].mxu0 %v4457
      %v4600 = vpop.f32.mrb[0].mxu0
      %v4601 = vadd.f32 0.0, %v4600
      %v4602 = vpop.f32.mrb[0].mxu0
      %v4603 = vpop.f32.mrb[0].mxu0
      %v4604 = vpop.f32.mrb[0].mxu0
      %4605 = vmatprep.mubr.bf16.mxu0 0
      %4606 = vmatmul.mubr.bf16.gmra.mrb[0].mxu0 %v4465
      %v4607 = vpop.f32.mrb[0].mxu0
      %v4608 = vadd.f32 0.0, %v4607
      %v4609 = vpop.f32.mrb[0].mxu0
      %v4610 = vpop.f32.mrb[0].mxu0
      %v4611 = vpop.f32.mrb[0].mxu0
      %4612 = vmatprep.mubr.bf16.mxu0 0
      %4613 = vmatmul.mubr.bf16.gmra.mrb[0].mxu0 %v4473
      %v4614 = vpop.f32.mrb[0].mxu0
      %v4615 = vadd.f32 0.0, %v4614
      %v4616 = vpop.f32.mrb[0].mxu0
      %v4617 = vpop.f32.mrb[0].mxu0
      %v4618 = vpop.f32.mrb[0].mxu0
      %4619 = vmatprep.mubr.bf16.mxu0 0
      %4620 = vmatmul.mubr.bf16.gmra.mrb[0].mxu0 %v4481
      %v4621 = vpop.f32.mrb[0].mxu0
      %v4622 = vadd.f32 0.0, %v4621
      %v4623 = vpop.f32.mrb[0].mxu0
      %v4624 = vpop.f32.mrb[0].mxu0
      %v4625 = vpop.f32.mrb[0].mxu0
      %4626 = vdwg.mxu0
      %v4627 = vadd.f32 %v4380, %v4573
      %v4628 = vadd.f32 %v4381, %v4580
      %v4629 = vadd.f32 %v4382, %v4587
      %v4630 = vadd.f32 %v4383, %v4594
      %v4631 = vadd.f32 %v4384, %v4601
      %v4632 = vadd.f32 %v4385, %v4608
      %v4633 = vadd.f32 %v4386, %v4615
      %v4634 = vadd.f32 %v4387, %v4622
      %v4635 = vld [vmem:[%s1329] sm:$0xf]
      %v4636 = vld [vmem:[%s1329 + $0x4] sm:$0xf]
      %v4637 = vld [vmem:[%s1329 + $0x8] sm:$0xf]
      %v4638 = vld [vmem:[%s1329 + $0xc] sm:$0xf]
      %v4639 = vld [vmem:[%s1329 + $0x10] sm:$0xf]
      %v4640 = vld [vmem:[%s1329 + $0x14] sm:$0xf]
      %v4641 = vld [vmem:[%s1329 + $0x18] sm:$0xf]
      %v4642 = vld [vmem:[%s1329 + $0x1c] sm:$0xf]
      %v4643 = vld [vmem:[%s1329 + $0x20] sm:$0xf]
      %v4644 = vld [vmem:[%s1329 + $0x24] sm:$0xf]
      %v4645 = vld [vmem:[%s1329 + $0x28] sm:$0xf]
      %v4646 = vld [vmem:[%s1329 + $0x2c] sm:$0xf]
      %v4647 = vld [vmem:[%s1329 + $0x30] sm:$0xf]
      %v4648 = vld [vmem:[%s1329 + $0x34] sm:$0xf]
      %v4649 = vld [vmem:[%s1329 + $0x38] sm:$0xf]
      %v4650 = vld [vmem:[%s1329 + $0x3c] sm:$0xf]
      %v4651 = vld [vmem:[%s5] sm:$0xf]
      %v4652 = vld [vmem:[%s5 + $0x4] sm:$0xf]
      %v4653 = vld [vmem:[%s5 + $0x8] sm:$0xf]
      %v4654 = vld [vmem:[%s5 + $0xc] sm:$0xf]
      %v4655 = vld [vmem:[%s5 + $0x10] sm:$0xf]
      %v4656 = vld [vmem:[%s5 + $0x14] sm:$0xf]
      %v4657 = vld [vmem:[%s5 + $0x18] sm:$0xf]
      %v4658 = vld [vmem:[%s5 + $0x1c] sm:$0xf]
      %v4659 = vld [vmem:[%s5 + $0x20] sm:$0xf]
      %v4660 = vld [vmem:[%s5 + $0x24] sm:$0xf]
      %v4661 = vld [vmem:[%s5 + $0x28] sm:$0xf]
      %v4662 = vld [vmem:[%s5 + $0x2c] sm:$0xf]
      %v4663 = vld [vmem:[%s5 + $0x30] sm:$0xf]
      %v4664 = vld [vmem:[%s5 + $0x34] sm:$0xf]
      %v4665 = vld [vmem:[%s5 + $0x38] sm:$0xf]
      %v4666 = vld [vmem:[%s5 + $0x3c] sm:$0xf]
      %v4667 = vld [vmem:[%s6] sm:$0x1]
      %v4669 = vlaneseq
      %v4670 = vshrl.u32 %v4669, 7
      %v4671 = vsub.s32 0, %v4670
      %v4672 = vrot.slane %v4667, %v4671
      %v4690 = vunpack.c.l.b16 %v4635
      %v4691 = vunpack.c.l.b16 %v4636
      %v4692 = vunpack.c.l.b16 %v4637
      %v4693 = vunpack.c.l.b16 %v4638
      %v4694 = vunpack.c.l.b16 %v4639
      %v4695 = vunpack.c.l.b16 %v4640
      %v4696 = vunpack.c.l.b16 %v4641
      %v4697 = vunpack.c.l.b16 %v4642
      %v4698 = vunpack.c.l.b16 %v4643
      %v4699 = vunpack.c.l.b16 %v4644
      %v4700 = vunpack.c.l.b16 %v4645
      %v4701 = vunpack.c.l.b16 %v4646
      %v4702 = vunpack.c.l.b16 %v4647
      %v4703 = vunpack.c.l.b16 %v4648
      %v4704 = vunpack.c.l.b16 %v4649
      %v4705 = vunpack.c.l.b16 %v4650
      %v4706 = vpack.c.b16 %v4691, %v4690
      %v4707 = vpack.c.b16 %v4693, %v4692
      %v4708 = vpack.c.b16 %v4695, %v4694
      %v4709 = vpack.c.b16 %v4697, %v4696
      %v4710 = vpack.c.b16 %v4699, %v4698
      %v4711 = vpack.c.b16 %v4701, %v4700
      %v4712 = vpack.c.b16 %v4703, %v4702
      %v4713 = vpack.c.b16 %v4705, %v4704
      %v4738 = vunpack.c.l.b16 %v4651
      %v4739 = vunpack.c.l.b16 %v4652
      %v4740 = vunpack.c.l.b16 %v4653
      %v4741 = vunpack.c.l.b16 %v4654
      %v4742 = vunpack.c.l.b16 %v4655
      %v4743 = vunpack.c.l.b16 %v4656
      %v4744 = vunpack.c.l.b16 %v4657
      %v4745 = vunpack.c.l.b16 %v4658
      %v4746 = vunpack.c.l.b16 %v4659
      %v4747 = vunpack.c.l.b16 %v4660
      %v4748 = vunpack.c.l.b16 %v4661
      %v4749 = vunpack.c.l.b16 %v4662
      %v4750 = vunpack.c.l.b16 %v4663
      %v4751 = vunpack.c.l.b16 %v4664
      %v4752 = vunpack.c.l.b16 %v4665
      %v4753 = vunpack.c.l.b16 %v4666
      %v4754 = vpack.c.b16 %v4739, %v4738
      %v4755 = vpack.c.b16 %v4741, %v4740
      %v4756 = vpack.c.b16 %v4743, %v4742
      %v4757 = vpack.c.b16 %v4745, %v4744
      %v4758 = vpack.c.b16 %v4747, %v4746
      %v4759 = vpack.c.b16 %v4749, %v4748
      %v4760 = vpack.c.b16 %v4751, %v4750
      %v4761 = vpack.c.b16 %v4753, %v4752
      %4770 = vmatprep.subr.bf16.mxu0 0
      %4771 = vmatpush1.bf16.msra.mxu0 %v4754
      %4772 = vmatprep.subr.bf16.mxu0 0
      %4773 = vmatpush1.bf16.msra.mxu0 %v4755
      %4774 = vmatprep.subr.bf16.mxu0 0
      %4775 = vmatpush1.bf16.msra.mxu0 %v4756
      %4776 = vmatprep.subr.bf16.mxu0 0
      %4777 = vmatpush1.bf16.msra.mxu0 %v4757
      %4778 = vmatprep.subr.bf16.mxu0 0
      %4779 = vmatpush1.bf16.msra.mxu0 %v4758
      %4780 = vmatprep.subr.bf16.mxu0 0
      %4781 = vmatpush1.bf16.msra.mxu0 %v4759
      %4782 = vmatprep.subr.bf16.mxu0 0
      %4783 = vmatpush1.bf16.msra.mxu0 %v4760
      %4784 = vmatprep.subr.bf16.mxu0 0
      %4785 = vmatpush1.bf16.msra.mxu0 %v4761
      %4786 = vmatprep.subr.bf16.mxu0 0
      %4787 = vmatpush1.bf16.msra.mxu0 0
      %4788 = vmatprep.subr.bf16.mxu0 0
      %4789 = vmatpush1.bf16.msra.mxu0 0
      %4790 = vmatprep.subr.bf16.mxu0 0
      %4791 = vmatpush1.bf16.msra.mxu0 0
      %4792 = vmatprep.subr.bf16.mxu0 0
      %4793 = vmatpush1.bf16.msra.mxu0 0
      %4794 = vmatprep.subr.bf16.mxu0 0
      %4795 = vmatpush1.bf16.msra.mxu0 0
      %4796 = vmatprep.subr.bf16.mxu0 0
      %4797 = vmatpush1.bf16.msra.mxu0 0
      %4798 = vmatprep.subr.bf16.mxu0 0
      %4799 = vmatpush1.bf16.msra.mxu0 0
      %4800 = vmatprep.subr.bf16.mxu0 0
      %4801 = vmatpush1.bf16.msra.mxu0 0
      %4802 = vmatprep.mubr.bf16.mxu0 0
      %4803 = vmatmul.mubr.bf16.gmra.mrb[0].mxu0 %v4706
      %v4804 = vpop.f32.mrb[0].mxu0
      %v4805 = vadd.f32 %v4672, %v4804
      %v4806 = vpop.f32.mrb[0].mxu0
      %v4807 = vpop.f32.mrb[0].mxu0
      %v4808 = vpop.f32.mrb[0].mxu0
      %4809 = vmatprep.mubr.bf16.mxu0 0
      %4810 = vmatmul.mubr.bf16.gmra.mrb[0].mxu0 %v4707
      %v4811 = vpop.f32.mrb[0].mxu0
      %v4812 = vadd.f32 %v4672, %v4811
      %v4813 = vpop.f32.mrb[0].mxu0
      %v4814 = vpop.f32.mrb[0].mxu0
      %v4815 = vpop.f32.mrb[0].mxu0
      %4816 = vmatprep.mubr.bf16.mxu0 0
      %4817 = vmatmul.mubr.bf16.gmra.mrb[0].mxu0 %v4708
      %v4818 = vpop.f32.mrb[0].mxu0
      %v4819 = vadd.f32 %v4672, %v4818
      %v4820 = vpop.f32.mrb[0].mxu0
      %v4821 = vpop.f32.mrb[0].mxu0
      %v4822 = vpop.f32.mrb[0].mxu0
      %4823 = vmatprep.mubr.bf16.mxu0 0
      %4824 = vmatmul.mubr.bf16.gmra.mrb[0].mxu0 %v4709
      %v4825 = vpop.f32.mrb[0].mxu0
      %v4826 = vadd.f32 %v4672, %v4825
      %v4827 = vpop.f32.mrb[0].mxu0
      %v4828 = vpop.f32.mrb[0].mxu0
      %v4829 = vpop.f32.mrb[0].mxu0
      %4830 = vmatprep.mubr.bf16.mxu0 0
      %4831 = vmatmul.mubr.bf16.gmra.mrb[0].mxu0 %v4710
      %v4832 = vpop.f32.mrb[0].mxu0
      %v4833 = vadd.f32 %v4672, %v4832
      %v4834 = vpop.f32.mrb[0].mxu0
      %v4835 = vpop.f32.mrb[0].mxu0
      %v4836 = vpop.f32.mrb[0].mxu0
      %4837 = vmatprep.mubr.bf16.mxu0 0
      %4838 = vmatmul.mubr.bf16.gmra.mrb[0].mxu0 %v4711
      %v4839 = vpop.f32.mrb[0].mxu0
      %v4840 = vadd.f32 %v4672, %v4839
      %v4841 = vpop.f32.mrb[0].mxu0
      %v4842 = vpop.f32.mrb[0].mxu0
      %v4843 = vpop.f32.mrb[0].mxu0
      %4844 = vmatprep.mubr.bf16.mxu0 0
      %4845 = vmatmul.mubr.bf16.gmra.mrb[0].mxu0 %v4712
      %v4846 = vpop.f32.mrb[0].mxu0
      %v4847 = vadd.f32 %v4672, %v4846
      %v4848 = vpop.f32.mrb[0].mxu0
      %v4849 = vpop.f32.mrb[0].mxu0
      %v4850 = vpop.f32.mrb[0].mxu0
      %4851 = vmatprep.mubr.bf16.mxu0 0
      %4852 = vmatmul.mubr.bf16.gmra.mrb[0].mxu0 %v4713
      %v4853 = vpop.f32.mrb[0].mxu0
      %v4854 = vadd.f32 %v4672, %v4853
      %v4855 = vpop.f32.mrb[0].mxu0
      %v4856 = vpop.f32.mrb[0].mxu0
      %v4857 = vpop.f32.mrb[0].mxu0
      %4858 = vdwg.mxu0
      %v4859 = vadd.f32 %v4627, %v4805
      %v4860 = vadd.f32 %v4628, %v4812
      %v4861 = vadd.f32 %v4629, %v4819
      %v4862 = vadd.f32 %v4630, %v4826
      %v4863 = vadd.f32 %v4631, %v4833
      %v4864 = vadd.f32 %v4632, %v4840
      %v4865 = vadd.f32 %v4633, %v4847
      %v4866 = vadd.f32 %v4634, %v4854
      %v4867 = vmax.f32 %v4859, 0.0
      %v4868 = vmax.f32 %v4860, 0.0
      %v4869 = vmax.f32 %v4861, 0.0
      %v4870 = vmax.f32 %v4862, 0.0
      %v4871 = vmax.f32 %v4863, 0.0
      %v4872 = vmax.f32 %v4864, 0.0
      %v4873 = vmax.f32 %v4865, 0.0
      %v4874 = vmax.f32 %v4866, 0.0
      %4875 = vst [vmem:[%s278] sm:$0xff] %v4867
      %4876 = vst [vmem:[%s278 + $0x8] sm:$0xff] %v4868
      %4877 = vst [vmem:[%s278 + $0x10] sm:$0xff] %v4869
      %4878 = vst [vmem:[%s278 + $0x18] sm:$0xff] %v4870
      %4879 = vst [vmem:[%s278 + $0x20] sm:$0xff] %v4871
      %4880 = vst [vmem:[%s278 + $0x28] sm:$0xff] %v4872
      %4881 = vst [vmem:[%s278 + $0x30] sm:$0xff] %v4873
      %4882 = vst [vmem:[%s278 + $0x38] sm:$0xff] %v4874
      %p4883 = scmp.lt.s32.totalorder %s18, 1
      %s4884 = scalar_select %p4883, %s18, 1
      %s4885 = smul.addr %s4884, 8
      %s4886 = smul.addr %s4885, 8
      %s4887 = scalar_lea.vmem %s7, %s4886
      // Predicated region
      $region49: #{basic_block_forward.1} parent=47 // pred_check
        %p4888 = pneg %p188
      $region50: #{basic_block_forward.1} parent=47 // pred_check_branch
        %4890 = sbr.rel (%p4888) target = $region52
      $region51: #{basic_block_forward.1} parent=47 // pred_region
        _
      $region52: #{basic_block_forward.1} parent=47 // pred_fallthru
        _
    $region48: #{basic_block_forward.1} parent=5 // pred_fallthru
      _
    %p4891 = scmp.le.s32.totalorder 2, %s13
    // Predicated region
    $region53: #{basic_block_forward.1} parent=5 // pred_check
      %p4892 = pneg %p4891
    $region54: #{basic_block_forward.1} parent=5 // pred_check_branch
      %4894 = sbr.rel (%p4892) target = $region56
    $region55: #{basic_block_forward.1} parent=5 // pred_region
      %s4895 = ssub.s32 %s13, 2
      // Predicated region
      $region57: #{basic_block_forward.1} parent=55 // pred_check
        %p4896 = pneg %p194
      $region58: #{basic_block_forward.1} parent=55 // pred_check_branch
        %4898 = sbr.rel (%p4896) target = $region60
      $region59: #{basic_block_forward.1} parent=55 // pred_region
        %p4899 = scmp.lt.s32.totalorder %s19, 1
        %s4900 = scalar_select %p4899, %s19, 1
        %s4901 = smul.addr %s4900, 8
        %s4902 = smul.addr %s4901, 8
        %s4903 = scalar_lea.vmem %s7, %s4902
      $region60: #{basic_block_forward.1} parent=55 // pred_fallthru
        _
    $region56: #{basic_block_forward.1} parent=5 // pred_fallthru
      _
  $region6: #{basic_block_forward.1} parent=0 // loop_footer
    %s17 = sadd.s32 1, %s13
  $region7: #{basic_block_forward.1} parent=0 // loop_footer_branch
    %12 = sbr.rel target = $region3
  $region8: #{basic_block_forward.1} parent=0 // loop_exit
    _

</llo_original>
